<compile_context>
chip_gen: v7x
topology: tpu7x:2x2x1
jax: 0.10.0
libtpu: 0.0.40
codegen_flags: <defaults>
</compile_context>

<pallas_src>
import jax
import jax.numpy as jnp
from jax.experimental import pallas as pl
from jax.experimental.pallas import tpu as pltpu

GN_GROUPS = 8
GN_EPS = 1e-5


def _vmem_limit_bytes():
    """Chip-aware scoped-VMEM cap: safe below v7x's 64 MiB/core, larger on 128 MiB parts."""
    limit = 48 * 1024 * 1024
    try:
        cap = int(pltpu.get_tpu_info().vmem_capacity_bytes)
        if cap >= 120 * 1024 * 1024:          # v5e / v6e class (128 MiB per core)
            limit = 100 * 1024 * 1024
    except Exception:
        pass
    return limit


VMEM_LIMIT_BYTES = _vmem_limit_bytes()


def _pick_row_tile(h, w, target_rows=2048):
    """Largest divisor of h with rows*w <= target_rows (big tiles amortize per-step cost)."""
    best = 1
    for cand in range(1, h + 1):
        if h % cand == 0 and cand * w <= max(target_rows, w):
            best = cand
    return best


# ---------------------------------------------------------------------------
# Kernel 1: ConvTranspose2d(k=2, s=2) as a tiled matmul with the 2x2 pixel
# shuffle fused into the output layout (N, H, 2, W, 2*Cout) -> (N, 2H, 2W, C).
# ---------------------------------------------------------------------------
def _make_convt_kernel(th, w, cin, cout):
    c2 = 2 * cout

    def kernel(x_ref, w_ref, b_ref, o_ref):
        x = x_ref[0].reshape(th * w, cin)
        acc = jnp.dot(x, w_ref[...], preferred_element_type=jnp.float32) + b_ref[...]
        # weight columns are ordered (di, dj, cout); di selects the output row parity
        top = acc[:, :c2].reshape(th, 1, w, c2)      # di = 0 -> output rows 2h
        bot = acc[:, c2:].reshape(th, 1, w, c2)      # di = 1 -> output rows 2h+1
        o_ref[0] = jnp.concatenate([top, bot], axis=1).astype(o_ref.dtype)

    return kernel


def conv_transpose_2x2_s2(x_nhwc, wt, bt):
    """PyTorch ConvTranspose2d(Cin, Cout, 2, 2).  wt: (Cin, Cout, 2, 2), bt: (Cout,)."""
    n, h, w, cin = x_nhwc.shape
    cout = bt.shape[0]

    # weight columns ordered (di, dj, cout)
    w_flat = jnp.transpose(wt, (0, 2, 3, 1)).reshape(cin, 4 * cout).astype(jnp.bfloat16)
    b_flat = jnp.tile(bt, 4).reshape(1, 4 * cout).astype(jnp.float32)

    th = _pick_row_tile(h, w)
    flops = 2 * n * h * w * cin * 4 * cout
    bytes_acc = (n * h * w * cin * 2 + cin * 4 * cout * 2 + 4 * cout * 4
                 + n * h * w * 4 * cout * 2)

    out = pl.pallas_call(
        _make_convt_kernel(th, w, cin, cout),
        out_shape=jax.ShapeDtypeStruct((n, h, 2, w, 2 * cout), jnp.bfloat16),
        grid=(n, h // th),
        in_specs=[
            pl.BlockSpec((1, th, w, cin), lambda i, j: (i, j, 0, 0)),
            pl.BlockSpec((cin, 4 * cout), lambda i, j: (0, 0)),
            pl.BlockSpec((1, 4 * cout), lambda i, j: (0, 0)),
        ],
        out_specs=pl.BlockSpec((1, th, 2, w, 2 * cout), lambda i, j: (i, j, 0, 0, 0)),
        compiler_params=pltpu.CompilerParams(
            dimension_semantics=("parallel", "parallel"),
            vmem_limit_bytes=VMEM_LIMIT_BYTES),
        cost_estimate=pl.CostEstimate(flops=flops, transcendentals=0,
                                      bytes_accessed=bytes_acc),
    )(x_nhwc.astype(jnp.bfloat16), w_flat, b_flat)

    # (N, H, 2, W, 2*Cout) -> (N, 2H, 2W, Cout): contiguous reshape, no transpose.
    return out.reshape(n, 2 * h, 2 * w, cout)


# ---------------------------------------------------------------------------
# Kernel 2: 3x3 same-conv (no bias) with
#   * the previous layer's GroupNorm+ReLU fused into the input path (optional),
#   * the zero halo built in-VMEM (no host-side jnp.pad),
#   * the kw taps packed into the MXU K dim (3 matmuls of K=3*Cin),
#   * bf16 output + f32 GroupNorm (sum, sumsq) statistics.
# ---------------------------------------------------------------------------
def _make_conv3x3_kernel(hh, ww, cin, cout, fuse_act):
    def _body(x, a, b, w_ref, o_ref, stats_ref):
        xf = x.astype(jnp.float32)
        if fuse_act:
            # previous layer's GroupNorm + ReLU, applied at load time
            xf = jnp.maximum(xf * a + b, 0.0)

        # zero-halo shifts along W (kw taps), packed on the channel (lane) axis;
        # K columns are ordered (kw, cin)
        zc = jnp.zeros((hh, 1, cin), jnp.float32)
        xl = jnp.concatenate([zc, xf[:, :ww - 1, :]], axis=1)     # kw = 0 (w-1)
        xr = jnp.concatenate([xf[:, 1:, :], zc], axis=1)          # kw = 2 (w+1)
        pk = jnp.concatenate([xl, xf, xr], axis=2).astype(jnp.bfloat16)   # (hh, ww, 3*cin)

        # zero-halo shifts along H (kh taps)
        zr = jnp.zeros((1, ww, 3 * cin), jnp.bfloat16)
        p0 = jnp.concatenate([zr, pk[:hh - 1]], axis=0)           # kh = 0 (h-1)
        p2 = jnp.concatenate([pk[1:], zr], axis=0)                # kh = 2 (h+1)

        acc = jnp.dot(p0.reshape(hh * ww, 3 * cin), w_ref[0],
                      preferred_element_type=jnp.float32)
        acc = acc + jnp.dot(pk.reshape(hh * ww, 3 * cin), w_ref[1],
                            preferred_element_type=jnp.float32)
        acc = acc + jnp.dot(p2.reshape(hh * ww, 3 * cin), w_ref[2],
                            preferred_element_type=jnp.float32)

        # GroupNorm statistics in f32 (conv bias is folded in on the host), single store
        s1 = jnp.sum(acc, axis=0, keepdims=True)
        s2 = jnp.sum(acc * acc, axis=0, keepdims=True)
        stats_ref[0] = jnp.concatenate([s1, s2], axis=0)

        o_ref[0] = acc.reshape(hh, ww, cout).astype(o_ref.dtype)

    if fuse_act:
        def kernel(x_ref, a_ref, b_ref, w_ref, o_ref, stats_ref):
            _body(x_ref[0], a_ref[0], b_ref[0], w_ref, o_ref, stats_ref)
    else:
        def kernel(x_ref, w_ref, o_ref, stats_ref):
            _body(x_ref[0], None, None, w_ref, o_ref, stats_ref)
    return kernel


def conv3x3_gn_stats(x, w3, scale=None, shift=None):
    """x: (N, H, W, Cin) bf16.  w3: (3, 3*Cin, Cout) bf16 (K columns ordered (kw, cin)).

    Returns the raw (bias-free) conv output in bf16 and per-(sample, channel)
    (sum, sum-of-squares) GroupNorm statistics in f32.
    """
    n, hh, ww, cin = x.shape
    cout = w3.shape[-1]
    fuse_act = scale is not None

    flops = 2 * n * hh * ww * 9 * cin * cout
    bytes_acc = (n * hh * ww * cin * 2 + 3 * 3 * cin * cout * 2
                 + n * hh * ww * cout * 2 + n * 2 * cout * 4)

    in_specs = [pl.BlockSpec((1, hh, ww, cin), lambda i: (i, 0, 0, 0))]
    args = [x]
    if fuse_act:
        in_specs += [pl.BlockSpec((1, 1, cin), lambda i: (i, 0, 0)),
                     pl.BlockSpec((1, 1, cin), lambda i: (i, 0, 0))]
        args += [scale.reshape(n, 1, cin).astype(jnp.float32),
                 shift.reshape(n, 1, cin).astype(jnp.float32)]
    in_specs += [pl.BlockSpec((3, 3 * cin, cout), lambda i: (0, 0, 0))]
    args += [w3]

    return pl.pallas_call(
        _make_conv3x3_kernel(hh, ww, cin, cout, fuse_act),
        out_shape=(jax.ShapeDtypeStruct((n, hh, ww, cout), jnp.bfloat16),
                   jax.ShapeDtypeStruct((n, 2, cout), jnp.float32)),
        grid=(n,),
        in_specs=in_specs,
        out_specs=(pl.BlockSpec((1, hh, ww, cout), lambda i: (i, 0, 0, 0)),
                   pl.BlockSpec((1, 2, cout), lambda i: (i, 0, 0))),
        compiler_params=pltpu.CompilerParams(
            dimension_semantics=("parallel",),
            vmem_limit_bytes=VMEM_LIMIT_BYTES),
        cost_estimate=pl.CostEstimate(flops=flops, transcendentals=0,
                                      bytes_accessed=bytes_acc),
    )(*args)


# ---------------------------------------------------------------------------
# Kernel 3: standalone folded GroupNorm + ReLU (only needed after the last conv).
# ---------------------------------------------------------------------------
def _norm_relu_kernel(x_ref, a_ref, b_ref, o_ref):
    y = jnp.maximum(x_ref[0].astype(jnp.float32) * a_ref[0] + b_ref[0], 0.0)
    o_ref[0] = y.astype(o_ref.dtype)


def norm_relu(x, scale, shift, out_dtype=jnp.float32):
    n, hh, ww, c = x.shape
    return pl.pallas_call(
        _norm_relu_kernel,
        out_shape=jax.ShapeDtypeStruct((n, hh, ww, c), out_dtype),
        grid=(n,),
        in_specs=[
            pl.BlockSpec((1, hh, ww, c), lambda i: (i, 0, 0, 0)),
            pl.BlockSpec((1, 1, c), lambda i: (i, 0, 0)),
            pl.BlockSpec((1, 1, c), lambda i: (i, 0, 0)),
        ],
        out_specs=pl.BlockSpec((1, hh, ww, c), lambda i: (i, 0, 0, 0)),
        compiler_params=pltpu.CompilerParams(
            dimension_semantics=("parallel",),
            vmem_limit_bytes=VMEM_LIMIT_BYTES),
    )(x, scale.reshape(n, 1, c).astype(jnp.float32),
      shift.reshape(n, 1, c).astype(jnp.float32))


# ---------------------------------------------------------------------------
# Host-side folding of GN stats + conv bias + gamma/beta into per-(n,c) affine.
# ---------------------------------------------------------------------------
def _gn_fold(stats, conv_bias, gamma, beta, num_px):
    """Fold GroupNorm(8) stats of the bias-free conv output, the conv bias and
    gamma/beta into per-(sample, channel) scale/shift: GN(conv+b) = conv*scale + shift."""
    s1 = stats[:, 0, :]
    s2 = stats[:, 1, :]
    b = conv_bias[None, :].astype(jnp.float32)
    # stats of x = conv + b (bias folded analytically; never added in the kernel)
    s1x = s1 + num_px * b
    s2x = s2 + 2.0 * b * s1 + num_px * b * b
    nb, c = s1.shape
    cg = c // GN_GROUPS
    cnt = float(num_px * cg)
    s1g = s1x.reshape(nb, GN_GROUPS, cg).sum(axis=-1)
    s2g = s2x.reshape(nb, GN_GROUPS, cg).sum(axis=-1)
    mean = s1g / cnt
    # TODO(synk): E[x^2]-E[x]^2 in f32 can cancel for large means at big C*H*W;
    # switch to mean-shifted / Welford-style accumulation if that regime appears.
    var = jnp.maximum(s2g / cnt - mean * mean, 0.0)
    inv = jax.lax.rsqrt(var + GN_EPS)
    mean_c = jnp.repeat(mean, cg, axis=-1)
    inv_c = jnp.repeat(inv, cg, axis=-1)
    scale = inv_c * gamma[None, :]
    shift = beta[None, :] + (b - mean_c) * scale
    return scale, shift


def _pack_conv3x3_weights(w):
    """PyTorch (Cout, Cin, 3, 3) -> (kh, kw*Cin, Cout) bf16, matching the K-packed operand."""
    return jnp.transpose(w, (2, 3, 1, 0)).reshape(3, 3 * w.shape[1], w.shape[0]) \
              .astype(jnp.bfloat16)


# ---------------------------------------------------------------------------
# Forward pass
# ---------------------------------------------------------------------------
def vae_up_forward(x_nchw, params):
    """Forward pass of VAEUp.  Input NCHW (PyTorch convention), output NCHW f32."""
    x = jnp.transpose(x_nchw, (0, 2, 3, 1))                        # -> NHWC

    # ConvTranspose2d(in, out, 2, 2): pixel shuffle fused into the kernel output layout
    y = conv_transpose_2x2_s2(x, params["ct_w"], params["ct_b"])   # (N, 2H, 2W, C) bf16
    n, hh, ww, c = y.shape
    npx = hh * ww

    # Conv3(out, out), is_res=False: 3 x (Conv3x3 + GroupNorm(8) + ReLU).
    # GN-apply + ReLU of layer i is fused into layer i+1's conv input path;
    # only the last layer needs a standalone normalize+ReLU pass.
    r, scale, shift = y, None, None
    for i in range(3):
        w3 = _pack_conv3x3_weights(params[f"c{i}_w"])
        r, stats = conv3x3_gn_stats(r, w3, scale, shift)
        scale, shift = _gn_fold(stats, params[f"c{i}_b"],
                                params[f"g{i}_w"], params[f"g{i}_b"], npx)
    out = norm_relu(r, scale, shift, jnp.float32)

    return jnp.transpose(out, (0, 3, 1, 2))                        # -> NCHW


# ---------------------------------------------------------------------------
# Pure-JAX reference (PyTorch math; the kernel's bf16 storage / MXU-input
# rounding is emulated so the comparison isolates kernel correctness).
# ---------------------------------------------------------------------------
def _r(x):
    return x.astype(jnp.bfloat16).astype(jnp.float32)


def reference_forward(x_nchw, params):
    hi = jax.lax.Precision.HIGHEST
    x = jnp.transpose(x_nchw, (0, 2, 3, 1)).astype(jnp.float32)
    wt, bt = params["ct_w"], params["ct_b"]
    t = jnp.einsum("nhwc,cokl->nhwklo", _r(x), _r(wt), precision=hi)
    n, h, w, _, _, co = t.shape
    y = jnp.transpose(t, (0, 1, 3, 2, 4, 5)).reshape(n, 2 * h, 2 * w, co) + bt
    a = _r(y)                                      # convT output is stored in bf16
    hh, ww = 2 * h, 2 * w
    out = None
    for i in range(3):
        wc, b = params[f"c{i}_w"], params[f"c{i}_b"]
        g, be = params[f"g{i}_w"], params[f"g{i}_b"]
        wr = _r(wc)
        ap = jnp.pad(a, ((0, 0), (1, 1), (1, 1), (0, 0)))
        r = jnp.zeros((n, hh, ww, co), jnp.float32)
        for kh in range(3):
            for kw in range(3):
                r = r + jnp.einsum("nhwc,oc->nhwo",
                                   ap[:, kh:kh + hh, kw:kw + ww, :],
                                   wr[:, :, kh, kw], precision=hi)
        cg = co // GN_GROUPS
        xg = (r + b).reshape(n, hh, ww, GN_GROUPS, cg)
        m = jnp.mean(xg, axis=(1, 2, 4), keepdims=True)
        v = jnp.mean((xg - m) ** 2, axis=(1, 2, 4), keepdims=True)
        m_c = jnp.broadcast_to(m, (n, 1, 1, GN_GROUPS, cg)).reshape(n, 1, 1, co)
        inv_c = jnp.broadcast_to(1.0 / jnp.sqrt(v + GN_EPS),
                                 (n, 1, 1, GN_GROUPS, cg)).reshape(n, 1, 1, co)
        # the kernel stores the raw (bias-free) conv result in bf16 and applies
        # the folded affine + ReLU to that stored value
        y_act = jnp.maximum(((_r(r) + b) - m_c) * inv_c * g + be, 0.0)
        if i < 2:
            a = _r(y_act)      # fed (as bf16) into the next conv's MXU matmul
        else:
            out = y_act
    return jnp.transpose(out, (0, 3, 1, 2))


# ---------------------------------------------------------------------------
# Deterministic parameter init (shapes follow the PyTorch module __init__)
# ---------------------------------------------------------------------------
def init_params(key, cin, cout):
    ks = jax.random.split(key, 16)
    p = {
        "ct_w": 0.2 * jax.random.normal(ks[0], (cin, cout, 2, 2), jnp.float32),
        "ct_b": 0.1 * jax.random.normal(ks[1], (cout,), jnp.float32),
    }
    for i in range(3):
        p[f"c{i}_w"] = 0.15 * jax.random.normal(ks[2 + 4 * i], (cout, cout, 3, 3), jnp.float32)
        p[f"c{i}_b"] = 0.1 * jax.random.normal(ks[3 + 4 * i], (cout,), jnp.float32)
        p[f"g{i}_w"] = 1.0 + 0.1 * jax.random.normal(ks[4 + 4 * i], (cout,), jnp.float32)
        p[f"g{i}_b"] = 0.1 * jax.random.normal(ks[5 + 4 * i], (cout,), jnp.float32)
    return p


if __name__ == "__main__":
    N, Cin, H, W = 2, 4, 8, 8
    Cout = 16                      # must be divisible by 8 for GroupNorm(8, Cout)

    key = jax.random.PRNGKey(0)
    kx, kp = jax.random.split(key)
    x = jax.random.normal(kx, (N, Cin, H, W), jnp.float32)     # NCHW input, like PyTorch
    params = init_params(kp, Cin, Cout)

    fwd = jax.jit(vae_up_forward)
    out = jax.block_until_ready(fwd(x, params))

    assert out.shape == (N, Cout, 2 * H, 2 * W), out.shape
    assert bool(jnp.all(jnp.isfinite(out)))

    ref = reference_forward(x, params)
    max_err = float(jnp.max(jnp.abs(out - ref)))
    mean_err = float(jnp.mean(jnp.abs(out - ref)))
    # Tolerances allow for the mirrored-but-not-bit-identical bf16 rounding of the
    # stored intermediates (an occasional one-ulp flip on an O(1) activation);
    # any real kernel bug (tap misalignment, wrong packing / grouping) is >> this.
    assert max_err < 5e-2 and mean_err < 5e-3, (max_err, mean_err)

    print("KERNEL_OK")
</pallas_src>

<mosaic_0001>
module attributes {stable_mosaic.version = 11 : i64} {
  func.func @kernel(%arg0: i32, %arg1: i32, %arg2: memref<1x8x8x4xbf16, #tpu.memory_space<vmem>>, %arg3: memref<4x64xbf16, #tpu.memory_space<vmem>>, %arg4: memref<1x64xf32, #tpu.memory_space<vmem>>, %arg5: memref<1x8x2x8x32xbf16, #tpu.memory_space<vmem>>) attributes {dimension_semantics = [#tpu.dimension_semantics<parallel>, #tpu.dimension_semantics<parallel>], iteration_bounds = array<i64: 2, 1>, scalar_prefetch = 0 : i64, scratch_operands = 0 : i64, tpu.core_type = #tpu.core_type<tc>, window_params = [{transform_indices = @transform_0, window_bounds = array<i64: 1, 8, 8, 4>}, {pipeline_mode = #tpu.pipeline_mode<synchronous>, transform_indices = @transform_1, window_bounds = array<i64: 4, 64>}, {pipeline_mode = #tpu.pipeline_mode<synchronous>, transform_indices = @transform_2, window_bounds = array<i64: 1, 64>}, {transform_indices = @transform_3, window_bounds = array<i64: 1, 8, 2, 8, 32>}]} {
    %c0 = arith.constant 0 : index
    %c0_0 = arith.constant 0 : index
    %c0_1 = arith.constant 0 : index
    %c0_2 = arith.constant 0 : index
    %0 = vector.load %arg2[%c0, %c0_0, %c0_1, %c0_2] : memref<1x8x8x4xbf16, #tpu.memory_space<vmem>>, vector<1x8x8x4xbf16>
    %1 = vector.shape_cast %0 : vector<1x8x8x4xbf16> to vector<8x8x4xbf16>
    %2 = vector.shape_cast %1 : vector<8x8x4xbf16> to vector<64x4xbf16>
    %c0_3 = arith.constant 0 : index
    %c0_4 = arith.constant 0 : index
    %3 = vector.load %arg3[%c0_3, %c0_4] : memref<4x64xbf16, #tpu.memory_space<vmem>>, vector<4x64xbf16>
    %cst = arith.constant dense<0.000000e+00> : vector<64x64xf32>
    %4 = tpu.matmul %2, %3, %cst {dimension_numbers = #tpu.dot_dimension_numbers<[1], [0], [0], [1], [0, 0, 1, 1], [], []>} : vector<64x4xbf16>, vector<4x64xbf16>, vector<64x64xf32> -> vector<64x64xf32>
    %c0_5 = arith.constant 0 : index
    %c0_6 = arith.constant 0 : index
    %5 = vector.load %arg4[%c0_5, %c0_6] : memref<1x64xf32, #tpu.memory_space<vmem>>, vector<1x64xf32>
    %6 = vector.broadcast %5 : vector<1x64xf32> to vector<64x64xf32>
    %7 = arith.addf %4, %6 : vector<64x64xf32>
    %8 = vector.extract_strided_slice %7 {offsets = [0, 0], sizes = [64, 32], strides = [1, 1]} : vector<64x64xf32> to vector<64x32xf32>
    %9 = vector.shape_cast %8 : vector<64x32xf32> to vector<8x1x8x32xf32>
    %10 = vector.extract_strided_slice %7 {offsets = [0, 32], sizes = [64, 32], strides = [1, 1]} : vector<64x64xf32> to vector<64x32xf32>
    %11 = vector.shape_cast %10 : vector<64x32xf32> to vector<8x1x8x32xf32>
    %12 = tpu.concatenate %9, %11 in 1 : vector<8x1x8x32xf32>, vector<8x1x8x32xf32> -> vector<8x2x8x32xf32>
    %13 = arith.truncf %12 : vector<8x2x8x32xf32> to vector<8x2x8x32xbf16>
    %c0_7 = arith.constant 0 : index
    %c0_8 = arith.constant 0 : index
    %c0_9 = arith.constant 0 : index
    %c0_10 = arith.constant 0 : index
    %c0_11 = arith.constant 0 : index
    %14 = vector.load %arg5[%c0_7, %c0_8, %c0_9, %c0_10, %c0_11] : memref<1x8x2x8x32xbf16, #tpu.memory_space<vmem>>, vector<1x8x2x8x32xbf16>
    %15 = vector.shape_cast %14 : vector<1x8x2x8x32xbf16> to vector<8x2x8x32xbf16>
    %16 = vector.shape_cast %13 : vector<8x2x8x32xbf16> to vector<1x8x2x8x32xbf16>
    tpu.vector_store %arg5[%c0_7, %c0_8, %c0_9, %c0_10, %c0_11], %16 {strides = array<i32>} : memref<1x8x2x8x32xbf16, #tpu.memory_space<vmem>>, vector<1x8x2x8x32xbf16>,
    return
  }
  func.func @transform_0(%arg0: i32, %arg1: i32) -> (i32, i32, i32, i32) {
    %c0_i32 = arith.constant 0 : i32
    %c0_i32_0 = arith.constant 0 : i32
    %c0_i32_1 = arith.constant 0 : i32
    return %arg0, %arg1, %c0_i32, %c0_i32_0 : i32, i32, i32, i32
  }
  func.func @transform_1(%arg0: i32, %arg1: i32) -> (i32, i32) {
    %c0_i32 = arith.constant 0 : i32
    %c0_i32_0 = arith.constant 0 : i32
    %c0_i32_1 = arith.constant 0 : i32
    return %c0_i32, %c0_i32_0 : i32, i32
  }
  func.func @transform_2(%arg0: i32, %arg1: i32) -> (i32, i32) {
    %c0_i32 = arith.constant 0 : i32
    %c0_i32_0 = arith.constant 0 : i32
    %c0_i32_1 = arith.constant 0 : i32
    return %c0_i32, %c0_i32_0 : i32, i32
  }
  func.func @transform_3(%arg0: i32, %arg1: i32) -> (i32, i32, i32, i32, i32) {
    %c0_i32 = arith.constant 0 : i32
    %c0_i32_0 = arith.constant 0 : i32
    %c0_i32_1 = arith.constant 0 : i32
    %c0_i32_2 = arith.constant 0 : i32
    return %arg0, %arg1, %c0_i32, %c0_i32_0, %c0_i32_1 : i32, i32, i32, i32, i32
  }
}

module attributes {stable_mosaic.version = 11 : i64} {
  func.func @kernel(%arg0: i32, %arg1: memref<1x16x16x16xbf16, #tpu.memory_space<vmem>>, %arg2: memref<3x48x16xbf16, #tpu.memory_space<vmem>>, %arg3: memref<1x16x16x16xbf16, #tpu.memory_space<vmem>>, %arg4: memref<1x2x16xf32, #tpu.memory_space<vmem>>) attributes {dimension_semantics = [#tpu.dimension_semantics<parallel>], iteration_bounds = array<i64: 2>, scalar_prefetch = 0 : i64, scratch_operands = 0 : i64, tpu.core_type = #tpu.core_type<tc>, window_params = [{transform_indices = @transform_0, window_bounds = array<i64: 1, 16, 16, 16>}, {pipeline_mode = #tpu.pipeline_mode<synchronous>, transform_indices = @transform_1, window_bounds = array<i64: 3, 48, 16>}, {transform_indices = @transform_2, window_bounds = array<i64: 1, 16, 16, 16>}, {transform_indices = @transform_3, window_bounds = array<i64: 1, 2, 16>}]} {
    %c0 = arith.constant 0 : index
    %c0_0 = arith.constant 0 : index
    %c0_1 = arith.constant 0 : index
    %c0_2 = arith.constant 0 : index
    %0 = vector.load %arg1[%c0, %c0_0, %c0_1, %c0_2] : memref<1x16x16x16xbf16, #tpu.memory_space<vmem>>, vector<1x16x16x16xbf16>
    %1 = vector.shape_cast %0 : vector<1x16x16x16xbf16> to vector<16x16x16xbf16>
    %2 = arith.extf %1 : vector<16x16x16xbf16> to vector<16x16x16xf32>
    %cst = arith.constant 0.000000e+00 : f32
    %3 = vector.broadcast %cst : f32 to vector<16x1x16xf32>
    %4 = vector.extract_strided_slice %2 {offsets = [0, 0, 0], sizes = [16, 15, 16], strides = [1, 1, 1]} : vector<16x16x16xf32> to vector<16x15x16xf32>
    %5 = tpu.concatenate %3, %4 in 1 : vector<16x1x16xf32>, vector<16x15x16xf32> -> vector<16x16x16xf32>
    %6 = vector.extract_strided_slice %2 {offsets = [0, 1, 0], sizes = [16, 15, 16], strides = [1, 1, 1]} : vector<16x16x16xf32> to vector<16x15x16xf32>
    %7 = tpu.concatenate %6, %3 in 1 : vector<16x15x16xf32>, vector<16x1x16xf32> -> vector<16x16x16xf32>
    %8 = tpu.concatenate %5, %2, %7 in 2 : vector<16x16x16xf32>, vector<16x16x16xf32>, vector<16x16x16xf32> -> vector<16x16x48xf32>
    %9 = arith.truncf %8 : vector<16x16x48xf32> to vector<16x16x48xbf16>
    %cst_3 = arith.constant 0.000000e+00 : bf16
    %10 = vector.broadcast %cst_3 : bf16 to vector<1x16x48xbf16>
    %11 = vector.extract_strided_slice %9 {offsets = [0, 0, 0], sizes = [15, 16, 48], strides = [1, 1, 1]} : vector<16x16x48xbf16> to vector<15x16x48xbf16>
    %12 = tpu.concatenate %10, %11 in 0 : vector<1x16x48xbf16>, vector<15x16x48xbf16> -> vector<16x16x48xbf16>
    %13 = vector.extract_strided_slice %9 {offsets = [1, 0, 0], sizes = [15, 16, 48], strides = [1, 1, 1]} : vector<16x16x48xbf16> to vector<15x16x48xbf16>
    %14 = tpu.concatenate %13, %10 in 0 : vector<15x16x48xbf16>, vector<1x16x48xbf16> -> vector<16x16x48xbf16>
    %15 = vector.shape_cast %12 : vector<16x16x48xbf16> to vector<256x48xbf16>
    %c0_4 = arith.constant 0 : index
    %c0_5 = arith.constant 0 : index
    %c0_6 = arith.constant 0 : index
    %16 = vector.load %arg2[%c0_4, %c0_5, %c0_6] : memref<3x48x16xbf16, #tpu.memory_space<vmem>>, vector<1x48x16xbf16>
    %17 = vector.shape_cast %16 : vector<1x48x16xbf16> to vector<48x16xbf16>
    %cst_7 = arith.constant dense<0.000000e+00> : vector<256x16xf32>
    %18 = tpu.matmul %15, %17, %cst_7 {dimension_numbers = #tpu.dot_dimension_numbers<[1], [0], [0], [1], [0, 0, 1, 1], [], []>} : vector<256x48xbf16>, vector<48x16xbf16>, vector<256x16xf32> -> vector<256x16xf32>
    %19 = vector.shape_cast %9 : vector<16x16x48xbf16> to vector<256x48xbf16>
    %c1 = arith.constant 1 : index
    %c0_8 = arith.constant 0 : index
    %c0_9 = arith.constant 0 : index
    %20 = vector.load %arg2[%c1, %c0_8, %c0_9] : memref<3x48x16xbf16, #tpu.memory_space<vmem>>, vector<1x48x16xbf16>
    %21 = vector.shape_cast %20 : vector<1x48x16xbf16> to vector<48x16xbf16>
    %cst_10 = arith.constant dense<0.000000e+00> : vector<256x16xf32>
    %22 = tpu.matmul %19, %21, %cst_10 {dimension_numbers = #tpu.dot_dimension_numbers<[1], [0], [0], [1], [0, 0, 1, 1], [], []>} : vector<256x48xbf16>, vector<48x16xbf16>, vector<256x16xf32> -> vector<256x16xf32>
    %23 = arith.addf %18, %22 : vector<256x16xf32>
    %24 = vector.shape_cast %14 : vector<16x16x48xbf16> to vector<256x48xbf16>
    %c2 = arith.constant 2 : index
    %c0_11 = arith.constant 0 : index
    %c0_12 = arith.constant 0 : index
    %25 = vector.load %arg2[%c2, %c0_11, %c0_12] : memref<3x48x16xbf16, #tpu.memory_space<vmem>>, vector<1x48x16xbf16>
    %26 = vector.shape_cast %25 : vector<1x48x16xbf16> to vector<48x16xbf16>
    %cst_13 = arith.constant dense<0.000000e+00> : vector<256x16xf32>
    %27 = tpu.matmul %24, %26, %cst_13 {dimension_numbers = #tpu.dot_dimension_numbers<[1], [0], [0], [1], [0, 0, 1, 1], [], []>} : vector<256x48xbf16>, vector<48x16xbf16>, vector<256x16xf32> -> vector<256x16xf32>
    %28 = arith.addf %23, %27 : vector<256x16xf32>
    %cst_14 = arith.constant dense<0.000000e+00> : vector<16xf32>
    %29 = vector.multi_reduction <add>, %28, %cst_14 [0] : vector<256x16xf32> to vector<16xf32>
    %30 = vector.shape_cast %29 : vector<16xf32> to vector<1x16xf32>
    %31 = arith.mulf %28, %28 : vector<256x16xf32>
    %cst_15 = arith.constant dense<0.000000e+00> : vector<16xf32>
    %32 = vector.multi_reduction <add>, %31, %cst_15 [0] : vector<256x16xf32> to vector<16xf32>
    %33 = vector.shape_cast %32 : vector<16xf32> to vector<1x16xf32>
    %34 = tpu.concatenate %30, %33 in 0 : vector<1x16xf32>, vector<1x16xf32> -> vector<2x16xf32>
    %c0_16 = arith.constant 0 : index
    %c0_17 = arith.constant 0 : index
    %c0_18 = arith.constant 0 : index
    %35 = vector.load %arg4[%c0_16, %c0_17, %c0_18] : memref<1x2x16xf32, #tpu.memory_space<vmem>>, vector<1x2x16xf32>
    %36 = vector.shape_cast %35 : vector<1x2x16xf32> to vector<2x16xf32>
    %37 = vector.shape_cast %34 : vector<2x16xf32> to vector<1x2x16xf32>
    tpu.vector_store %arg4[%c0_16, %c0_17, %c0_18], %37 {strides = array<i32>} : memref<1x2x16xf32, #tpu.memory_space<vmem>>, vector<1x2x16xf32>,
    %38 = vector.shape_cast %28 : vector<256x16xf32> to vector<16x16x16xf32>
    %39 = arith.truncf %38 : vector<16x16x16xf32> to vector<16x16x16xbf16>
    %c0_19 = arith.constant 0 : index
    %c0_20 = arith.constant 0 : index
    %c0_21 = arith.constant 0 : index
    %c0_22 = arith.constant 0 : index
    %40 = vector.load %arg3[%c0_19, %c0_20, %c0_21, %c0_22] : memref<1x16x16x16xbf16, #tpu.memory_space<vmem>>, vector<1x16x16x16xbf16>
    %41 = vector.shape_cast %40 : vector<1x16x16x16xbf16> to vector<16x16x16xbf16>
    %42 = vector.shape_cast %39 : vector<16x16x16xbf16> to vector<1x16x16x16xbf16>
    tpu.vector_store %arg3[%c0_19, %c0_20, %c0_21, %c0_22], %42 {strides = array<i32>} : memref<1x16x16x16xbf16, #tpu.memory_space<vmem>>, vector<1x16x16x16xbf16>,
    return
  }
  func.func @transform_0(%arg0: i32) -> (i32, i32, i32, i32) {
    %c0_i32 = arith.constant 0 : i32
    %c0_i32_0 = arith.constant 0 : i32
    %c0_i32_1 = arith.constant 0 : i32
    %c0_i32_2 = arith.constant 0 : i32
    return %arg0, %c0_i32, %c0_i32_0, %c0_i32_1 : i32, i32, i32, i32
  }
  func.func @transform_1(%arg0: i32) -> (i32, i32, i32) {
    %c0_i32 = arith.constant 0 : i32
    %c0_i32_0 = arith.constant 0 : i32
    %c0_i32_1 = arith.constant 0 : i32
    %c0_i32_2 = arith.constant 0 : i32
    return %c0_i32, %c0_i32_0, %c0_i32_1 : i32, i32, i32
  }
  func.func @transform_2(%arg0: i32) -> (i32, i32, i32, i32) {
    %c0_i32 = arith.constant 0 : i32
    %c0_i32_0 = arith.constant 0 : i32
    %c0_i32_1 = arith.constant 0 : i32
    %c0_i32_2 = arith.constant 0 : i32
    return %arg0, %c0_i32, %c0_i32_0, %c0_i32_1 : i32, i32, i32, i32
  }
  func.func @transform_3(%arg0: i32) -> (i32, i32, i32) {
    %c0_i32 = arith.constant 0 : i32
    %c0_i32_0 = arith.constant 0 : i32
    %c0_i32_1 = arith.constant 0 : i32
    return %arg0, %c0_i32, %c0_i32_0 : i32, i32, i32
  }
}

module attributes {stable_mosaic.version = 11 : i64} {
  func.func @kernel(%arg0: i32, %arg1: memref<1x16x16x16xbf16, #tpu.memory_space<vmem>>, %arg2: memref<1x1x16xf32, #tpu.memory_space<vmem>>, %arg3: memref<1x1x16xf32, #tpu.memory_space<vmem>>, %arg4: memref<3x48x16xbf16, #tpu.memory_space<vmem>>, %arg5: memref<1x16x16x16xbf16, #tpu.memory_space<vmem>>, %arg6: memref<1x2x16xf32, #tpu.memory_space<vmem>>) attributes {dimension_semantics = [#tpu.dimension_semantics<parallel>], iteration_bounds = array<i64: 2>, scalar_prefetch = 0 : i64, scratch_operands = 0 : i64, tpu.core_type = #tpu.core_type<tc>, window_params = [{transform_indices = @transform_0, window_bounds = array<i64: 1, 16, 16, 16>}, {transform_indices = @transform_1, window_bounds = array<i64: 1, 1, 16>}, {transform_indices = @transform_2, window_bounds = array<i64: 1, 1, 16>}, {pipeline_mode = #tpu.pipeline_mode<synchronous>, transform_indices = @transform_3, window_bounds = array<i64: 3, 48, 16>}, {transform_indices = @transform_4, window_bounds = array<i64: 1, 16, 16, 16>}, {transform_indices = @transform_5, window_bounds = array<i64: 1, 2, 16>}]} {
    %c0 = arith.constant 0 : index
    %c0_0 = arith.constant 0 : index
    %c0_1 = arith.constant 0 : index
    %c0_2 = arith.constant 0 : index
    %0 = vector.load %arg1[%c0, %c0_0, %c0_1, %c0_2] : memref<1x16x16x16xbf16, #tpu.memory_space<vmem>>, vector<1x16x16x16xbf16>
    %1 = vector.shape_cast %0 : vector<1x16x16x16xbf16> to vector<16x16x16xbf16>
    %c0_3 = arith.constant 0 : index
    %c0_4 = arith.constant 0 : index
    %c0_5 = arith.constant 0 : index
    %2 = vector.load %arg2[%c0_3, %c0_4, %c0_5] : memref<1x1x16xf32, #tpu.memory_space<vmem>>, vector<1x1x16xf32>
    %3 = vector.shape_cast %2 : vector<1x1x16xf32> to vector<1x16xf32>
    %c0_6 = arith.constant 0 : index
    %c0_7 = arith.constant 0 : index
    %c0_8 = arith.constant 0 : index
    %4 = vector.load %arg3[%c0_6, %c0_7, %c0_8] : memref<1x1x16xf32, #tpu.memory_space<vmem>>, vector<1x1x16xf32>
    %5 = vector.shape_cast %4 : vector<1x1x16xf32> to vector<1x16xf32>
    %6 = arith.extf %1 : vector<16x16x16xbf16> to vector<16x16x16xf32>
    %7 = vector.shape_cast %3 : vector<1x16xf32> to vector<1x1x16xf32>
    %8 = vector.broadcast %7 : vector<1x1x16xf32> to vector<16x16x16xf32>
    %9 = arith.mulf %6, %8 : vector<16x16x16xf32>
    %10 = vector.shape_cast %5 : vector<1x16xf32> to vector<1x1x16xf32>
    %11 = vector.broadcast %10 : vector<1x1x16xf32> to vector<16x16x16xf32>
    %12 = arith.addf %9, %11 : vector<16x16x16xf32>
    %cst = arith.constant 0.000000e+00 : f32
    %13 = vector.broadcast %cst : f32 to vector<16x16x16xf32>
    %14 = arith.maximumf %12, %13 : vector<16x16x16xf32>
    %cst_9 = arith.constant 0.000000e+00 : f32
    %15 = vector.broadcast %cst_9 : f32 to vector<16x1x16xf32>
    %16 = vector.extract_strided_slice %14 {offsets = [0, 0, 0], sizes = [16, 15, 16], strides = [1, 1, 1]} : vector<16x16x16xf32> to vector<16x15x16xf32>
    %17 = tpu.concatenate %15, %16 in 1 : vector<16x1x16xf32>, vector<16x15x16xf32> -> vector<16x16x16xf32>
    %18 = vector.extract_strided_slice %14 {offsets = [0, 1, 0], sizes = [16, 15, 16], strides = [1, 1, 1]} : vector<16x16x16xf32> to vector<16x15x16xf32>
    %19 = tpu.concatenate %18, %15 in 1 : vector<16x15x16xf32>, vector<16x1x16xf32> -> vector<16x16x16xf32>
    %20 = tpu.concatenate %17, %14, %19 in 2 : vector<16x16x16xf32>, vector<16x16x16xf32>, vector<16x16x16xf32> -> vector<16x16x48xf32>
    %21 = arith.truncf %20 : vector<16x16x48xf32> to vector<16x16x48xbf16>
    %cst_10 = arith.constant 0.000000e+00 : bf16
    %22 = vector.broadcast %cst_10 : bf16 to vector<1x16x48xbf16>
    %23 = vector.extract_strided_slice %21 {offsets = [0, 0, 0], sizes = [15, 16, 48], strides = [1, 1, 1]} : vector<16x16x48xbf16> to vector<15x16x48xbf16>
    %24 = tpu.concatenate %22, %23 in 0 : vector<1x16x48xbf16>, vector<15x16x48xbf16> -> vector<16x16x48xbf16>
    %25 = vector.extract_strided_slice %21 {offsets = [1, 0, 0], sizes = [15, 16, 48], strides = [1, 1, 1]} : vector<16x16x48xbf16> to vector<15x16x48xbf16>
    %26 = tpu.concatenate %25, %22 in 0 : vector<15x16x48xbf16>, vector<1x16x48xbf16> -> vector<16x16x48xbf16>
    %27 = vector.shape_cast %24 : vector<16x16x48xbf16> to vector<256x48xbf16>
    %c0_11 = arith.constant 0 : index
    %c0_12 = arith.constant 0 : index
    %c0_13 = arith.constant 0 : index
    %28 = vector.load %arg4[%c0_11, %c0_12, %c0_13] : memref<3x48x16xbf16, #tpu.memory_space<vmem>>, vector<1x48x16xbf16>
    %29 = vector.shape_cast %28 : vector<1x48x16xbf16> to vector<48x16xbf16>
    %cst_14 = arith.constant dense<0.000000e+00> : vector<256x16xf32>
    %30 = tpu.matmul %27, %29, %cst_14 {dimension_numbers = #tpu.dot_dimension_numbers<[1], [0], [0], [1], [0, 0, 1, 1], [], []>} : vector<256x48xbf16>, vector<48x16xbf16>, vector<256x16xf32> -> vector<256x16xf32>
    %31 = vector.shape_cast %21 : vector<16x16x48xbf16> to vector<256x48xbf16>
    %c1 = arith.constant 1 : index
    %c0_15 = arith.constant 0 : index
    %c0_16 = arith.constant 0 : index
    %32 = vector.load %arg4[%c1, %c0_15, %c0_16] : memref<3x48x16xbf16, #tpu.memory_space<vmem>>, vector<1x48x16xbf16>
    %33 = vector.shape_cast %32 : vector<1x48x16xbf16> to vector<48x16xbf16>
    %cst_17 = arith.constant dense<0.000000e+00> : vector<256x16xf32>
    %34 = tpu.matmul %31, %33, %cst_17 {dimension_numbers = #tpu.dot_dimension_numbers<[1], [0], [0], [1], [0, 0, 1, 1], [], []>} : vector<256x48xbf16>, vector<48x16xbf16>, vector<256x16xf32> -> vector<256x16xf32>
    %35 = arith.addf %30, %34 : vector<256x16xf32>
    %36 = vector.shape_cast %26 : vector<16x16x48xbf16> to vector<256x48xbf16>
    %c2 = arith.constant 2 : index
    %c0_18 = arith.constant 0 : index
    %c0_19 = arith.constant 0 : index
    %37 = vector.load %arg4[%c2, %c0_18, %c0_19] : memref<3x48x16xbf16, #tpu.memory_space<vmem>>, vector<1x48x16xbf16>
    %38 = vector.shape_cast %37 : vector<1x48x16xbf16> to vector<48x16xbf16>
    %cst_20 = arith.constant dense<0.000000e+00> : vector<256x16xf32>
    %39 = tpu.matmul %36, %38, %cst_20 {dimension_numbers = #tpu.dot_dimension_numbers<[1], [0], [0], [1], [0, 0, 1, 1], [], []>} : vector<256x48xbf16>, vector<48x16xbf16>, vector<256x16xf32> -> vector<256x16xf32>
    %40 = arith.addf %35, %39 : vector<256x16xf32>
    %cst_21 = arith.constant dense<0.000000e+00> : vector<16xf32>
    %41 = vector.multi_reduction <add>, %40, %cst_21 [0] : vector<256x16xf32> to vector<16xf32>
    %42 = vector.shape_cast %41 : vector<16xf32> to vector<1x16xf32>
    %43 = arith.mulf %40, %40 : vector<256x16xf32>
    %cst_22 = arith.constant dense<0.000000e+00> : vector<16xf32>
    %44 = vector.multi_reduction <add>, %43, %cst_22 [0] : vector<256x16xf32> to vector<16xf32>
    %45 = vector.shape_cast %44 : vector<16xf32> to vector<1x16xf32>
    %46 = tpu.concatenate %42, %45 in 0 : vector<1x16xf32>, vector<1x16xf32> -> vector<2x16xf32>
    %c0_23 = arith.constant 0 : index
    %c0_24 = arith.constant 0 : index
    %c0_25 = arith.constant 0 : index
    %47 = vector.load %arg6[%c0_23, %c0_24, %c0_25] : memref<1x2x16xf32, #tpu.memory_space<vmem>>, vector<1x2x16xf32>
    %48 = vector.shape_cast %47 : vector<1x2x16xf32> to vector<2x16xf32>
    %49 = vector.shape_cast %46 : vector<2x16xf32> to vector<1x2x16xf32>
    tpu.vector_store %arg6[%c0_23, %c0_24, %c0_25], %49 {strides = array<i32>} : memref<1x2x16xf32, #tpu.memory_space<vmem>>, vector<1x2x16xf32>,
    %50 = vector.shape_cast %40 : vector<256x16xf32> to vector<16x16x16xf32>
    %51 = arith.truncf %50 : vector<16x16x16xf32> to vector<16x16x16xbf16>
    %c0_26 = arith.constant 0 : index
    %c0_27 = arith.constant 0 : index
    %c0_28 = arith.constant 0 : index
    %c0_29 = arith.constant 0 : index
    %52 = vector.load %arg5[%c0_26, %c0_27, %c0_28, %c0_29] : memref<1x16x16x16xbf16, #tpu.memory_space<vmem>>, vector<1x16x16x16xbf16>
    %53 = vector.shape_cast %52 : vector<1x16x16x16xbf16> to vector<16x16x16xbf16>
    %54 = vector.shape_cast %51 : vector<16x16x16xbf16> to vector<1x16x16x16xbf16>
    tpu.vector_store %arg5[%c0_26, %c0_27, %c0_28, %c0_29], %54 {strides = array<i32>} : memref<1x16x16x16xbf16, #tpu.memory_space<vmem>>, vector<1x16x16x16xbf16>,
    return
  }
  func.func @transform_0(%arg0: i32) -> (i32, i32, i32, i32) {
    %c0_i32 = arith.constant 0 : i32
    %c0_i32_0 = arith.constant 0 : i32
    %c0_i32_1 = arith.constant 0 : i32
    %c0_i32_2 = arith.constant 0 : i32
    return %arg0, %c0_i32, %c0_i32_0, %c0_i32_1 : i32, i32, i32, i32
  }
  func.func @transform_1(%arg0: i32) -> (i32, i32, i32) {
    %c0_i32 = arith.constant 0 : i32
    %c0_i32_0 = arith.constant 0 : i32
    %c0_i32_1 = arith.constant 0 : i32
    return %arg0, %c0_i32, %c0_i32_0 : i32, i32, i32
  }
  func.func @transform_2(%arg0: i32) -> (i32, i32, i32) {
    %c0_i32 = arith.constant 0 : i32
    %c0_i32_0 = arith.constant 0 : i32
    %c0_i32_1 = arith.constant 0 : i32
    return %arg0, %c0_i32, %c0_i32_0 : i32, i32, i32
  }
  func.func @transform_3(%arg0: i32) -> (i32, i32, i32) {
    %c0_i32 = arith.constant 0 : i32
    %c0_i32_0 = arith.constant 0 : i32
    %c0_i32_1 = arith.constant 0 : i32
    %c0_i32_2 = arith.constant 0 : i32
    return %c0_i32, %c0_i32_0, %c0_i32_1 : i32, i32, i32
  }
  func.func @transform_4(%arg0: i32) -> (i32, i32, i32, i32) {
    %c0_i32 = arith.constant 0 : i32
    %c0_i32_0 = arith.constant 0 : i32
    %c0_i32_1 = arith.constant 0 : i32
    %c0_i32_2 = arith.constant 0 : i32
    return %arg0, %c0_i32, %c0_i32_0, %c0_i32_1 : i32, i32, i32, i32
  }
  func.func @transform_5(%arg0: i32) -> (i32, i32, i32) {
    %c0_i32 = arith.constant 0 : i32
    %c0_i32_0 = arith.constant 0 : i32
    %c0_i32_1 = arith.constant 0 : i32
    return %arg0, %c0_i32, %c0_i32_0 : i32, i32, i32
  }
}

module attributes {stable_mosaic.version = 11 : i64} {
  func.func @_norm_relu_kernel(%arg0: i32, %arg1: memref<1x16x16x16xbf16, #tpu.memory_space<vmem>>, %arg2: memref<1x1x16xf32, #tpu.memory_space<vmem>>, %arg3: memref<1x1x16xf32, #tpu.memory_space<vmem>>, %arg4: memref<1x16x16x16xf32, #tpu.memory_space<vmem>>) attributes {dimension_semantics = [#tpu.dimension_semantics<parallel>], iteration_bounds = array<i64: 2>, scalar_prefetch = 0 : i64, scratch_operands = 0 : i64, tpu.core_type = #tpu.core_type<tc>, window_params = [{transform_indices = @transform_0, window_bounds = array<i64: 1, 16, 16, 16>}, {transform_indices = @transform_1, window_bounds = array<i64: 1, 1, 16>}, {transform_indices = @transform_2, window_bounds = array<i64: 1, 1, 16>}, {transform_indices = @transform_3, window_bounds = array<i64: 1, 16, 16, 16>}]} {
    %c0 = arith.constant 0 : index
    %c0_0 = arith.constant 0 : index
    %c0_1 = arith.constant 0 : index
    %c0_2 = arith.constant 0 : index
    %0 = vector.load %arg1[%c0, %c0_0, %c0_1, %c0_2] : memref<1x16x16x16xbf16, #tpu.memory_space<vmem>>, vector<1x16x16x16xbf16>
    %1 = vector.shape_cast %0 : vector<1x16x16x16xbf16> to vector<16x16x16xbf16>
    %2 = arith.extf %1 : vector<16x16x16xbf16> to vector<16x16x16xf32>
    %c0_3 = arith.constant 0 : index
    %c0_4 = arith.constant 0 : index
    %c0_5 = arith.constant 0 : index
    %3 = vector.load %arg2[%c0_3, %c0_4, %c0_5] : memref<1x1x16xf32, #tpu.memory_space<vmem>>, vector<1x1x16xf32>
    %4 = vector.shape_cast %3 : vector<1x1x16xf32> to vector<1x16xf32>
    %5 = vector.shape_cast %4 : vector<1x16xf32> to vector<1x1x16xf32>
    %6 = vector.broadcast %5 : vector<1x1x16xf32> to vector<16x16x16xf32>
    %7 = arith.mulf %2, %6 : vector<16x16x16xf32>
    %c0_6 = arith.constant 0 : index
    %c0_7 = arith.constant 0 : index
    %c0_8 = arith.constant 0 : index
    %8 = vector.load %arg3[%c0_6, %c0_7, %c0_8] : memref<1x1x16xf32, #tpu.memory_space<vmem>>, vector<1x1x16xf32>
    %9 = vector.shape_cast %8 : vector<1x1x16xf32> to vector<1x16xf32>
    %10 = vector.shape_cast %9 : vector<1x16xf32> to vector<1x1x16xf32>
    %11 = vector.broadcast %10 : vector<1x1x16xf32> to vector<16x16x16xf32>
    %12 = arith.addf %7, %11 : vector<16x16x16xf32>
    %cst = arith.constant 0.000000e+00 : f32
    %13 = vector.broadcast %cst : f32 to vector<16x16x16xf32>
    %14 = arith.maximumf %12, %13 : vector<16x16x16xf32>
    %c0_9 = arith.constant 0 : index
    %c0_10 = arith.constant 0 : index
    %c0_11 = arith.constant 0 : index
    %c0_12 = arith.constant 0 : index
    %15 = vector.load %arg4[%c0_9, %c0_10, %c0_11, %c0_12] : memref<1x16x16x16xf32, #tpu.memory_space<vmem>>, vector<1x16x16x16xf32>
    %16 = vector.shape_cast %15 : vector<1x16x16x16xf32> to vector<16x16x16xf32>
    %17 = vector.shape_cast %14 : vector<16x16x16xf32> to vector<1x16x16x16xf32>
    tpu.vector_store %arg4[%c0_9, %c0_10, %c0_11, %c0_12], %17 {strides = array<i32>} : memref<1x16x16x16xf32, #tpu.memory_space<vmem>>, vector<1x16x16x16xf32>,
    return
  }
  func.func @transform_0(%arg0: i32) -> (i32, i32, i32, i32) {
    %c0_i32 = arith.constant 0 : i32
    %c0_i32_0 = arith.constant 0 : i32
    %c0_i32_1 = arith.constant 0 : i32
    %c0_i32_2 = arith.constant 0 : i32
    return %arg0, %c0_i32, %c0_i32_0, %c0_i32_1 : i32, i32, i32, i32
  }
  func.func @transform_1(%arg0: i32) -> (i32, i32, i32) {
    %c0_i32 = arith.constant 0 : i32
    %c0_i32_0 = arith.constant 0 : i32
    %c0_i32_1 = arith.constant 0 : i32
    return %arg0, %c0_i32, %c0_i32_0 : i32, i32, i32
  }
  func.func @transform_2(%arg0: i32) -> (i32, i32, i32) {
    %c0_i32 = arith.constant 0 : i32
    %c0_i32_0 = arith.constant 0 : i32
    %c0_i32_1 = arith.constant 0 : i32
    return %arg0, %c0_i32, %c0_i32_0 : i32, i32, i32
  }
  func.func @transform_3(%arg0: i32) -> (i32, i32, i32, i32) {
    %c0_i32 = arith.constant 0 : i32
    %c0_i32_0 = arith.constant 0 : i32
    %c0_i32_1 = arith.constant 0 : i32
    %c0_i32_2 = arith.constant 0 : i32
    return %arg0, %c0_i32, %c0_i32_0, %c0_i32_1 : i32, i32, i32, i32
  }
}

</mosaic_0001>

<llo_original>
// kernel: tile.8
$region0: #{tile.8}
  #allocation0 [shape = 's32[1]{0}', space=sflag, size = 0x4, scoped, tag = 'scoped memory for tile.8']
  %s0 = inlined_call_operand.vmem [shape: f32[16], index: 0, kind: input, shape index: {}]
  %s1 = inlined_call_operand.vmem [shape: f32[4,16], index: 1, kind: output, shape index: {}]
  // Predicated region
  $region2: #{tile.8} parent=0 // pred_check
    _
  $region3: #{tile.8} parent=0 // pred_check_branch
    %3 = sbr.rel (0) target = $region5
  $region4: #{tile.8} parent=0 // pred_region
    _
  $region5: #{tile.8} parent=0 // pred_fallthru
    _
  %v4 = vld [vmem:[%s0] ss:$0 sm:$0xff]
  %5 = vst [vmem:[%s1] sm:$0xf] %v4

// kernel: tile.9
$region0: #{tile.9}
  %s0 = inlined_call_operand.vmem [shape: f32[4,16], index: 0, kind: input, shape index: {}]
  %s1 = inlined_call_operand.vmem [shape: f32[1,64], index: 1, kind: output, shape index: {}]
  $region1: #{tile.9} parent=0
    #allocation0 [shape = 'u8[4096]{0}', space=vmem, size = 0x1000, scoped, tag = 'scoped mem for output reshape']
    #allocation1 [shape = 'u8[4096]{0}', space=vmem, size = 0x1000, scoped, tag = 'scoped mem for input reshape']
    %s3 = sshllo.u32 0, 4
    %v4 = vld [vmem:[%s0] sm:%s3]
    %5 = vst [vmem:[#allocation1] sm:%s3] %v4
    %v6 = vld [vmem:[#allocation1] sm:$0x1]
    %vm7 = vcmask 130048
    %8 = vst.msk [vmem:[#allocation0] sm:$0x1] %vm7, %v6
    %s9 = scalar_lea.vmem [#allocation1], 3
    %v10 = vld [vmem:[%s9] sm:$0x1]
    %11 = vrot.lane.b32.xlu0 %v10, 48
    %v12 = vpop.permute.xlu0 %11
    %vm13 = vcmask 523648
    %14 = vst.msk [vmem:[#allocation0] sm:$0x1] %vm13, %v12
    %s15 = scalar_lea.vmem [#allocation1], 2
    %v16 = vld [vmem:[%s15] sm:$0x1]
    %17 = vrot.lane.b32.xlu0 %v16, 32
    %v18 = vpop.permute.xlu0 %17
    %vm19 = vcmask 392448
    %20 = vst.msk [vmem:[#allocation0] sm:$0x1] %vm19, %v18
    %s21 = scalar_lea.vmem [#allocation1], 1
    %v22 = vld [vmem:[%s21] sm:$0x1]
    %23 = vrot.lane.b32.xlu0 %v22, 16
    %v24 = vpop.permute.xlu0 %23
    %vm25 = vcmask 261248
    %26 = vst.msk [vmem:[#allocation0] sm:$0x1] %vm25, %v24
    %s28 = sshllo.u32 0, 1
    %v30 = vld [vmem:[#allocation0] sm:%s28]
    %s31 = sshllo.u32 0, 1
    %32 = vst [vmem:[%s1] sm:%s31] %v30

// kernel: vae_up_forward.5
$region0: #{vae_up_forward.5}
  #allocation0 [shape = 'u32[]', space=smem, size = 0x4, offset = 0x4, fixed_abs, tag = 'smem constant byte address 0x4 - core index']
  #allocation1 [shape = 'u32[144,128]{1,0:T(1,128)}', space=vmem, size = 0x12000, scoped, tag = 'internal scratch']
  %s0 = inlined_call_operand.vmem [shape: bf16[2,8,8,4], index: 0, kind: input, shape index: {}]
  %s1 = inlined_call_operand.vmem [shape: bf16[4,64], index: 1, kind: input, shape index: {}]
  %s2 = inlined_call_operand.vmem [shape: f32[1,64], index: 2, kind: input, shape index: {}]
  %s3 = inlined_call_operand.vmem [shape: bf16[2,8,2,8,32], index: 3, kind: output, shape index: {}]
  %s4 = sld [smem:[#allocation0]]
  $region45: #{vae_up_forward.5} parent=0
    _
  %s6 = ssub.s32 1, %s4
  %s7 = scalar_select 0, %s6, %s4
  loop: start=0, step=1, limit=4
  $region2: #{vae_up_forward.5} parent=0 // loop_pre_header
    _
  $region3: #{vae_up_forward.5} parent=0 // loop_header
    %s9 = sphi 0, %s13
    %p10 = scmp.ge.s32.totalorder %s9, 4
    %s16 = sphi 0, %s28
    %s17 = sphi 0, %s24
    %s18 = sphi 0, %s16
    %s19 = sphi 0, %s17
    %s20 = sphi 0, %s18
    %s21 = sphi 0, %s19
    %s33 = sphi 0, %s35
    %s36 = sphi 0, %s33
    %s37 = sphi 0, %s36
    %s53 = sphi 0, %s37
    %s57 = sphi 0, %s57
    %s59 = sphi 0, %s57
    %s60 = sphi 0, %s59
    %s74 = sphi 0, %s60
    %s78 = sphi 0, %s78
    %s80 = sphi 0, %s78
    %s81 = sphi 0, %s80
    %s95 = sphi 0, %s81
    %s103 = sphi 0, %s105
    %s106 = sphi 0, %s103
    %s107 = sphi 0, %s106
    %s123 = sphi 0, %s107
  $region4: #{vae_up_forward.5} parent=0 // loop_header_branch
    %12 = sbr.rel (%p10) target = $region8
  $region5: #{vae_up_forward.5} parent=0 // loop_body
    %s14 = ssub.s32 %s9, 1
    %s15 = ssub.s32 %s9, 2
    %s22 = sadd.s32 1, %s17
    %p23 = scmp.ge.s32.totalorder %s22, 1
    %s24 = scalar_select %p23, 0, %s22
    %s25 = sadd.s32 1, %s16
    %s26 = scalar_select %p23, %s25, %s16
    %p27 = scmp.ge.s32.totalorder %s26, 2
    %s28 = scalar_select %p27, 0, %s26
    %s29 = ssub.s32 %s16, %s28
    %s30 = ssub.s32 %s17, %s24
    %s31 = sor.u32 %s29, %s30
    %p32 = scmp.eq.s32.totalorder %s31, 0
    %s34 = sadd.s32 %s33, 1
    %s35 = scalar_select %p32, %s33, %s34
    %p38 = pneg %p32
    %p39 = scmp.eq.s32.totalorder %s9, 1
    %p40 = por %p38, %p39
    %p41 = scmp.ne.s32.totalorder %s33, %s36
    %p42 = scmp.eq.s32.totalorder %s9, 0
    %p43 = por %p41, %p42
    %p44 = scmp.ne.s32.totalorder %s33, %s36
    %p45 = scmp.eq.s32.totalorder %s14, 1
    %p46 = por %p44, %p45
    %p47 = scmp.ne.s32.totalorder %s36, %s37
    %p48 = scmp.eq.s32.totalorder %s14, 0
    %p49 = por %p47, %p48
    %p50 = scmp.ne.s32.totalorder %s36, %s37
    %p51 = scmp.eq.s32.totalorder %s15, 1
    %p52 = por %p50, %p51
    %p54 = scmp.ne.s32.totalorder %s37, %s53
    %p55 = scmp.eq.s32.totalorder %s15, 0
    %p56 = por %p54, %p55
    %s58 = sadd.s32 %s57, 1
    %p61 = scmp.eq.s32.totalorder %s9, 1
    %p62 = scmp.ne.s32.totalorder %s57, %s59
    %p63 = scmp.eq.s32.totalorder %s9, 0
    %p64 = por %p62, %p63
    %p65 = scmp.ne.s32.totalorder %s57, %s59
    %p66 = scmp.eq.s32.totalorder %s14, 1
    %p67 = por %p65, %p66
    %p68 = scmp.ne.s32.totalorder %s59, %s60
    %p69 = scmp.eq.s32.totalorder %s14, 0
    %p70 = por %p68, %p69
    %p71 = scmp.ne.s32.totalorder %s59, %s60
    %p72 = scmp.eq.s32.totalorder %s15, 1
    %p73 = por %p71, %p72
    %p75 = scmp.ne.s32.totalorder %s60, %s74
    %p76 = scmp.eq.s32.totalorder %s15, 0
    %p77 = por %p75, %p76
    %s79 = sadd.s32 %s78, 1
    %p82 = scmp.eq.s32.totalorder %s9, 1
    %p83 = scmp.ne.s32.totalorder %s78, %s80
    %p84 = scmp.eq.s32.totalorder %s9, 0
    %p85 = por %p83, %p84
    %p86 = scmp.ne.s32.totalorder %s78, %s80
    %p87 = scmp.eq.s32.totalorder %s14, 1
    %p88 = por %p86, %p87
    %p89 = scmp.ne.s32.totalorder %s80, %s81
    %p90 = scmp.eq.s32.totalorder %s14, 0
    %p91 = por %p89, %p90
    %p92 = scmp.ne.s32.totalorder %s80, %s81
    %p93 = scmp.eq.s32.totalorder %s15, 1
    %p94 = por %p92, %p93
    %p96 = scmp.ne.s32.totalorder %s81, %s95
    %p97 = scmp.eq.s32.totalorder %s15, 0
    %p98 = por %p96, %p97
    %s99 = ssub.s32 %s16, %s28
    %s100 = ssub.s32 %s17, %s24
    %s101 = sor.u32 %s99, %s100
    %p102 = scmp.eq.s32.totalorder %s101, 0
    %s104 = sadd.s32 %s103, 1
    %s105 = scalar_select %p102, %s103, %s104
    %p108 = pneg %p102
    %p109 = scmp.eq.s32.totalorder %s9, 1
    %p110 = por %p108, %p109
    %p111 = scmp.ne.s32.totalorder %s103, %s106
    %p112 = scmp.eq.s32.totalorder %s9, 0
    %p113 = por %p111, %p112
    %p114 = scmp.ne.s32.totalorder %s103, %s106
    %p115 = scmp.eq.s32.totalorder %s14, 1
    %p116 = por %p114, %p115
    %p117 = scmp.ne.s32.totalorder %s106, %s107
    %p118 = scmp.eq.s32.totalorder %s14, 0
    %p119 = por %p117, %p118
    %p120 = scmp.ne.s32.totalorder %s106, %s107
    %p121 = scmp.eq.s32.totalorder %s15, 1
    %p122 = por %p120, %p121
    %p124 = scmp.ne.s32.totalorder %s107, %s123
    %p125 = scmp.eq.s32.totalorder %s15, 0
    %p126 = por %p124, %p125
    %p127 = scmp.le.s32.totalorder 1, %s9
    %p128 = scmp.lt.s32.totalorder %s9, 3
    %p129 = pnand %p127, %p128
    %p130 = pneg %p129
    // Predicated region
    $region9: #{vae_up_forward.5} parent=5 // pred_check
      _
    $region10: #{vae_up_forward.5} parent=5 // pred_check_branch
      %132 = sbr.rel (%p129) target = $region12
    $region11: #{vae_up_forward.5} parent=5 // pred_region
      %s133 = ssub.s32 %s9, 1
      // Predicated region
      $region13: #{vae_up_forward.5} parent=11 // pred_check
        %p134 = pneg %p70
      $region14: #{vae_up_forward.5} parent=11 // pred_check_branch
        %136 = sbr.rel (%p134) target = $region16
      $region15: #{vae_up_forward.5} parent=11 // pred_region
        _
      $region16: #{vae_up_forward.5} parent=11 // pred_fallthru
        _
      // Predicated region
      $region17: #{vae_up_forward.5} parent=11 // pred_check
        %p137 = pneg %p91
      $region18: #{vae_up_forward.5} parent=11 // pred_check_branch
        %139 = sbr.rel (%p137) target = $region20
      $region19: #{vae_up_forward.5} parent=11 // pred_region
        _
      $region20: #{vae_up_forward.5} parent=11 // pred_fallthru
        _
    $region12: #{vae_up_forward.5} parent=5 // pred_fallthru
      _
    %p140 = scmp.lt.s32.totalorder %s9, 2
    // Predicated region
    $region21: #{vae_up_forward.5} parent=5 // pred_check
      %p141 = pneg %p140
    $region22: #{vae_up_forward.5} parent=5 // pred_check_branch
      %143 = sbr.rel (%p141) target = $region24
    $region23: #{vae_up_forward.5} parent=5 // pred_region
      // Predicated region
      $region25: #{vae_up_forward.5} parent=23 // pred_check
        %p144 = pneg %p43
      $region26: #{vae_up_forward.5} parent=23 // pred_check_branch
        %146 = sbr.rel (%p144) target = $region28
      $region27: #{vae_up_forward.5} parent=23 // pred_region
        %s147 = smul.u32 8, %s17
        %p148 = scmp.lt.s32.totalorder %s16, 1
        %s149 = scalar_select %p148, %s16, 1
        %p150 = scmp.lt.s32.totalorder %s147, 7
        %s151 = scalar_select %p150, %s147, 7
        %s152 = smul.addr %s149, 8
        %s153 = sadd.s32 %s151, %s152
        %s154 = smul.addr %s153, 4
        %s155 = scalar_lea.vmem %s0, %s154
        %s156 = smul.u32 8, %s17
      $region28: #{vae_up_forward.5} parent=23 // pred_fallthru
        _
    $region24: #{vae_up_forward.5} parent=5 // pred_fallthru
      _
    %p157 = scmp.le.s32.totalorder 1, %s9
    %p158 = scmp.lt.s32.totalorder %s9, 3
    %p159 = pnand %p157, %p158
    %p160 = pneg %p159
    // Predicated region
    $region29: #{vae_up_forward.5} parent=5 // pred_check
      _
    $region30: #{vae_up_forward.5} parent=5 // pred_check_branch
      %162 = sbr.rel (%p159) target = $region32
    $region31: #{vae_up_forward.5} parent=5 // pred_region
      %s163 = ssub.s32 %s9, 1
      %s164 = smul.u32 8, %s19
      %p165 = scmp.lt.s32.totalorder %s18, 1
      %s166 = scalar_select %p165, %s18, 1
      %p167 = scmp.lt.s32.totalorder %s164, 7
      %s168 = scalar_select %p167, %s164, 7
      %s169 = smul.addr %s166, 8
      %s170 = sadd.s32 %s168, %s169
      %s171 = smul.addr %s170, 4
      %s172 = scalar_lea.vmem %s0, %s171
      %p173 = pneg %p49
      %p174 = pneg %p46
      %p175 = pneg %p70
      %p176 = pneg %p67
      %p177 = pneg %p91
      %p178 = pneg %p88
      %p179 = pneg %p119
      %p180 = pneg %p116
      %s181 = smul.u32 8, %s19
      %p182 = scmp.lt.s32.totalorder %s18, 1
      %s183 = scalar_select %p182, %s18, 1
      %p184 = scmp.lt.s32.totalorder %s181, 7
      %s185 = scalar_select %p184, %s181, 7
      %s186 = smul.addr %s185, 2
      %s187 = smul.addr %s183, 16
      %s188 = sadd.s32 %s186, %s187
      %s189 = smul.addr %s188, 4
      %s190 = scalar_lea.vmem %s3, %s189
      %s191 = smul.u32 8, %s19
      %p192 = scmp.lt.s32.totalorder %s18, 1
      %s193 = scalar_select %p192, %s18, 1
      %p194 = scmp.lt.s32.totalorder %s191, 7
      %s195 = scalar_select %p194, %s191, 7
      %s196 = smul.addr %s193, 8
      %s197 = sadd.s32 %s195, %s196
      %s198 = smul.addr %s197, 4
      %s199 = scalar_lea.vmem %s0, %s198
      %s200 = smul.u32 8, %s19
      %s201 = smul.u32 8, %s19
      %p202 = scmp.lt.s32.totalorder %s18, 1
      %s203 = scalar_select %p202, %s18, 1
      %p204 = scmp.lt.s32.totalorder %s201, 7
      %s205 = scalar_select %p204, %s201, 7
      %s206 = smul.addr %s205, 2
      %s207 = smul.addr %s203, 16
      %s208 = sadd.s32 %s206, %s207
      %s209 = smul.addr %s208, 4
      %s210 = scalar_lea.vmem %s3, %s209
      %s211 = smul.u32 8, %s19
      %v213 = vld [vmem:[%s199] sm:$0xf]
      %v214 = vld [vmem:[%s199 + $0x4] sm:$0xf]
      %v215 = vld [vmem:[%s199 + $0x8] sm:$0xf]
      %v216 = vld [vmem:[%s199 + $0xc] sm:$0xf]
      %v217 = vld [vmem:[%s199 + $0x10] sm:$0xf]
      %v218 = vld [vmem:[%s199 + $0x14] sm:$0xf]
      %v219 = vld [vmem:[%s199 + $0x18] sm:$0xf]
      %v220 = vld [vmem:[%s199 + $0x1c] sm:$0xf]
      %v221 = vld [vmem:[%s1] sm:$0x3]
      %v222 = vld [vmem:[%s2] sm:$0x1]
      %v224 = vlaneseq
      %v225 = vshrl.u32 %v224, 7
      %v226 = vsub.s32 0, %v225
      %v227 = vrot.slane %v222, %v226
      %v237 = vunpack.c.l.b16 %v213
      %v238 = vunpack.c.l.b16 %v214
      %v239 = vunpack.c.l.b16 %v215
      %v240 = vunpack.c.l.b16 %v216
      %v241 = vunpack.c.l.b16 %v217
      %v242 = vunpack.c.l.b16 %v218
      %v243 = vunpack.c.l.b16 %v219
      %v244 = vunpack.c.l.b16 %v220
      %v245 = vpack.c.b16 %v238, %v237
      %v246 = vpack.c.b16 %v240, %v239
      %v247 = vpack.c.b16 %v242, %v241
      %v248 = vpack.c.b16 %v244, %v243
      %vm249 = vcmask 31744
      %v251 = vsel %vm249, %v245, 0
      %v254 = vsel %vm249, %v246, 0
      %v257 = vsel %vm249, %v247, 0
      %v260 = vsel %vm249, %v248, 0
      %vm262 = vcmask 1041408
      %v264 = vsel %vm262, %v221, 0
      %266 = vmatprep.subr.bf16.mxu0 0
      %267 = vmatpush1.bf16.msra.mxu0 %v264
      %268 = vmatprep.subr.bf16.mxu0 0
      %269 = vmatpush1.bf16.msra.mxu0 0
      %270 = vmatprep.subr.bf16.mxu0 0
      %271 = vmatpush1.bf16.msra.mxu0 0
      %272 = vmatprep.subr.bf16.mxu0 0
      %273 = vmatpush1.bf16.msra.mxu0 0
      %274 = vmatprep.subr.bf16.mxu0 0
      %275 = vmatpush1.bf16.msra.mxu0 0
      %276 = vmatprep.subr.bf16.mxu0 0
      %277 = vmatpush1.bf16.msra.mxu0 0
      %278 = vmatprep.subr.bf16.mxu0 0
      %279 = vmatpush1.bf16.msra.mxu0 0
      %280 = vmatprep.subr.bf16.mxu0 0
      %281 = vmatpush1.bf16.msra.mxu0 0
      %282 = vmatprep.subr.bf16.mxu0 0
      %283 = vmatpush1.bf16.msra.mxu0 0
      %284 = vmatprep.subr.bf16.mxu0 0
      %285 = vmatpush1.bf16.msra.mxu0 0
      %286 = vmatprep.subr.bf16.mxu0 0
      %287 = vmatpush1.bf16.msra.mxu0 0
      %288 = vmatprep.subr.bf16.mxu0 0
      %289 = vmatpush1.bf16.msra.mxu0 0
      %290 = vmatprep.subr.bf16.mxu0 0
      %291 = vmatpush1.bf16.msra.mxu0 0
      %292 = vmatprep.subr.bf16.mxu0 0
      %293 = vmatpush1.bf16.msra.mxu0 0
      %294 = vmatprep.subr.bf16.mxu0 0
      %295 = vmatpush1.bf16.msra.mxu0 0
      %296 = vmatprep.subr.bf16.mxu0 0
      %297 = vmatpush1.bf16.msra.mxu0 0
      %298 = vmatprep.mubr.bf16.mxu0 0
      %299 = vmatmul.mubr.bf16.gmra.mrb[0].mxu0 %v251
      %v300 = vpop.f32.mrb[0].mxu0
      %v301 = vadd.f32 %v227, %v300
      %v302 = vpop.f32.mrb[0].mxu0
      %v303 = vpop.f32.mrb[0].mxu0
      %v304 = vadd.f32 %v227, %v303
      %v305 = vpop.f32.mrb[0].mxu0
      %306 = vmatprep.mubr.bf16.mxu0 0
      %307 = vmatmul.mubr.bf16.gmra.mrb[0].mxu0 %v254
      %v308 = vpop.f32.mrb[0].mxu0
      %v309 = vadd.f32 %v227, %v308
      %v310 = vpop.f32.mrb[0].mxu0
      %v311 = vpop.f32.mrb[0].mxu0
      %v312 = vadd.f32 %v227, %v311
      %v313 = vpop.f32.mrb[0].mxu0
      %314 = vmatprep.mubr.bf16.mxu0 0
      %315 = vmatmul.mubr.bf16.gmra.mrb[0].mxu0 %v257
      %v316 = vpop.f32.mrb[0].mxu0
      %v317 = vadd.f32 %v227, %v316
      %v318 = vpop.f32.mrb[0].mxu0
      %v319 = vpop.f32.mrb[0].mxu0
      %v320 = vadd.f32 %v227, %v319
      %v321 = vpop.f32.mrb[0].mxu0
      %322 = vmatprep.mubr.bf16.mxu0 0
      %323 = vmatmul.mubr.bf16.gmra.mrb[0].mxu0 %v260
      %v324 = vpop.f32.mrb[0].mxu0
      %v325 = vadd.f32 %v227, %v324
      %v326 = vpop.f32.mrb[0].mxu0
      %v327 = vpop.f32.mrb[0].mxu0
      %v328 = vadd.f32 %v227, %v327
      %v329 = vpop.f32.mrb[0].mxu0
      %330 = vdwg.mxu0
      %339 = vrot.lane.b32.xlu0 %v301, 96
      %v340 = vpop.permute.xlu0 %339
      %341 = vrot.lane.b32.xlu0 %v304, 96
      %v342 = vpop.permute.xlu0 %341
      %343 = vrot.lane.b32.xlu0 %v309, 96
      %v344 = vpop.permute.xlu0 %343
      %345 = vrot.lane.b32.xlu0 %v312, 96
      %v346 = vpop.permute.xlu0 %345
      %347 = vrot.lane.b32.xlu0 %v317, 96
      %v348 = vpop.permute.xlu0 %347
      %349 = vrot.lane.b32.xlu0 %v320, 96
      %v350 = vpop.permute.xlu0 %349
      %351 = vrot.lane.b32.xlu0 %v325, 96
      %v352 = vpop.permute.xlu0 %351
      %353 = vrot.lane.b32.xlu0 %v328, 96
      %v354 = vpop.permute.xlu0 %353
      %v363 = vpack.c.bf16 %v301, %v301
      %v364 = vpack.c.bf16 %v340, %v340
      %v365 = vpack.c.bf16 %v304, %v304
      %v366 = vpack.c.bf16 %v342, %v342
      %v367 = vpack.c.bf16 %v309, %v309
      %v368 = vpack.c.bf16 %v344, %v344
      %v369 = vpack.c.bf16 %v312, %v312
      %v370 = vpack.c.bf16 %v346, %v346
      %v371 = vpack.c.bf16 %v317, %v317
      %v372 = vpack.c.bf16 %v348, %v348
      %v373 = vpack.c.bf16 %v320, %v320
      %v374 = vpack.c.bf16 %v350, %v350
      %v375 = vpack.c.bf16 %v325, %v325
      %v376 = vpack.c.bf16 %v352, %v352
      %v377 = vpack.c.bf16 %v328, %v328
      %v378 = vpack.c.bf16 %v354, %v354
      %vm379 = vcmask 257024
      %380 = vst.msk [vmem:[%s210] sm:$0xf] %vm379, %v363
      %381 = vst.msk [vmem:[%s210 + $0x4] sm:$0xf] %vm379, %v364
      %382 = vst.msk [vmem:[%s210 + $0x8] sm:$0xf] %vm379, %v365
      %383 = vst.msk [vmem:[%s210 + $0xc] sm:$0xf] %vm379, %v366
      %384 = vst.msk [vmem:[%s210 + $0x10] sm:$0xf] %vm379, %v367
      %385 = vst.msk [vmem:[%s210 + $0x14] sm:$0xf] %vm379, %v368
      %386 = vst.msk [vmem:[%s210 + $0x18] sm:$0xf] %vm379, %v369
      %387 = vst.msk [vmem:[%s210 + $0x1c] sm:$0xf] %vm379, %v370
      %388 = vst.msk [vmem:[%s210 + $0x20] sm:$0xf] %vm379, %v371
      %389 = vst.msk [vmem:[%s210 + $0x24] sm:$0xf] %vm379, %v372
      %390 = vst.msk [vmem:[%s210 + $0x28] sm:$0xf] %vm379, %v373
      %391 = vst.msk [vmem:[%s210 + $0x2c] sm:$0xf] %vm379, %v374
      %392 = vst.msk [vmem:[%s210 + $0x30] sm:$0xf] %vm379, %v375
      %393 = vst.msk [vmem:[%s210 + $0x34] sm:$0xf] %vm379, %v376
      %394 = vst.msk [vmem:[%s210 + $0x38] sm:$0xf] %vm379, %v377
      %395 = vst.msk [vmem:[%s210 + $0x3c] sm:$0xf] %vm379, %v378
      %s396 = smul.u32 8, %s19
      %p397 = scmp.lt.s32.totalorder %s18, 1
      %s398 = scalar_select %p397, %s18, 1
      %p399 = scmp.lt.s32.totalorder %s396, 7
      %s400 = scalar_select %p399, %s396, 7
      %s401 = smul.addr %s400, 2
      %s402 = smul.addr %s398, 16
      %s403 = sadd.s32 %s401, %s402
      %s404 = smul.addr %s403, 4
      %s405 = scalar_lea.vmem %s3, %s404
      // Predicated region
      $region33: #{vae_up_forward.5} parent=31 // pred_check
        %p406 = pneg %p116
      $region34: #{vae_up_forward.5} parent=31 // pred_check_branch
        %408 = sbr.rel (%p406) target = $region36
      $region35: #{vae_up_forward.5} parent=31 // pred_region
        %s409 = smul.u32 8, %s19
      $region36: #{vae_up_forward.5} parent=31 // pred_fallthru
        _
    $region32: #{vae_up_forward.5} parent=5 // pred_fallthru
      _
    %p410 = scmp.le.s32.totalorder 2, %s9
    // Predicated region
    $region37: #{vae_up_forward.5} parent=5 // pred_check
      %p411 = pneg %p410
    $region38: #{vae_up_forward.5} parent=5 // pred_check_branch
      %413 = sbr.rel (%p411) target = $region40
    $region39: #{vae_up_forward.5} parent=5 // pred_region
      %s414 = ssub.s32 %s9, 2
      // Predicated region
      $region41: #{vae_up_forward.5} parent=39 // pred_check
        %p415 = pneg %p122
      $region42: #{vae_up_forward.5} parent=39 // pred_check_branch
        %417 = sbr.rel (%p415) target = $region44
      $region43: #{vae_up_forward.5} parent=39 // pred_region
        %s418 = smul.u32 8, %s21
        %p419 = scmp.lt.s32.totalorder %s20, 1
        %s420 = scalar_select %p419, %s20, 1
        %p421 = scmp.lt.s32.totalorder %s418, 7
        %s422 = scalar_select %p421, %s418, 7
        %s423 = smul.addr %s422, 2
        %s424 = smul.addr %s420, 16
        %s425 = sadd.s32 %s423, %s424
        %s426 = smul.addr %s425, 4
        %s427 = scalar_lea.vmem %s3, %s426
      $region44: #{vae_up_forward.5} parent=39 // pred_fallthru
        _
    $region40: #{vae_up_forward.5} parent=5 // pred_fallthru
      _
  $region6: #{vae_up_forward.5} parent=0 // loop_footer
    %s13 = sadd.s32 1, %s9
  $region7: #{vae_up_forward.5} parent=0 // loop_footer_branch
    %8 = sbr.rel target = $region3
  $region8: #{vae_up_forward.5} parent=0 // loop_exit
    _

// kernel: vae_up_forward.9
$region0: #{vae_up_forward.9}
  #allocation0 [shape = 'u32[]', space=smem, size = 0x4, offset = 0x4, fixed_abs, tag = 'smem constant byte address 0x4 - core index']
  #allocation1 [shape = 'u32[144,128]{1,0:T(1,128)}', space=vmem, size = 0x12000, scoped, tag = 'internal scratch']
  %s0 = inlined_call_operand.vmem [shape: bf16[2,16,16,16], index: 0, kind: input, shape index: {}]
  %s1 = inlined_call_operand.vmem [shape: f32[2,1,16], index: 1, kind: input, shape index: {}]
  %s2 = inlined_call_operand.vmem [shape: f32[2,1,16], index: 2, kind: input, shape index: {}]
  %s3 = inlined_call_operand.vmem [shape: f32[2,16,16,16], index: 3, kind: output, shape index: {}]
  %s4 = sld [smem:[#allocation0]]
  $region45: #{vae_up_forward.9} parent=0
    _
  %s6 = ssub.s32 1, %s4
  %s7 = scalar_select 0, %s6, %s4
  loop: start=0, step=1, limit=4
  $region2: #{vae_up_forward.9} parent=0 // loop_pre_header
    _
  $region3: #{vae_up_forward.9} parent=0 // loop_header
    %s9 = sphi 0, %s13
    %p10 = scmp.ge.s32.totalorder %s9, 4
    %s19 = sphi 0, %s21
    %s22 = sphi 0, %s19
    %s23 = sphi 0, %s22
    %s39 = sphi 0, %s23
    %s45 = sphi 0, %s47
    %s48 = sphi 0, %s45
    %s49 = sphi 0, %s48
    %s65 = sphi 0, %s49
    %s71 = sphi 0, %s73
    %s74 = sphi 0, %s71
    %s75 = sphi 0, %s74
    %s91 = sphi 0, %s75
    %s97 = sphi 0, %s99
    %s100 = sphi 0, %s97
    %s101 = sphi 0, %s100
    %s117 = sphi 0, %s101
  $region4: #{vae_up_forward.9} parent=0 // loop_header_branch
    %12 = sbr.rel (%p10) target = $region8
  $region5: #{vae_up_forward.9} parent=0 // loop_body
    %s14 = ssub.s32 %s9, 1
    %s15 = ssub.s32 %s9, 2
    %s16 = sadd.s32 %s9, 1
    %s17 = ssub.s32 %s9, %s16
    %p18 = scmp.eq.s32.totalorder %s17, 0
    %s20 = sadd.s32 %s19, 1
    %s21 = scalar_select %p18, %s19, %s20
    %p24 = pneg %p18
    %p25 = scmp.eq.s32.totalorder %s9, 1
    %p26 = por %p24, %p25
    %p27 = scmp.ne.s32.totalorder %s19, %s22
    %p28 = scmp.eq.s32.totalorder %s9, 0
    %p29 = por %p27, %p28
    %p30 = scmp.ne.s32.totalorder %s19, %s22
    %p31 = scmp.eq.s32.totalorder %s14, 1
    %p32 = por %p30, %p31
    %p33 = scmp.ne.s32.totalorder %s22, %s23
    %p34 = scmp.eq.s32.totalorder %s14, 0
    %p35 = por %p33, %p34
    %p36 = scmp.ne.s32.totalorder %s22, %s23
    %p37 = scmp.eq.s32.totalorder %s15, 1
    %p38 = por %p36, %p37
    %p40 = scmp.ne.s32.totalorder %s23, %s39
    %p41 = scmp.eq.s32.totalorder %s15, 0
    %p42 = por %p40, %p41
    %s43 = ssub.s32 %s9, %s16
    %p44 = scmp.eq.s32.totalorder %s43, 0
    %s46 = sadd.s32 %s45, 1
    %s47 = scalar_select %p44, %s45, %s46
    %p50 = pneg %p44
    %p51 = scmp.eq.s32.totalorder %s9, 1
    %p52 = por %p50, %p51
    %p53 = scmp.ne.s32.totalorder %s45, %s48
    %p54 = scmp.eq.s32.totalorder %s9, 0
    %p55 = por %p53, %p54
    %p56 = scmp.ne.s32.totalorder %s45, %s48
    %p57 = scmp.eq.s32.totalorder %s14, 1
    %p58 = por %p56, %p57
    %p59 = scmp.ne.s32.totalorder %s48, %s49
    %p60 = scmp.eq.s32.totalorder %s14, 0
    %p61 = por %p59, %p60
    %p62 = scmp.ne.s32.totalorder %s48, %s49
    %p63 = scmp.eq.s32.totalorder %s15, 1
    %p64 = por %p62, %p63
    %p66 = scmp.ne.s32.totalorder %s49, %s65
    %p67 = scmp.eq.s32.totalorder %s15, 0
    %p68 = por %p66, %p67
    %s69 = ssub.s32 %s9, %s16
    %p70 = scmp.eq.s32.totalorder %s69, 0
    %s72 = sadd.s32 %s71, 1
    %s73 = scalar_select %p70, %s71, %s72
    %p76 = pneg %p70
    %p77 = scmp.eq.s32.totalorder %s9, 1
    %p78 = por %p76, %p77
    %p79 = scmp.ne.s32.totalorder %s71, %s74
    %p80 = scmp.eq.s32.totalorder %s9, 0
    %p81 = por %p79, %p80
    %p82 = scmp.ne.s32.totalorder %s71, %s74
    %p83 = scmp.eq.s32.totalorder %s14, 1
    %p84 = por %p82, %p83
    %p85 = scmp.ne.s32.totalorder %s74, %s75
    %p86 = scmp.eq.s32.totalorder %s14, 0
    %p87 = por %p85, %p86
    %p88 = scmp.ne.s32.totalorder %s74, %s75
    %p89 = scmp.eq.s32.totalorder %s15, 1
    %p90 = por %p88, %p89
    %p92 = scmp.ne.s32.totalorder %s75, %s91
    %p93 = scmp.eq.s32.totalorder %s15, 0
    %p94 = por %p92, %p93
    %s95 = ssub.s32 %s9, %s16
    %p96 = scmp.eq.s32.totalorder %s95, 0
    %s98 = sadd.s32 %s97, 1
    %s99 = scalar_select %p96, %s97, %s98
    %p102 = pneg %p96
    %p103 = scmp.eq.s32.totalorder %s9, 1
    %p104 = por %p102, %p103
    %p105 = scmp.ne.s32.totalorder %s97, %s100
    %p106 = scmp.eq.s32.totalorder %s9, 0
    %p107 = por %p105, %p106
    %p108 = scmp.ne.s32.totalorder %s97, %s100
    %p109 = scmp.eq.s32.totalorder %s14, 1
    %p110 = por %p108, %p109
    %p111 = scmp.ne.s32.totalorder %s100, %s101
    %p112 = scmp.eq.s32.totalorder %s14, 0
    %p113 = por %p111, %p112
    %p114 = scmp.ne.s32.totalorder %s100, %s101
    %p115 = scmp.eq.s32.totalorder %s15, 1
    %p116 = por %p114, %p115
    %p118 = scmp.ne.s32.totalorder %s101, %s117
    %p119 = scmp.eq.s32.totalorder %s15, 0
    %p120 = por %p118, %p119
    %p121 = scmp.le.s32.totalorder 1, %s9
    %p122 = scmp.lt.s32.totalorder %s9, 3
    %p123 = pnand %p121, %p122
    %p124 = pneg %p123
    // Predicated region
    $region9: #{vae_up_forward.9} parent=5 // pred_check
      _
    $region10: #{vae_up_forward.9} parent=5 // pred_check_branch
      %126 = sbr.rel (%p123) target = $region12
    $region11: #{vae_up_forward.9} parent=5 // pred_region
      %s127 = ssub.s32 %s9, 1
    $region12: #{vae_up_forward.9} parent=5 // pred_fallthru
      _
    %p128 = scmp.lt.s32.totalorder %s9, 2
    // Predicated region
    $region13: #{vae_up_forward.9} parent=5 // pred_check
      %p129 = pneg %p128
    $region14: #{vae_up_forward.9} parent=5 // pred_check_branch
      %131 = sbr.rel (%p129) target = $region16
    $region15: #{vae_up_forward.9} parent=5 // pred_region
      // Predicated region
      $region17: #{vae_up_forward.9} parent=15 // pred_check
        %p132 = pneg %p29
      $region18: #{vae_up_forward.9} parent=15 // pred_check_branch
        %134 = sbr.rel (%p132) target = $region20
      $region19: #{vae_up_forward.9} parent=15 // pred_region
        %p135 = scmp.lt.s32.totalorder %s9, 1
        %s136 = scalar_select %p135, %s9, 1
        %s137 = smul.addr %s136, 32
        %s138 = smul.addr %s137, 4
        %s139 = scalar_lea.vmem %s0, %s138
      $region20: #{vae_up_forward.9} parent=15 // pred_fallthru
        _
      // Predicated region
      $region21: #{vae_up_forward.9} parent=15 // pred_check
        %p140 = pneg %p55
      $region22: #{vae_up_forward.9} parent=15 // pred_check_branch
        %142 = sbr.rel (%p140) target = $region24
      $region23: #{vae_up_forward.9} parent=15 // pred_region
        %p143 = scmp.lt.s32.totalorder %s9, 1
        %s144 = scalar_select %p143, %s9, 1
        %s145 = scalar_lea.vmem %s1, %s144
      $region24: #{vae_up_forward.9} parent=15 // pred_fallthru
        _
      // Predicated region
      $region25: #{vae_up_forward.9} parent=15 // pred_check
        %p146 = pneg %p81
      $region26: #{vae_up_forward.9} parent=15 // pred_check_branch
        %148 = sbr.rel (%p146) target = $region28
      $region27: #{vae_up_forward.9} parent=15 // pred_region
        %p149 = scmp.lt.s32.totalorder %s9, 1
        %s150 = scalar_select %p149, %s9, 1
        %s151 = scalar_lea.vmem %s2, %s150
      $region28: #{vae_up_forward.9} parent=15 // pred_fallthru
        _
    $region16: #{vae_up_forward.9} parent=5 // pred_fallthru
      _
    %p152 = scmp.le.s32.totalorder 1, %s9
    %p153 = scmp.lt.s32.totalorder %s9, 3
    %p154 = pnand %p152, %p153
    %p155 = pneg %p154
    // Predicated region
    $region29: #{vae_up_forward.9} parent=5 // pred_check
      _
    $region30: #{vae_up_forward.9} parent=5 // pred_check_branch
      %157 = sbr.rel (%p154) target = $region32
    $region31: #{vae_up_forward.9} parent=5 // pred_region
      %s158 = ssub.s32 %s9, 1
      %p159 = scmp.lt.s32.totalorder %s14, 1
      %s160 = scalar_select %p159, %s14, 1
      %s161 = smul.addr %s160, 32
      %s162 = smul.addr %s161, 4
      %s163 = scalar_lea.vmem %s0, %s162
      %p164 = pneg %p35
      %p165 = pneg %p32
      %p166 = scmp.lt.s32.totalorder %s14, 1
      %s167 = scalar_select %p166, %s14, 1
      %s168 = scalar_lea.vmem %s1, %s167
      %p169 = pneg %p61
      %p170 = pneg %p58
      %p171 = scmp.lt.s32.totalorder %s14, 1
      %s172 = scalar_select %p171, %s14, 1
      %s173 = scalar_lea.vmem %s2, %s172
      %p174 = pneg %p87
      %p175 = pneg %p84
      %p176 = pneg %p113
      %p177 = pneg %p110
      %p178 = scmp.lt.s32.totalorder %s14, 1
      %s179 = scalar_select %p178, %s14, 1
      %s180 = smul.addr %s179, 32
      %s181 = smul.addr %s180, 8
      %s182 = scalar_lea.vmem %s3, %s181
      %p183 = scmp.lt.s32.totalorder %s14, 1
      %s184 = scalar_select %p183, %s14, 1
      %s185 = smul.addr %s184, 32
      %s186 = smul.addr %s185, 4
      %s187 = scalar_lea.vmem %s0, %s186
      %p188 = scmp.lt.s32.totalorder %s14, 1
      %s189 = scalar_select %p188, %s14, 1
      %s190 = scalar_lea.vmem %s1, %s189
      %p191 = scmp.lt.s32.totalorder %s14, 1
      %s192 = scalar_select %p191, %s14, 1
      %s193 = scalar_lea.vmem %s2, %s192
      %p194 = scmp.lt.s32.totalorder %s14, 1
      %s195 = scalar_select %p194, %s14, 1
      %s196 = smul.addr %s195, 32
      %s197 = smul.addr %s196, 8
      %s198 = scalar_lea.vmem %s3, %s197
      %v199 = vld [vmem:[%s187] sm:$0xf]
      %v200 = vld [vmem:[%s187 + $0x4] sm:$0xf]
      %v201 = vld [vmem:[%s187 + $0x8] sm:$0xf]
      %v202 = vld [vmem:[%s187 + $0xc] sm:$0xf]
      %v203 = vld [vmem:[%s187 + $0x10] sm:$0xf]
      %v204 = vld [vmem:[%s187 + $0x14] sm:$0xf]
      %v205 = vld [vmem:[%s187 + $0x18] sm:$0xf]
      %v206 = vld [vmem:[%s187 + $0x1c] sm:$0xf]
      %v207 = vld [vmem:[%s187 + $0x20] sm:$0xf]
      %v208 = vld [vmem:[%s187 + $0x24] sm:$0xf]
      %v209 = vld [vmem:[%s187 + $0x28] sm:$0xf]
      %v210 = vld [vmem:[%s187 + $0x2c] sm:$0xf]
      %v211 = vld [vmem:[%s187 + $0x30] sm:$0xf]
      %v212 = vld [vmem:[%s187 + $0x34] sm:$0xf]
      %v213 = vld [vmem:[%s187 + $0x38] sm:$0xf]
      %v214 = vld [vmem:[%s187 + $0x3c] sm:$0xf]
      %v215 = vld [vmem:[%s187 + $0x40] sm:$0xf]
      %v216 = vld [vmem:[%s187 + $0x44] sm:$0xf]
      %v217 = vld [vmem:[%s187 + $0x48] sm:$0xf]
      %v218 = vld [vmem:[%s187 + $0x4c] sm:$0xf]
      %v219 = vld [vmem:[%s187 + $0x50] sm:$0xf]
      %v220 = vld [vmem:[%s187 + $0x54] sm:$0xf]
      %v221 = vld [vmem:[%s187 + $0x58] sm:$0xf]
      %v222 = vld [vmem:[%s187 + $0x5c] sm:$0xf]
      %v223 = vld [vmem:[%s187 + $0x60] sm:$0xf]
      %v224 = vld [vmem:[%s187 + $0x64] sm:$0xf]
      %v225 = vld [vmem:[%s187 + $0x68] sm:$0xf]
      %v226 = vld [vmem:[%s187 + $0x6c] sm:$0xf]
      %v227 = vld [vmem:[%s187 + $0x70] sm:$0xf]
      %v228 = vld [vmem:[%s187 + $0x74] sm:$0xf]
      %v229 = vld [vmem:[%s187 + $0x78] sm:$0xf]
      %v230 = vld [vmem:[%s187 + $0x7c] sm:$0xf]
      %v231 = vunpack.c.l.bf16 %v199
      %v232 = vunpack.c.l.bf16 %v200
      %v233 = vunpack.c.l.bf16 %v201
      %v234 = vunpack.c.l.bf16 %v202
      %v235 = vunpack.c.l.bf16 %v203
      %v236 = vunpack.c.l.bf16 %v204
      %v237 = vunpack.c.l.bf16 %v205
      %v238 = vunpack.c.l.bf16 %v206
      %v239 = vunpack.c.l.bf16 %v207
      %v240 = vunpack.c.l.bf16 %v208
      %v241 = vunpack.c.l.bf16 %v209
      %v242 = vunpack.c.l.bf16 %v210
      %v243 = vunpack.c.l.bf16 %v211
      %v244 = vunpack.c.l.bf16 %v212
      %v245 = vunpack.c.l.bf16 %v213
      %v246 = vunpack.c.l.bf16 %v214
      %v247 = vunpack.c.l.bf16 %v215
      %v248 = vunpack.c.l.bf16 %v216
      %v249 = vunpack.c.l.bf16 %v217
      %v250 = vunpack.c.l.bf16 %v218
      %v251 = vunpack.c.l.bf16 %v219
      %v252 = vunpack.c.l.bf16 %v220
      %v253 = vunpack.c.l.bf16 %v221
      %v254 = vunpack.c.l.bf16 %v222
      %v255 = vunpack.c.l.bf16 %v223
      %v256 = vunpack.c.l.bf16 %v224
      %v257 = vunpack.c.l.bf16 %v225
      %v258 = vunpack.c.l.bf16 %v226
      %v259 = vunpack.c.l.bf16 %v227
      %v260 = vunpack.c.l.bf16 %v228
      %v261 = vunpack.c.l.bf16 %v229
      %v262 = vunpack.c.l.bf16 %v230
      %v263 = vld [vmem:[%s190] sm:$0x1]
      %v265 = vlaneseq
      %v266 = vshrl.u32 %v265, 7
      %v267 = vsub.s32 0, %v266
      %v268 = vrot.slane %v263, %v267
      %v270 = vmul.f32 %v231, %v268
      %v271 = vmul.f32 %v232, %v268
      %v272 = vmul.f32 %v233, %v268
      %v273 = vmul.f32 %v234, %v268
      %v274 = vmul.f32 %v235, %v268
      %v275 = vmul.f32 %v236, %v268
      %v276 = vmul.f32 %v237, %v268
      %v277 = vmul.f32 %v238, %v268
      %v278 = vmul.f32 %v239, %v268
      %v279 = vmul.f32 %v240, %v268
      %v280 = vmul.f32 %v241, %v268
      %v281 = vmul.f32 %v242, %v268
      %v282 = vmul.f32 %v243, %v268
      %v283 = vmul.f32 %v244, %v268
      %v284 = vmul.f32 %v245, %v268
      %v285 = vmul.f32 %v246, %v268
      %v286 = vmul.f32 %v247, %v268
      %v287 = vmul.f32 %v248, %v268
      %v288 = vmul.f32 %v249, %v268
      %v289 = vmul.f32 %v250, %v268
      %v290 = vmul.f32 %v251, %v268
      %v291 = vmul.f32 %v252, %v268
      %v292 = vmul.f32 %v253, %v268
      %v293 = vmul.f32 %v254, %v268
      %v294 = vmul.f32 %v255, %v268
      %v295 = vmul.f32 %v256, %v268
      %v296 = vmul.f32 %v257, %v268
      %v297 = vmul.f32 %v258, %v268
      %v298 = vmul.f32 %v259, %v268
      %v299 = vmul.f32 %v260, %v268
      %v300 = vmul.f32 %v261, %v268
      %v301 = vmul.f32 %v262, %v268
      %v302 = vld [vmem:[%s193] sm:$0x1]
      %v304 = vlaneseq
      %v305 = vshrl.u32 %v304, 7
      %v306 = vsub.s32 0, %v305
      %v307 = vrot.slane %v302, %v306
      %v309 = vadd.f32 %v270, %v307
      %v310 = vadd.f32 %v271, %v307
      %v311 = vadd.f32 %v272, %v307
      %v312 = vadd.f32 %v273, %v307
      %v313 = vadd.f32 %v274, %v307
      %v314 = vadd.f32 %v275, %v307
      %v315 = vadd.f32 %v276, %v307
      %v316 = vadd.f32 %v277, %v307
      %v317 = vadd.f32 %v278, %v307
      %v318 = vadd.f32 %v279, %v307
      %v319 = vadd.f32 %v280, %v307
      %v320 = vadd.f32 %v281, %v307
      %v321 = vadd.f32 %v282, %v307
      %v322 = vadd.f32 %v283, %v307
      %v323 = vadd.f32 %v284, %v307
      %v324 = vadd.f32 %v285, %v307
      %v325 = vadd.f32 %v286, %v307
      %v326 = vadd.f32 %v287, %v307
      %v327 = vadd.f32 %v288, %v307
      %v328 = vadd.f32 %v289, %v307
      %v329 = vadd.f32 %v290, %v307
      %v330 = vadd.f32 %v291, %v307
      %v331 = vadd.f32 %v292, %v307
      %v332 = vadd.f32 %v293, %v307
      %v333 = vadd.f32 %v294, %v307
      %v334 = vadd.f32 %v295, %v307
      %v335 = vadd.f32 %v296, %v307
      %v336 = vadd.f32 %v297, %v307
      %v337 = vadd.f32 %v298, %v307
      %v338 = vadd.f32 %v299, %v307
      %v339 = vadd.f32 %v300, %v307
      %v340 = vadd.f32 %v301, %v307
      %v341 = vmax.f32 %v309, 0.0
      %v342 = vmax.f32 %v310, 0.0
      %v343 = vmax.f32 %v311, 0.0
      %v344 = vmax.f32 %v312, 0.0
      %v345 = vmax.f32 %v313, 0.0
      %v346 = vmax.f32 %v314, 0.0
      %v347 = vmax.f32 %v315, 0.0
      %v348 = vmax.f32 %v316, 0.0
      %v349 = vmax.f32 %v317, 0.0
      %v350 = vmax.f32 %v318, 0.0
      %v351 = vmax.f32 %v319, 0.0
      %v352 = vmax.f32 %v320, 0.0
      %v353 = vmax.f32 %v321, 0.0
      %v354 = vmax.f32 %v322, 0.0
      %v355 = vmax.f32 %v323, 0.0
      %v356 = vmax.f32 %v324, 0.0
      %v357 = vmax.f32 %v325, 0.0
      %v358 = vmax.f32 %v326, 0.0
      %v359 = vmax.f32 %v327, 0.0
      %v360 = vmax.f32 %v328, 0.0
      %v361 = vmax.f32 %v329, 0.0
      %v362 = vmax.f32 %v330, 0.0
      %v363 = vmax.f32 %v331, 0.0
      %v364 = vmax.f32 %v332, 0.0
      %v365 = vmax.f32 %v333, 0.0
      %v366 = vmax.f32 %v334, 0.0
      %v367 = vmax.f32 %v335, 0.0
      %v368 = vmax.f32 %v336, 0.0
      %v369 = vmax.f32 %v337, 0.0
      %v370 = vmax.f32 %v338, 0.0
      %v371 = vmax.f32 %v339, 0.0
      %v372 = vmax.f32 %v340, 0.0
      %vm373 = vcmask 130048
      %374 = vst.msk [vmem:[%s198] sm:$0xff] %vm373, %v341
      %375 = vst.msk [vmem:[%s198 + $0x8] sm:$0xff] %vm373, %v342
      %376 = vst.msk [vmem:[%s198 + $0x10] sm:$0xff] %vm373, %v343
      %377 = vst.msk [vmem:[%s198 + $0x18] sm:$0xff] %vm373, %v344
      %378 = vst.msk [vmem:[%s198 + $0x20] sm:$0xff] %vm373, %v345
      %379 = vst.msk [vmem:[%s198 + $0x28] sm:$0xff] %vm373, %v346
      %380 = vst.msk [vmem:[%s198 + $0x30] sm:$0xff] %vm373, %v347
      %381 = vst.msk [vmem:[%s198 + $0x38] sm:$0xff] %vm373, %v348
      %382 = vst.msk [vmem:[%s198 + $0x40] sm:$0xff] %vm373, %v349
      %383 = vst.msk [vmem:[%s198 + $0x48] sm:$0xff] %vm373, %v350
      %384 = vst.msk [vmem:[%s198 + $0x50] sm:$0xff] %vm373, %v351
      %385 = vst.msk [vmem:[%s198 + $0x58] sm:$0xff] %vm373, %v352
      %386 = vst.msk [vmem:[%s198 + $0x60] sm:$0xff] %vm373, %v353
      %387 = vst.msk [vmem:[%s198 + $0x68] sm:$0xff] %vm373, %v354
      %388 = vst.msk [vmem:[%s198 + $0x70] sm:$0xff] %vm373, %v355
      %389 = vst.msk [vmem:[%s198 + $0x78] sm:$0xff] %vm373, %v356
      %390 = vst.msk [vmem:[%s198 + $0x80] sm:$0xff] %vm373, %v357
      %391 = vst.msk [vmem:[%s198 + $0x88] sm:$0xff] %vm373, %v358
      %392 = vst.msk [vmem:[%s198 + $0x90] sm:$0xff] %vm373, %v359
      %393 = vst.msk [vmem:[%s198 + $0x98] sm:$0xff] %vm373, %v360
      %394 = vst.msk [vmem:[%s198 + $0xa0] sm:$0xff] %vm373, %v361
      %395 = vst.msk [vmem:[%s198 + $0xa8] sm:$0xff] %vm373, %v362
      %396 = vst.msk [vmem:[%s198 + $0xb0] sm:$0xff] %vm373, %v363
      %397 = vst.msk [vmem:[%s198 + $0xb8] sm:$0xff] %vm373, %v364
      %398 = vst.msk [vmem:[%s198 + $0xc0] sm:$0xff] %vm373, %v365
      %399 = vst.msk [vmem:[%s198 + $0xc8] sm:$0xff] %vm373, %v366
      %400 = vst.msk [vmem:[%s198 + $0xd0] sm:$0xff] %vm373, %v367
      %401 = vst.msk [vmem:[%s198 + $0xd8] sm:$0xff] %vm373, %v368
      %402 = vst.msk [vmem:[%s198 + $0xe0] sm:$0xff] %vm373, %v369
      %403 = vst.msk [vmem:[%s198 + $0xe8] sm:$0xff] %vm373, %v370
      %404 = vst.msk [vmem:[%s198 + $0xf0] sm:$0xff] %vm373, %v371
      %405 = vst.msk [vmem:[%s198 + $0xf8] sm:$0xff] %vm373, %v372
      %p406 = scmp.lt.s32.totalorder %s14, 1
      %s407 = scalar_select %p406, %s14, 1
      %s408 = smul.addr %s407, 32
      %s409 = smul.addr %s408, 8
      %s410 = scalar_lea.vmem %s3, %s409
      // Predicated region
      $region33: #{vae_up_forward.9} parent=31 // pred_check
        %p411 = pneg %p110
      $region34: #{vae_up_forward.9} parent=31 // pred_check_branch
        %413 = sbr.rel (%p411) target = $region36
      $region35: #{vae_up_forward.9} parent=31 // pred_region
        _
      $region36: #{vae_up_forward.9} parent=31 // pred_fallthru
        _
    $region32: #{vae_up_forward.9} parent=5 // pred_fallthru
      _
    %p414 = scmp.le.s32.totalorder 2, %s9
    // Predicated region
    $region37: #{vae_up_forward.9} parent=5 // pred_check
      %p415 = pneg %p414
    $region38: #{vae_up_forward.9} parent=5 // pred_check_branch
      %417 = sbr.rel (%p415) target = $region40
    $region39: #{vae_up_forward.9} parent=5 // pred_region
      %s418 = ssub.s32 %s9, 2
      // Predicated region
      $region41: #{vae_up_forward.9} parent=39 // pred_check
        %p419 = pneg %p116
      $region42: #{vae_up_forward.9} parent=39 // pred_check_branch
        %421 = sbr.rel (%p419) target = $region44
      $region43: #{vae_up_forward.9} parent=39 // pred_region
        %p422 = scmp.lt.s32.totalorder %s15, 1
        %s423 = scalar_select %p422, %s15, 1
        %s424 = smul.addr %s423, 32
        %s425 = smul.addr %s424, 8
        %s426 = scalar_lea.vmem %s3, %s425
      $region44: #{vae_up_forward.9} parent=39 // pred_fallthru
        _
    $region40: #{vae_up_forward.9} parent=5 // pred_fallthru
      _
  $region6: #{vae_up_forward.9} parent=0 // loop_footer
    %s13 = sadd.s32 1, %s9
  $region7: #{vae_up_forward.9} parent=0 // loop_footer_branch
    %8 = sbr.rel target = $region3
  $region8: #{vae_up_forward.9} parent=0 // loop_exit
    _

// kernel: vae_up_forward.6
$region0: #{vae_up_forward.6}
  #allocation0 [shape = 'u32[]', space=smem, size = 0x4, offset = 0x4, fixed_abs, tag = 'smem constant byte address 0x4 - core index']
  #allocation1 [shape = 'u32[144,128]{1,0:T(1,128)}', space=vmem, size = 0x12000, scoped, tag = 'internal scratch']
  %s0 = inlined_call_operand.vmem [shape: bf16[2,16,16,16], index: 0, kind: input, shape index: {}]
  %s1 = inlined_call_operand.vmem [shape: bf16[3,48,16], index: 1, kind: input, shape index: {}]
  %s2 = inlined_call_operand.vmem [shape: bf16[2,16,16,16], index: 2, kind: output, shape index: {0}]
  %s3 = inlined_call_operand.vmem [shape: f32[2,2,16], index: 3, kind: output, shape index: {1}]
  %4 = xla_tuple %s2, %s3
  %s5 = sld [smem:[#allocation0]]
  $region49: #{vae_up_forward.6} parent=0
    _
  %s7 = ssub.s32 1, %s5
  %s8 = scalar_select 0, %s7, %s5
  loop: start=0, step=1, limit=4
  $region2: #{vae_up_forward.6} parent=0 // loop_pre_header
    _
  $region3: #{vae_up_forward.6} parent=0 // loop_header
    %s10 = sphi 0, %s14
    %p11 = scmp.ge.s32.totalorder %s10, 4
    %s20 = sphi 0, %s22
    %s23 = sphi 0, %s20
    %s24 = sphi 0, %s23
    %s40 = sphi 0, %s24
    %s44 = sphi 0, %s44
    %s46 = sphi 0, %s44
    %s47 = sphi 0, %s46
    %s61 = sphi 0, %s47
    %s67 = sphi 0, %s69
    %s70 = sphi 0, %s67
    %s71 = sphi 0, %s70
    %s87 = sphi 0, %s71
    %s93 = sphi 0, %s95
    %s96 = sphi 0, %s93
    %s97 = sphi 0, %s96
    %s113 = sphi 0, %s97
  $region4: #{vae_up_forward.6} parent=0 // loop_header_branch
    %13 = sbr.rel (%p11) target = $region8
  $region5: #{vae_up_forward.6} parent=0 // loop_body
    %s15 = ssub.s32 %s10, 1
    %s16 = ssub.s32 %s10, 2
    %s17 = sadd.s32 %s10, 1
    %s18 = ssub.s32 %s10, %s17
    %p19 = scmp.eq.s32.totalorder %s18, 0
    %s21 = sadd.s32 %s20, 1
    %s22 = scalar_select %p19, %s20, %s21
    %p25 = pneg %p19
    %p26 = scmp.eq.s32.totalorder %s10, 1
    %p27 = por %p25, %p26
    %p28 = scmp.ne.s32.totalorder %s20, %s23
    %p29 = scmp.eq.s32.totalorder %s10, 0
    %p30 = por %p28, %p29
    %p31 = scmp.ne.s32.totalorder %s20, %s23
    %p32 = scmp.eq.s32.totalorder %s15, 1
    %p33 = por %p31, %p32
    %p34 = scmp.ne.s32.totalorder %s23, %s24
    %p35 = scmp.eq.s32.totalorder %s15, 0
    %p36 = por %p34, %p35
    %p37 = scmp.ne.s32.totalorder %s23, %s24
    %p38 = scmp.eq.s32.totalorder %s16, 1
    %p39 = por %p37, %p38
    %p41 = scmp.ne.s32.totalorder %s24, %s40
    %p42 = scmp.eq.s32.totalorder %s16, 0
    %p43 = por %p41, %p42
    %s45 = sadd.s32 %s44, 1
    %p48 = scmp.eq.s32.totalorder %s10, 1
    %p49 = scmp.ne.s32.totalorder %s44, %s46
    %p50 = scmp.eq.s32.totalorder %s10, 0
    %p51 = por %p49, %p50
    %p52 = scmp.ne.s32.totalorder %s44, %s46
    %p53 = scmp.eq.s32.totalorder %s15, 1
    %p54 = por %p52, %p53
    %p55 = scmp.ne.s32.totalorder %s46, %s47
    %p56 = scmp.eq.s32.totalorder %s15, 0
    %p57 = por %p55, %p56
    %p58 = scmp.ne.s32.totalorder %s46, %s47
    %p59 = scmp.eq.s32.totalorder %s16, 1
    %p60 = por %p58, %p59
    %p62 = scmp.ne.s32.totalorder %s47, %s61
    %p63 = scmp.eq.s32.totalorder %s16, 0
    %p64 = por %p62, %p63
    %s65 = ssub.s32 %s10, %s17
    %p66 = scmp.eq.s32.totalorder %s65, 0
    %s68 = sadd.s32 %s67, 1
    %s69 = scalar_select %p66, %s67, %s68
    %p72 = pneg %p66
    %p73 = scmp.eq.s32.totalorder %s10, 1
    %p74 = por %p72, %p73
    %p75 = scmp.ne.s32.totalorder %s67, %s70
    %p76 = scmp.eq.s32.totalorder %s10, 0
    %p77 = por %p75, %p76
    %p78 = scmp.ne.s32.totalorder %s67, %s70
    %p79 = scmp.eq.s32.totalorder %s15, 1
    %p80 = por %p78, %p79
    %p81 = scmp.ne.s32.totalorder %s70, %s71
    %p82 = scmp.eq.s32.totalorder %s15, 0
    %p83 = por %p81, %p82
    %p84 = scmp.ne.s32.totalorder %s70, %s71
    %p85 = scmp.eq.s32.totalorder %s16, 1
    %p86 = por %p84, %p85
    %p88 = scmp.ne.s32.totalorder %s71, %s87
    %p89 = scmp.eq.s32.totalorder %s16, 0
    %p90 = por %p88, %p89
    %s91 = ssub.s32 %s10, %s17
    %p92 = scmp.eq.s32.totalorder %s91, 0
    %s94 = sadd.s32 %s93, 1
    %s95 = scalar_select %p92, %s93, %s94
    %p98 = pneg %p92
    %p99 = scmp.eq.s32.totalorder %s10, 1
    %p100 = por %p98, %p99
    %p101 = scmp.ne.s32.totalorder %s93, %s96
    %p102 = scmp.eq.s32.totalorder %s10, 0
    %p103 = por %p101, %p102
    %p104 = scmp.ne.s32.totalorder %s93, %s96
    %p105 = scmp.eq.s32.totalorder %s15, 1
    %p106 = por %p104, %p105
    %p107 = scmp.ne.s32.totalorder %s96, %s97
    %p108 = scmp.eq.s32.totalorder %s15, 0
    %p109 = por %p107, %p108
    %p110 = scmp.ne.s32.totalorder %s96, %s97
    %p111 = scmp.eq.s32.totalorder %s16, 1
    %p112 = por %p110, %p111
    %p114 = scmp.ne.s32.totalorder %s97, %s113
    %p115 = scmp.eq.s32.totalorder %s16, 0
    %p116 = por %p114, %p115
    %p117 = scmp.le.s32.totalorder 1, %s10
    %p118 = scmp.lt.s32.totalorder %s10, 3
    %p119 = pnand %p117, %p118
    %p120 = pneg %p119
    // Predicated region
    $region9: #{vae_up_forward.6} parent=5 // pred_check
      _
    $region10: #{vae_up_forward.6} parent=5 // pred_check_branch
      %122 = sbr.rel (%p119) target = $region12
    $region11: #{vae_up_forward.6} parent=5 // pred_region
      %s123 = ssub.s32 %s10, 1
      // Predicated region
      $region13: #{vae_up_forward.6} parent=11 // pred_check
        %p124 = pneg %p57
      $region14: #{vae_up_forward.6} parent=11 // pred_check_branch
        %126 = sbr.rel (%p124) target = $region16
      $region15: #{vae_up_forward.6} parent=11 // pred_region
        _
      $region16: #{vae_up_forward.6} parent=11 // pred_fallthru
        _
    $region12: #{vae_up_forward.6} parent=5 // pred_fallthru
      _
    %p127 = scmp.lt.s32.totalorder %s10, 2
    // Predicated region
    $region17: #{vae_up_forward.6} parent=5 // pred_check
      %p128 = pneg %p127
    $region18: #{vae_up_forward.6} parent=5 // pred_check_branch
      %130 = sbr.rel (%p128) target = $region20
    $region19: #{vae_up_forward.6} parent=5 // pred_region
      // Predicated region
      $region21: #{vae_up_forward.6} parent=19 // pred_check
        %p131 = pneg %p30
      $region22: #{vae_up_forward.6} parent=19 // pred_check_branch
        %133 = sbr.rel (%p131) target = $region24
      $region23: #{vae_up_forward.6} parent=19 // pred_region
        %p134 = scmp.lt.s32.totalorder %s10, 1
        %s135 = scalar_select %p134, %s10, 1
        %s136 = smul.addr %s135, 32
        %s137 = smul.addr %s136, 4
        %s138 = scalar_lea.vmem %s0, %s137
      $region24: #{vae_up_forward.6} parent=19 // pred_fallthru
        _
    $region20: #{vae_up_forward.6} parent=5 // pred_fallthru
      _
    %p139 = scmp.le.s32.totalorder 1, %s10
    %p140 = scmp.lt.s32.totalorder %s10, 3
    %p141 = pnand %p139, %p140
    %p142 = pneg %p141
    // Predicated region
    $region25: #{vae_up_forward.6} parent=5 // pred_check
      _
    $region26: #{vae_up_forward.6} parent=5 // pred_check_branch
      %144 = sbr.rel (%p141) target = $region28
    $region27: #{vae_up_forward.6} parent=5 // pred_region
      %s145 = ssub.s32 %s10, 1
      %p146 = scmp.lt.s32.totalorder %s15, 1
      %s147 = scalar_select %p146, %s15, 1
      %s148 = smul.addr %s147, 32
      %s149 = smul.addr %s148, 4
      %s150 = scalar_lea.vmem %s0, %s149
      %p151 = pneg %p36
      %p152 = pneg %p33
      %p153 = pneg %p57
      %p154 = pneg %p54
      %p155 = pneg %p83
      %p156 = pneg %p80
      %p157 = scmp.lt.s32.totalorder %s15, 1
      %s158 = scalar_select %p157, %s15, 1
      %s159 = smul.addr %s158, 32
      %s160 = smul.addr %s159, 4
      %s161 = scalar_lea.vmem %s2, %s160
      %p162 = pneg %p109
      %p163 = pneg %p106
      %p164 = scmp.lt.s32.totalorder %s15, 1
      %s165 = scalar_select %p164, %s15, 1
      %s166 = smul.addr %s165, 2
      %s167 = scalar_lea.vmem %s3, %s166
      %p168 = scmp.lt.s32.totalorder %s15, 1
      %s169 = scalar_select %p168, %s15, 1
      %s170 = smul.addr %s169, 32
      %s171 = smul.addr %s170, 4
      %s172 = scalar_lea.vmem %s0, %s171
      %p173 = scmp.lt.s32.totalorder %s15, 1
      %s174 = scalar_select %p173, %s15, 1
      %s175 = smul.addr %s174, 32
      %s176 = smul.addr %s175, 4
      %s177 = scalar_lea.vmem %s2, %s176
      %p178 = scmp.lt.s32.totalorder %s15, 1
      %s179 = scalar_select %p178, %s15, 1
      %s180 = smul.addr %s179, 2
      %s181 = scalar_lea.vmem %s3, %s180
      %v183 = vld [vmem:[%s172] sm:$0xf]
      %v184 = vld [vmem:[%s172 + $0x4] sm:$0xf]
      %v185 = vld [vmem:[%s172 + $0x8] sm:$0xf]
      %v186 = vld [vmem:[%s172 + $0xc] sm:$0xf]
      %v187 = vld [vmem:[%s172 + $0x10] sm:$0xf]
      %v188 = vld [vmem:[%s172 + $0x14] sm:$0xf]
      %v189 = vld [vmem:[%s172 + $0x18] sm:$0xf]
      %v190 = vld [vmem:[%s172 + $0x1c] sm:$0xf]
      %v191 = vld [vmem:[%s172 + $0x20] sm:$0xf]
      %v192 = vld [vmem:[%s172 + $0x24] sm:$0xf]
      %v193 = vld [vmem:[%s172 + $0x28] sm:$0xf]
      %v194 = vld [vmem:[%s172 + $0x2c] sm:$0xf]
      %v195 = vld [vmem:[%s172 + $0x30] sm:$0xf]
      %v196 = vld [vmem:[%s172 + $0x34] sm:$0xf]
      %v197 = vld [vmem:[%s172 + $0x38] sm:$0xf]
      %v198 = vld [vmem:[%s172 + $0x3c] sm:$0xf]
      %v199 = vld [vmem:[%s172 + $0x40] sm:$0xf]
      %v200 = vld [vmem:[%s172 + $0x44] sm:$0xf]
      %v201 = vld [vmem:[%s172 + $0x48] sm:$0xf]
      %v202 = vld [vmem:[%s172 + $0x4c] sm:$0xf]
      %v203 = vld [vmem:[%s172 + $0x50] sm:$0xf]
      %v204 = vld [vmem:[%s172 + $0x54] sm:$0xf]
      %v205 = vld [vmem:[%s172 + $0x58] sm:$0xf]
      %v206 = vld [vmem:[%s172 + $0x5c] sm:$0xf]
      %v207 = vld [vmem:[%s172 + $0x60] sm:$0xf]
      %v208 = vld [vmem:[%s172 + $0x64] sm:$0xf]
      %v209 = vld [vmem:[%s172 + $0x68] sm:$0xf]
      %v210 = vld [vmem:[%s172 + $0x6c] sm:$0xf]
      %v211 = vld [vmem:[%s172 + $0x70] sm:$0xf]
      %v212 = vld [vmem:[%s172 + $0x74] sm:$0xf]
      %v213 = vld [vmem:[%s172 + $0x78] sm:$0xf]
      %v214 = vld [vmem:[%s172 + $0x7c] sm:$0xf]
      %v215 = vunpack.c.l.bf16 %v183
      %v216 = vunpack.c.l.bf16 %v184
      %v217 = vunpack.c.l.bf16 %v185
      %v218 = vunpack.c.l.bf16 %v186
      %v219 = vunpack.c.l.bf16 %v187
      %v220 = vunpack.c.l.bf16 %v188
      %v221 = vunpack.c.l.bf16 %v189
      %v222 = vunpack.c.l.bf16 %v190
      %v223 = vunpack.c.l.bf16 %v191
      %v224 = vunpack.c.l.bf16 %v192
      %v225 = vunpack.c.l.bf16 %v193
      %v226 = vunpack.c.l.bf16 %v194
      %v227 = vunpack.c.l.bf16 %v195
      %v228 = vunpack.c.l.bf16 %v196
      %v229 = vunpack.c.l.bf16 %v197
      %v230 = vunpack.c.l.bf16 %v198
      %v231 = vunpack.c.l.bf16 %v199
      %v232 = vunpack.c.l.bf16 %v200
      %v233 = vunpack.c.l.bf16 %v201
      %v234 = vunpack.c.l.bf16 %v202
      %v235 = vunpack.c.l.bf16 %v203
      %v236 = vunpack.c.l.bf16 %v204
      %v237 = vunpack.c.l.bf16 %v205
      %v238 = vunpack.c.l.bf16 %v206
      %v239 = vunpack.c.l.bf16 %v207
      %v240 = vunpack.c.l.bf16 %v208
      %v241 = vunpack.c.l.bf16 %v209
      %v242 = vunpack.c.l.bf16 %v210
      %v243 = vunpack.c.l.bf16 %v211
      %v244 = vunpack.c.l.bf16 %v212
      %v245 = vunpack.c.l.bf16 %v213
      %v246 = vunpack.c.l.bf16 %v214
      %vm279 = vcmask 1040384
      %v280 = vrot.slane %v215, 7
      %v281 = vrot.slane %v216, 7
      %v282 = vsel %vm279, %v280, %v281
      %v283 = vrot.slane %v217, 7
      %v284 = vrot.slane %v218, 7
      %v285 = vsel %vm279, %v283, %v284
      %v286 = vrot.slane %v219, 7
      %v287 = vrot.slane %v220, 7
      %v288 = vsel %vm279, %v286, %v287
      %v289 = vrot.slane %v221, 7
      %v290 = vrot.slane %v222, 7
      %v291 = vsel %vm279, %v289, %v290
      %v292 = vrot.slane %v223, 7
      %v293 = vrot.slane %v224, 7
      %v294 = vsel %vm279, %v292, %v293
      %v295 = vrot.slane %v225, 7
      %v296 = vrot.slane %v226, 7
      %v297 = vsel %vm279, %v295, %v296
      %v298 = vrot.slane %v227, 7
      %v299 = vrot.slane %v228, 7
      %v300 = vsel %vm279, %v298, %v299
      %v301 = vrot.slane %v229, 7
      %v302 = vrot.slane %v230, 7
      %v303 = vsel %vm279, %v301, %v302
      %v304 = vrot.slane %v231, 7
      %v305 = vrot.slane %v232, 7
      %v306 = vsel %vm279, %v304, %v305
      %v307 = vrot.slane %v233, 7
      %v308 = vrot.slane %v234, 7
      %v309 = vsel %vm279, %v307, %v308
      %v310 = vrot.slane %v235, 7
      %v311 = vrot.slane %v236, 7
      %v312 = vsel %vm279, %v310, %v311
      %v313 = vrot.slane %v237, 7
      %v314 = vrot.slane %v238, 7
      %v315 = vsel %vm279, %v313, %v314
      %v316 = vrot.slane %v239, 7
      %v317 = vrot.slane %v240, 7
      %v318 = vsel %vm279, %v316, %v317
      %v319 = vrot.slane %v241, 7
      %v320 = vrot.slane %v242, 7
      %v321 = vsel %vm279, %v319, %v320
      %v322 = vrot.slane %v243, 7
      %v323 = vrot.slane %v244, 7
      %v324 = vsel %vm279, %v322, %v323
      %v325 = vrot.slane %v245, 7
      %v326 = vrot.slane %v246, 7
      %v327 = vsel %vm279, %v325, %v326
      %v360 = vsel %vm279, 0.0, %v280
      %v361 = vsel %vm279, 0.0, %v283
      %v362 = vsel %vm279, 0.0, %v286
      %v363 = vsel %vm279, 0.0, %v289
      %v364 = vsel %vm279, 0.0, %v292
      %v365 = vsel %vm279, 0.0, %v295
      %v366 = vsel %vm279, 0.0, %v298
      %v367 = vsel %vm279, 0.0, %v301
      %v368 = vsel %vm279, 0.0, %v304
      %v369 = vsel %vm279, 0.0, %v307
      %v370 = vsel %vm279, 0.0, %v310
      %v371 = vsel %vm279, 0.0, %v313
      %v372 = vsel %vm279, 0.0, %v316
      %v373 = vsel %vm279, 0.0, %v319
      %v374 = vsel %vm279, 0.0, %v322
      %v375 = vsel %vm279, 0.0, %v325
      %vm376 = vcmask 1046528
      %v377 = vrot.slane %v215, 1
      %v378 = vrot.slane %v216, 1
      %v379 = vsel %vm376, %v377, %v378
      %v380 = vrot.slane %v217, 1
      %v381 = vrot.slane %v218, 1
      %v382 = vsel %vm376, %v380, %v381
      %v383 = vrot.slane %v219, 1
      %v384 = vrot.slane %v220, 1
      %v385 = vsel %vm376, %v383, %v384
      %v386 = vrot.slane %v221, 1
      %v387 = vrot.slane %v222, 1
      %v388 = vsel %vm376, %v386, %v387
      %v389 = vrot.slane %v223, 1
      %v390 = vrot.slane %v224, 1
      %v391 = vsel %vm376, %v389, %v390
      %v392 = vrot.slane %v225, 1
      %v393 = vrot.slane %v226, 1
      %v394 = vsel %vm376, %v392, %v393
      %v395 = vrot.slane %v227, 1
      %v396 = vrot.slane %v228, 1
      %v397 = vsel %vm376, %v395, %v396
      %v398 = vrot.slane %v229, 1
      %v399 = vrot.slane %v230, 1
      %v400 = vsel %vm376, %v398, %v399
      %v401 = vrot.slane %v231, 1
      %v402 = vrot.slane %v232, 1
      %v403 = vsel %vm376, %v401, %v402
      %v404 = vrot.slane %v233, 1
      %v405 = vrot.slane %v234, 1
      %v406 = vsel %vm376, %v404, %v405
      %v407 = vrot.slane %v235, 1
      %v408 = vrot.slane %v236, 1
      %v409 = vsel %vm376, %v407, %v408
      %v410 = vrot.slane %v237, 1
      %v411 = vrot.slane %v238, 1
      %v412 = vsel %vm376, %v410, %v411
      %v413 = vrot.slane %v239, 1
      %v414 = vrot.slane %v240, 1
      %v415 = vsel %vm376, %v413, %v414
      %v416 = vrot.slane %v241, 1
      %v417 = vrot.slane %v242, 1
      %v418 = vsel %vm376, %v416, %v417
      %v419 = vrot.slane %v243, 1
      %v420 = vrot.slane %v244, 1
      %v421 = vsel %vm376, %v419, %v420
      %v422 = vrot.slane %v245, 1
      %v423 = vrot.slane %v246, 1
      %v424 = vsel %vm376, %v422, %v423
      %v441 = vsel %vm376, %v378, 0.0
      %v442 = vsel %vm376, %v381, 0.0
      %v443 = vsel %vm376, %v384, 0.0
      %v444 = vsel %vm376, %v387, 0.0
      %v445 = vsel %vm376, %v390, 0.0
      %v446 = vsel %vm376, %v393, 0.0
      %v447 = vsel %vm376, %v396, 0.0
      %v448 = vsel %vm376, %v399, 0.0
      %v449 = vsel %vm376, %v402, 0.0
      %v450 = vsel %vm376, %v405, 0.0
      %v451 = vsel %vm376, %v408, 0.0
      %v452 = vsel %vm376, %v411, 0.0
      %v453 = vsel %vm376, %v414, 0.0
      %v454 = vsel %vm376, %v417, 0.0
      %v455 = vsel %vm376, %v420, 0.0
      %v456 = vsel %vm376, %v423, 0.0
      %457 = vrot.lane.b32.xlu0 %v215, 16
      %v458 = vpop.permute.xlu0 %457
      %459 = vrot.lane.b32.xlu0 %v216, 16
      %v460 = vpop.permute.xlu0 %459
      %461 = vrot.lane.b32.xlu0 %v217, 16
      %v462 = vpop.permute.xlu0 %461
      %463 = vrot.lane.b32.xlu0 %v218, 16
      %v464 = vpop.permute.xlu0 %463
      %465 = vrot.lane.b32.xlu0 %v219, 16
      %v466 = vpop.permute.xlu0 %465
      %467 = vrot.lane.b32.xlu0 %v220, 16
      %v468 = vpop.permute.xlu0 %467
      %469 = vrot.lane.b32.xlu0 %v221, 16
      %v470 = vpop.permute.xlu0 %469
      %471 = vrot.lane.b32.xlu0 %v222, 16
      %v472 = vpop.permute.xlu0 %471
      %473 = vrot.lane.b32.xlu0 %v223, 16
      %v474 = vpop.permute.xlu0 %473
      %475 = vrot.lane.b32.xlu0 %v224, 16
      %v476 = vpop.permute.xlu0 %475
      %477 = vrot.lane.b32.xlu0 %v225, 16
      %v478 = vpop.permute.xlu0 %477
      %479 = vrot.lane.b32.xlu0 %v226, 16
      %v480 = vpop.permute.xlu0 %479
      %481 = vrot.lane.b32.xlu0 %v227, 16
      %v482 = vpop.permute.xlu0 %481
      %483 = vrot.lane.b32.xlu0 %v228, 16
      %v484 = vpop.permute.xlu0 %483
      %485 = vrot.lane.b32.xlu0 %v229, 16
      %v486 = vpop.permute.xlu0 %485
      %487 = vrot.lane.b32.xlu0 %v230, 16
      %v488 = vpop.permute.xlu0 %487
      %489 = vrot.lane.b32.xlu0 %v231, 16
      %v490 = vpop.permute.xlu0 %489
      %491 = vrot.lane.b32.xlu0 %v232, 16
      %v492 = vpop.permute.xlu0 %491
      %493 = vrot.lane.b32.xlu0 %v233, 16
      %v494 = vpop.permute.xlu0 %493
      %495 = vrot.lane.b32.xlu0 %v234, 16
      %v496 = vpop.permute.xlu0 %495
      %497 = vrot.lane.b32.xlu0 %v235, 16
      %v498 = vpop.permute.xlu0 %497
      %499 = vrot.lane.b32.xlu0 %v236, 16
      %v500 = vpop.permute.xlu0 %499
      %501 = vrot.lane.b32.xlu0 %v237, 16
      %v502 = vpop.permute.xlu0 %501
      %503 = vrot.lane.b32.xlu0 %v238, 16
      %v504 = vpop.permute.xlu0 %503
      %505 = vrot.lane.b32.xlu0 %v239, 16
      %v506 = vpop.permute.xlu0 %505
      %507 = vrot.lane.b32.xlu0 %v240, 16
      %v508 = vpop.permute.xlu0 %507
      %509 = vrot.lane.b32.xlu0 %v241, 16
      %v510 = vpop.permute.xlu0 %509
      %511 = vrot.lane.b32.xlu0 %v242, 16
      %v512 = vpop.permute.xlu0 %511
      %513 = vrot.lane.b32.xlu0 %v243, 16
      %v514 = vpop.permute.xlu0 %513
      %515 = vrot.lane.b32.xlu0 %v244, 16
      %v516 = vpop.permute.xlu0 %515
      %517 = vrot.lane.b32.xlu0 %v245, 16
      %v518 = vpop.permute.xlu0 %517
      %519 = vrot.lane.b32.xlu0 %v246, 16
      %v520 = vpop.permute.xlu0 %519
      %569 = vrot.lane.b32.xlu0 %v379, 32
      %v570 = vpop.permute.xlu0 %569
      %571 = vrot.lane.b32.xlu0 %v441, 32
      %v572 = vpop.permute.xlu0 %571
      %573 = vrot.lane.b32.xlu0 %v382, 32
      %v574 = vpop.permute.xlu0 %573
      %575 = vrot.lane.b32.xlu0 %v442, 32
      %v576 = vpop.permute.xlu0 %575
      %577 = vrot.lane.b32.xlu0 %v385, 32
      %v578 = vpop.permute.xlu0 %577
      %579 = vrot.lane.b32.xlu0 %v443, 32
      %v580 = vpop.permute.xlu0 %579
      %581 = vrot.lane.b32.xlu0 %v388, 32
      %v582 = vpop.permute.xlu0 %581
      %583 = vrot.lane.b32.xlu0 %v444, 32
      %v584 = vpop.permute.xlu0 %583
      %585 = vrot.lane.b32.xlu0 %v391, 32
      %v586 = vpop.permute.xlu0 %585
      %587 = vrot.lane.b32.xlu0 %v445, 32
      %v588 = vpop.permute.xlu0 %587
      %589 = vrot.lane.b32.xlu0 %v394, 32
      %v590 = vpop.permute.xlu0 %589
      %591 = vrot.lane.b32.xlu0 %v446, 32
      %v592 = vpop.permute.xlu0 %591
      %593 = vrot.lane.b32.xlu0 %v397, 32
      %v594 = vpop.permute.xlu0 %593
      %595 = vrot.lane.b32.xlu0 %v447, 32
      %v596 = vpop.permute.xlu0 %595
      %597 = vrot.lane.b32.xlu0 %v400, 32
      %v598 = vpop.permute.xlu0 %597
      %599 = vrot.lane.b32.xlu0 %v448, 32
      %v600 = vpop.permute.xlu0 %599
      %601 = vrot.lane.b32.xlu0 %v403, 32
      %v602 = vpop.permute.xlu0 %601
      %603 = vrot.lane.b32.xlu0 %v449, 32
      %v604 = vpop.permute.xlu0 %603
      %605 = vrot.lane.b32.xlu0 %v406, 32
      %v606 = vpop.permute.xlu0 %605
      %607 = vrot.lane.b32.xlu0 %v450, 32
      %v608 = vpop.permute.xlu0 %607
      %609 = vrot.lane.b32.xlu0 %v409, 32
      %v610 = vpop.permute.xlu0 %609
      %611 = vrot.lane.b32.xlu0 %v451, 32
      %v612 = vpop.permute.xlu0 %611
      %613 = vrot.lane.b32.xlu0 %v412, 32
      %v614 = vpop.permute.xlu0 %613
      %615 = vrot.lane.b32.xlu0 %v452, 32
      %v616 = vpop.permute.xlu0 %615
      %617 = vrot.lane.b32.xlu0 %v415, 32
      %v618 = vpop.permute.xlu0 %617
      %619 = vrot.lane.b32.xlu0 %v453, 32
      %v620 = vpop.permute.xlu0 %619
      %621 = vrot.lane.b32.xlu0 %v418, 32
      %v622 = vpop.permute.xlu0 %621
      %623 = vrot.lane.b32.xlu0 %v454, 32
      %v624 = vpop.permute.xlu0 %623
      %625 = vrot.lane.b32.xlu0 %v421, 32
      %v626 = vpop.permute.xlu0 %625
      %627 = vrot.lane.b32.xlu0 %v455, 32
      %v628 = vpop.permute.xlu0 %627
      %629 = vrot.lane.b32.xlu0 %v424, 32
      %v630 = vpop.permute.xlu0 %629
      %631 = vrot.lane.b32.xlu0 %v456, 32
      %v632 = vpop.permute.xlu0 %631
      %vm665 = vcmask 130048
      %v666 = vsel %vm665, %v360, %v458
      %v667 = vsel %vm665, %v282, %v460
      %v668 = vsel %vm665, %v361, %v462
      %v669 = vsel %vm665, %v285, %v464
      %v670 = vsel %vm665, %v362, %v466
      %v671 = vsel %vm665, %v288, %v468
      %v672 = vsel %vm665, %v363, %v470
      %v673 = vsel %vm665, %v291, %v472
      %v674 = vsel %vm665, %v364, %v474
      %v675 = vsel %vm665, %v294, %v476
      %v676 = vsel %vm665, %v365, %v478
      %v677 = vsel %vm665, %v297, %v480
      %v678 = vsel %vm665, %v366, %v482
      %v679 = vsel %vm665, %v300, %v484
      %v680 = vsel %vm665, %v367, %v486
      %v681 = vsel %vm665, %v303, %v488
      %v682 = vsel %vm665, %v368, %v490
      %v683 = vsel %vm665, %v306, %v492
      %v684 = vsel %vm665, %v369, %v494
      %v685 = vsel %vm665, %v309, %v496
      %v686 = vsel %vm665, %v370, %v498
      %v687 = vsel %vm665, %v312, %v500
      %v688 = vsel %vm665, %v371, %v502
      %v689 = vsel %vm665, %v315, %v504
      %v690 = vsel %vm665, %v372, %v506
      %v691 = vsel %vm665, %v318, %v508
      %v692 = vsel %vm665, %v373, %v510
      %v693 = vsel %vm665, %v321, %v512
      %v694 = vsel %vm665, %v374, %v514
      %v695 = vsel %vm665, %v324, %v516
      %v696 = vsel %vm665, %v375, %v518
      %v697 = vsel %vm665, %v327, %v520
      %vm698 = vcmask 261120
      %v699 = vsel %vm698, %v666, %v570
      %v700 = vsel %vm698, %v667, %v572
      %v701 = vsel %vm698, %v668, %v574
      %v702 = vsel %vm698, %v669, %v576
      %v703 = vsel %vm698, %v670, %v578
      %v704 = vsel %vm698, %v671, %v580
      %v705 = vsel %vm698, %v672, %v582
      %v706 = vsel %vm698, %v673, %v584
      %v707 = vsel %vm698, %v674, %v586
      %v708 = vsel %vm698, %v675, %v588
      %v709 = vsel %vm698, %v676, %v590
      %v710 = vsel %vm698, %v677, %v592
      %v711 = vsel %vm698, %v678, %v594
      %v712 = vsel %vm698, %v679, %v596
      %v713 = vsel %vm698, %v680, %v598
      %v714 = vsel %vm698, %v681, %v600
      %v715 = vsel %vm698, %v682, %v602
      %v716 = vsel %vm698, %v683, %v604
      %v717 = vsel %vm698, %v684, %v606
      %v718 = vsel %vm698, %v685, %v608
      %v719 = vsel %vm698, %v686, %v610
      %v720 = vsel %vm698, %v687, %v612
      %v721 = vsel %vm698, %v688, %v614
      %v722 = vsel %vm698, %v689, %v616
      %v723 = vsel %vm698, %v690, %v618
      %v724 = vsel %vm698, %v691, %v620
      %v725 = vsel %vm698, %v692, %v622
      %v726 = vsel %vm698, %v693, %v624
      %v727 = vsel %vm698, %v694, %v626
      %v728 = vsel %vm698, %v695, %v628
      %v729 = vsel %vm698, %v696, %v630
      %v730 = vsel %vm698, %v697, %v632
      %v731 = vpack.c.bf16 %v700, %v699
      %v732 = vpack.c.bf16 %v702, %v701
      %v733 = vpack.c.bf16 %v704, %v703
      %v734 = vpack.c.bf16 %v706, %v705
      %v735 = vpack.c.bf16 %v708, %v707
      %v736 = vpack.c.bf16 %v710, %v709
      %v737 = vpack.c.bf16 %v712, %v711
      %v738 = vpack.c.bf16 %v714, %v713
      %v739 = vpack.c.bf16 %v716, %v715
      %v740 = vpack.c.bf16 %v718, %v717
      %v741 = vpack.c.bf16 %v720, %v719
      %v742 = vpack.c.bf16 %v722, %v721
      %v743 = vpack.c.bf16 %v724, %v723
      %v744 = vpack.c.bf16 %v726, %v725
      %v745 = vpack.c.bf16 %v728, %v727
      %v746 = vpack.c.bf16 %v730, %v729
      %v747 = vld [vmem:[%s1] sm:$0xf]
      %v748 = vld [vmem:[%s1 + $0x4] sm:$0xf]
      %v749 = vld [vmem:[%s1 + $0x8] sm:$0xf]
      %v750 = vld [vmem:[%s1 + $0xc] sm:$0xf]
      %v751 = vld [vmem:[%s1 + $0x10] sm:$0xf]
      %v752 = vld [vmem:[%s1 + $0x14] sm:$0xf]
      %s753 = scalar_lea.vmem %s1, 24
      %v754 = vld [vmem:[%s753] sm:$0xf]
      %v755 = vld [vmem:[%s753 + $0x4] sm:$0xf]
      %v756 = vld [vmem:[%s753 + $0x8] sm:$0xf]
      %v757 = vld [vmem:[%s753 + $0xc] sm:$0xf]
      %v758 = vld [vmem:[%s753 + $0x10] sm:$0xf]
      %v759 = vld [vmem:[%s753 + $0x14] sm:$0xf]
      %v766 = vunpack.c.l.b16 %v754
      %v767 = vunpack.c.l.b16 %v755
      %v768 = vunpack.c.l.b16 %v756
      %v769 = vunpack.c.l.b16 %v757
      %v770 = vunpack.c.l.b16 %v758
      %v771 = vunpack.c.l.b16 %v759
      %v772 = vpack.c.b16 %v767, %v766
      %v773 = vpack.c.b16 %v769, %v768
      %v774 = vpack.c.b16 %v771, %v770
      %vm778 = vcmask 392192
      %v780 = vsel %vm778, %v731, 0
      %v783 = vsel %vm778, %v732, 0
      %v786 = vsel %vm778, %v733, 0
      %v789 = vsel %vm778, %v734, 0
      %v792 = vsel %vm778, %v735, 0
      %v795 = vsel %vm778, %v736, 0
      %v798 = vsel %vm778, %v737, 0
      %v801 = vsel %vm778, %v738, 0
      %v804 = vsel %vm778, %v739, 0
      %v807 = vsel %vm778, %v740, 0
      %v810 = vsel %vm778, %v741, 0
      %v813 = vsel %vm778, %v742, 0
      %v816 = vsel %vm778, %v743, 0
      %v819 = vsel %vm778, %v744, 0
      %v822 = vsel %vm778, %v745, 0
      %v825 = vsel %vm778, %v746, 0
      %827 = vmatprep.subr.bf16.mxu0 0
      %828 = vmatpush1.bf16.msra.mxu0 %v772
      %829 = vmatprep.subr.bf16.mxu0 0
      %830 = vmatpush1.bf16.msra.mxu0 %v773
      %831 = vmatprep.subr.bf16.mxu0 0
      %832 = vmatpush1.bf16.msra.mxu0 %v774
      %833 = vmatprep.subr.bf16.mxu0 0
      %834 = vmatpush1.bf16.msra.mxu0 0
      %835 = vmatprep.subr.bf16.mxu0 0
      %836 = vmatpush1.bf16.msra.mxu0 0
      %837 = vmatprep.subr.bf16.mxu0 0
      %838 = vmatpush1.bf16.msra.mxu0 0
      %839 = vmatprep.subr.bf16.mxu0 0
      %840 = vmatpush1.bf16.msra.mxu0 0
      %841 = vmatprep.subr.bf16.mxu0 0
      %842 = vmatpush1.bf16.msra.mxu0 0
      %843 = vmatprep.subr.bf16.mxu0 0
      %844 = vmatpush1.bf16.msra.mxu0 0
      %845 = vmatprep.subr.bf16.mxu0 0
      %846 = vmatpush1.bf16.msra.mxu0 0
      %847 = vmatprep.subr.bf16.mxu0 0
      %848 = vmatpush1.bf16.msra.mxu0 0
      %849 = vmatprep.subr.bf16.mxu0 0
      %850 = vmatpush1.bf16.msra.mxu0 0
      %851 = vmatprep.subr.bf16.mxu0 0
      %852 = vmatpush1.bf16.msra.mxu0 0
      %853 = vmatprep.subr.bf16.mxu0 0
      %854 = vmatpush1.bf16.msra.mxu0 0
      %855 = vmatprep.subr.bf16.mxu0 0
      %856 = vmatpush1.bf16.msra.mxu0 0
      %857 = vmatprep.subr.bf16.mxu0 0
      %858 = vmatpush1.bf16.msra.mxu0 0
      %859 = vmatprep.mubr.bf16.mxu0 0
      %860 = vmatmul.mubr.bf16.gmra.mrb[0].mxu0 %v780
      %v861 = vpop.f32.mrb[0].mxu0
      %v862 = vadd.f32 0.0, %v861
      %v863 = vpop.f32.mrb[0].mxu0
      %v864 = vpop.f32.mrb[0].mxu0
      %v865 = vadd.f32 0.0, %v864
      %v866 = vpop.f32.mrb[0].mxu0
      %867 = vmatprep.mubr.bf16.mxu0 0
      %868 = vmatmul.mubr.bf16.gmra.mrb[0].mxu0 %v783
      %v869 = vpop.f32.mrb[0].mxu0
      %v870 = vadd.f32 0.0, %v869
      %v871 = vpop.f32.mrb[0].mxu0
      %v872 = vpop.f32.mrb[0].mxu0
      %v873 = vadd.f32 0.0, %v872
      %v874 = vpop.f32.mrb[0].mxu0
      %875 = vmatprep.mubr.bf16.mxu0 0
      %876 = vmatmul.mubr.bf16.gmra.mrb[0].mxu0 %v786
      %v877 = vpop.f32.mrb[0].mxu0
      %v878 = vadd.f32 0.0, %v877
      %v879 = vpop.f32.mrb[0].mxu0
      %v880 = vpop.f32.mrb[0].mxu0
      %v881 = vadd.f32 0.0, %v880
      %v882 = vpop.f32.mrb[0].mxu0
      %883 = vmatprep.mubr.bf16.mxu0 0
      %884 = vmatmul.mubr.bf16.gmra.mrb[0].mxu0 %v789
      %v885 = vpop.f32.mrb[0].mxu0
      %v886 = vadd.f32 0.0, %v885
      %v887 = vpop.f32.mrb[0].mxu0
      %v888 = vpop.f32.mrb[0].mxu0
      %v889 = vadd.f32 0.0, %v888
      %v890 = vpop.f32.mrb[0].mxu0
      %891 = vmatprep.mubr.bf16.mxu0 0
      %892 = vmatmul.mubr.bf16.gmra.mrb[0].mxu0 %v792
      %v893 = vpop.f32.mrb[0].mxu0
      %v894 = vadd.f32 0.0, %v893
      %v895 = vpop.f32.mrb[0].mxu0
      %v896 = vpop.f32.mrb[0].mxu0
      %v897 = vadd.f32 0.0, %v896
      %v898 = vpop.f32.mrb[0].mxu0
      %899 = vmatprep.mubr.bf16.mxu0 0
      %900 = vmatmul.mubr.bf16.gmra.mrb[0].mxu0 %v795
      %v901 = vpop.f32.mrb[0].mxu0
      %v902 = vadd.f32 0.0, %v901
      %v903 = vpop.f32.mrb[0].mxu0
      %v904 = vpop.f32.mrb[0].mxu0
      %v905 = vadd.f32 0.0, %v904
      %v906 = vpop.f32.mrb[0].mxu0
      %907 = vmatprep.mubr.bf16.mxu0 0
      %908 = vmatmul.mubr.bf16.gmra.mrb[0].mxu0 %v798
      %v909 = vpop.f32.mrb[0].mxu0
      %v910 = vadd.f32 0.0, %v909
      %v911 = vpop.f32.mrb[0].mxu0
      %v912 = vpop.f32.mrb[0].mxu0
      %v913 = vadd.f32 0.0, %v912
      %v914 = vpop.f32.mrb[0].mxu0
      %915 = vmatprep.mubr.bf16.mxu0 0
      %916 = vmatmul.mubr.bf16.gmra.mrb[0].mxu0 %v801
      %v917 = vpop.f32.mrb[0].mxu0
      %v918 = vadd.f32 0.0, %v917
      %v919 = vpop.f32.mrb[0].mxu0
      %v920 = vpop.f32.mrb[0].mxu0
      %v921 = vadd.f32 0.0, %v920
      %v922 = vpop.f32.mrb[0].mxu0
      %923 = vmatprep.mubr.bf16.mxu0 0
      %924 = vmatmul.mubr.bf16.gmra.mrb[0].mxu0 %v804
      %v925 = vpop.f32.mrb[0].mxu0
      %v926 = vadd.f32 0.0, %v925
      %v927 = vpop.f32.mrb[0].mxu0
      %v928 = vpop.f32.mrb[0].mxu0
      %v929 = vadd.f32 0.0, %v928
      %v930 = vpop.f32.mrb[0].mxu0
      %931 = vmatprep.mubr.bf16.mxu0 0
      %932 = vmatmul.mubr.bf16.gmra.mrb[0].mxu0 %v807
      %v933 = vpop.f32.mrb[0].mxu0
      %v934 = vadd.f32 0.0, %v933
      %v935 = vpop.f32.mrb[0].mxu0
      %v936 = vpop.f32.mrb[0].mxu0
      %v937 = vadd.f32 0.0, %v936
      %v938 = vpop.f32.mrb[0].mxu0
      %939 = vmatprep.mubr.bf16.mxu0 0
      %940 = vmatmul.mubr.bf16.gmra.mrb[0].mxu0 %v810
      %v941 = vpop.f32.mrb[0].mxu0
      %v942 = vadd.f32 0.0, %v941
      %v943 = vpop.f32.mrb[0].mxu0
      %v944 = vpop.f32.mrb[0].mxu0
      %v945 = vadd.f32 0.0, %v944
      %v946 = vpop.f32.mrb[0].mxu0
      %947 = vmatprep.mubr.bf16.mxu0 0
      %948 = vmatmul.mubr.bf16.gmra.mrb[0].mxu0 %v813
      %v949 = vpop.f32.mrb[0].mxu0
      %v950 = vadd.f32 0.0, %v949
      %v951 = vpop.f32.mrb[0].mxu0
      %v952 = vpop.f32.mrb[0].mxu0
      %v953 = vadd.f32 0.0, %v952
      %v954 = vpop.f32.mrb[0].mxu0
      %955 = vmatprep.mubr.bf16.mxu0 0
      %956 = vmatmul.mubr.bf16.gmra.mrb[0].mxu0 %v816
      %v957 = vpop.f32.mrb[0].mxu0
      %v958 = vadd.f32 0.0, %v957
      %v959 = vpop.f32.mrb[0].mxu0
      %v960 = vpop.f32.mrb[0].mxu0
      %v961 = vadd.f32 0.0, %v960
      %v962 = vpop.f32.mrb[0].mxu0
      %963 = vmatprep.mubr.bf16.mxu0 0
      %964 = vmatmul.mubr.bf16.gmra.mrb[0].mxu0 %v819
      %v965 = vpop.f32.mrb[0].mxu0
      %v966 = vadd.f32 0.0, %v965
      %v967 = vpop.f32.mrb[0].mxu0
      %v968 = vpop.f32.mrb[0].mxu0
      %v969 = vadd.f32 0.0, %v968
      %v970 = vpop.f32.mrb[0].mxu0
      %971 = vmatprep.mubr.bf16.mxu0 0
      %972 = vmatmul.mubr.bf16.gmra.mrb[0].mxu0 %v822
      %v973 = vpop.f32.mrb[0].mxu0
      %v974 = vadd.f32 0.0, %v973
      %v975 = vpop.f32.mrb[0].mxu0
      %v976 = vpop.f32.mrb[0].mxu0
      %v977 = vadd.f32 0.0, %v976
      %v978 = vpop.f32.mrb[0].mxu0
      %979 = vmatprep.mubr.bf16.mxu0 0
      %980 = vmatmul.mubr.bf16.gmra.mrb[0].mxu0 %v825
      %v981 = vpop.f32.mrb[0].mxu0
      %v982 = vadd.f32 0.0, %v981
      %v983 = vpop.f32.mrb[0].mxu0
      %v984 = vpop.f32.mrb[0].mxu0
      %v985 = vadd.f32 0.0, %v984
      %v986 = vpop.f32.mrb[0].mxu0
      %987 = vdwg.mxu0
      %v994 = vunpack.c.l.b16 %v747
      %v995 = vunpack.c.l.b16 %v748
      %v996 = vunpack.c.l.b16 %v749
      %v997 = vunpack.c.l.b16 %v750
      %v998 = vunpack.c.l.b16 %v751
      %v999 = vunpack.c.l.b16 %v752
      %v1000 = vpack.c.b16 %v995, %v994
      %v1001 = vpack.c.b16 %v997, %v996
      %v1002 = vpack.c.b16 %v999, %v998
      %v1007 = vsel %vm778, 0, 0
      %1009 = vmatprep.subr.bf16.mxu0 0
      %1010 = vmatpush1.bf16.msra.mxu0 %v1000
      %1011 = vmatprep.subr.bf16.mxu0 0
      %1012 = vmatpush1.bf16.msra.mxu0 %v1001
      %1013 = vmatprep.subr.bf16.mxu0 0
      %1014 = vmatpush1.bf16.msra.mxu0 %v1002
      %1015 = vmatprep.subr.bf16.mxu0 0
      %1016 = vmatpush1.bf16.msra.mxu0 0
      %1017 = vmatprep.subr.bf16.mxu0 0
      %1018 = vmatpush1.bf16.msra.mxu0 0
      %1019 = vmatprep.subr.bf16.mxu0 0
      %1020 = vmatpush1.bf16.msra.mxu0 0
      %1021 = vmatprep.subr.bf16.mxu0 0
      %1022 = vmatpush1.bf16.msra.mxu0 0
      %1023 = vmatprep.subr.bf16.mxu0 0
      %1024 = vmatpush1.bf16.msra.mxu0 0
      %1025 = vmatprep.subr.bf16.mxu0 0
      %1026 = vmatpush1.bf16.msra.mxu0 0
      %1027 = vmatprep.subr.bf16.mxu0 0
      %1028 = vmatpush1.bf16.msra.mxu0 0
      %1029 = vmatprep.subr.bf16.mxu0 0
      %1030 = vmatpush1.bf16.msra.mxu0 0
      %1031 = vmatprep.subr.bf16.mxu0 0
      %1032 = vmatpush1.bf16.msra.mxu0 0
      %1033 = vmatprep.subr.bf16.mxu0 0
      %1034 = vmatpush1.bf16.msra.mxu0 0
      %1035 = vmatprep.subr.bf16.mxu0 0
      %1036 = vmatpush1.bf16.msra.mxu0 0
      %1037 = vmatprep.subr.bf16.mxu0 0
      %1038 = vmatpush1.bf16.msra.mxu0 0
      %1039 = vmatprep.subr.bf16.mxu0 0
      %1040 = vmatpush1.bf16.msra.mxu0 0
      %1041 = vmatprep.mubr.bf16.mxu0 0
      %1042 = vmatmul.mubr.bf16.gmra.mrb[0].mxu0 %v1007
      %v1043 = vpop.f32.mrb[0].mxu0
      %v1044 = vadd.f32 %v862, %v1043
      %v1045 = vpop.f32.mrb[0].mxu0
      %v1046 = vpop.f32.mrb[0].mxu0
      %v1047 = vadd.f32 %v865, %v1046
      %v1048 = vpop.f32.mrb[0].mxu0
      %1049 = vmatprep.mubr.bf16.mxu0 0
      %1050 = vmatmul.mubr.bf16.gmra.mrb[0].mxu0 %v780
      %v1051 = vpop.f32.mrb[0].mxu0
      %v1052 = vadd.f32 %v870, %v1051
      %v1053 = vpop.f32.mrb[0].mxu0
      %v1054 = vpop.f32.mrb[0].mxu0
      %v1055 = vadd.f32 %v873, %v1054
      %v1056 = vpop.f32.mrb[0].mxu0
      %1057 = vmatprep.mubr.bf16.mxu0 0
      %1058 = vmatmul.mubr.bf16.gmra.mrb[0].mxu0 %v783
      %v1059 = vpop.f32.mrb[0].mxu0
      %v1060 = vadd.f32 %v878, %v1059
      %v1061 = vpop.f32.mrb[0].mxu0
      %v1062 = vpop.f32.mrb[0].mxu0
      %v1063 = vadd.f32 %v881, %v1062
      %v1064 = vpop.f32.mrb[0].mxu0
      %1065 = vmatprep.mubr.bf16.mxu0 0
      %1066 = vmatmul.mubr.bf16.gmra.mrb[0].mxu0 %v786
      %v1067 = vpop.f32.mrb[0].mxu0
      %v1068 = vadd.f32 %v886, %v1067
      %v1069 = vpop.f32.mrb[0].mxu0
      %v1070 = vpop.f32.mrb[0].mxu0
      %v1071 = vadd.f32 %v889, %v1070
      %v1072 = vpop.f32.mrb[0].mxu0
      %1073 = vmatprep.mubr.bf16.mxu0 0
      %1074 = vmatmul.mubr.bf16.gmra.mrb[0].mxu0 %v789
      %v1075 = vpop.f32.mrb[0].mxu0
      %v1076 = vadd.f32 %v894, %v1075
      %v1077 = vpop.f32.mrb[0].mxu0
      %v1078 = vpop.f32.mrb[0].mxu0
      %v1079 = vadd.f32 %v897, %v1078
      %v1080 = vpop.f32.mrb[0].mxu0
      %1081 = vmatprep.mubr.bf16.mxu0 0
      %1082 = vmatmul.mubr.bf16.gmra.mrb[0].mxu0 %v792
      %v1083 = vpop.f32.mrb[0].mxu0
      %v1084 = vadd.f32 %v902, %v1083
      %v1085 = vpop.f32.mrb[0].mxu0
      %v1086 = vpop.f32.mrb[0].mxu0
      %v1087 = vadd.f32 %v905, %v1086
      %v1088 = vpop.f32.mrb[0].mxu0
      %1089 = vmatprep.mubr.bf16.mxu0 0
      %1090 = vmatmul.mubr.bf16.gmra.mrb[0].mxu0 %v795
      %v1091 = vpop.f32.mrb[0].mxu0
      %v1092 = vadd.f32 %v910, %v1091
      %v1093 = vpop.f32.mrb[0].mxu0
      %v1094 = vpop.f32.mrb[0].mxu0
      %v1095 = vadd.f32 %v913, %v1094
      %v1096 = vpop.f32.mrb[0].mxu0
      %1097 = vmatprep.mubr.bf16.mxu0 0
      %1098 = vmatmul.mubr.bf16.gmra.mrb[0].mxu0 %v798
      %v1099 = vpop.f32.mrb[0].mxu0
      %v1100 = vadd.f32 %v918, %v1099
      %v1101 = vpop.f32.mrb[0].mxu0
      %v1102 = vpop.f32.mrb[0].mxu0
      %v1103 = vadd.f32 %v921, %v1102
      %v1104 = vpop.f32.mrb[0].mxu0
      %1105 = vmatprep.mubr.bf16.mxu0 0
      %1106 = vmatmul.mubr.bf16.gmra.mrb[0].mxu0 %v801
      %v1107 = vpop.f32.mrb[0].mxu0
      %v1108 = vadd.f32 %v926, %v1107
      %v1109 = vpop.f32.mrb[0].mxu0
      %v1110 = vpop.f32.mrb[0].mxu0
      %v1111 = vadd.f32 %v929, %v1110
      %v1112 = vpop.f32.mrb[0].mxu0
      %1113 = vmatprep.mubr.bf16.mxu0 0
      %1114 = vmatmul.mubr.bf16.gmra.mrb[0].mxu0 %v804
      %v1115 = vpop.f32.mrb[0].mxu0
      %v1116 = vadd.f32 %v934, %v1115
      %v1117 = vpop.f32.mrb[0].mxu0
      %v1118 = vpop.f32.mrb[0].mxu0
      %v1119 = vadd.f32 %v937, %v1118
      %v1120 = vpop.f32.mrb[0].mxu0
      %1121 = vmatprep.mubr.bf16.mxu0 0
      %1122 = vmatmul.mubr.bf16.gmra.mrb[0].mxu0 %v807
      %v1123 = vpop.f32.mrb[0].mxu0
      %v1124 = vadd.f32 %v942, %v1123
      %v1125 = vpop.f32.mrb[0].mxu0
      %v1126 = vpop.f32.mrb[0].mxu0
      %v1127 = vadd.f32 %v945, %v1126
      %v1128 = vpop.f32.mrb[0].mxu0
      %1129 = vmatprep.mubr.bf16.mxu0 0
      %1130 = vmatmul.mubr.bf16.gmra.mrb[0].mxu0 %v810
      %v1131 = vpop.f32.mrb[0].mxu0
      %v1132 = vadd.f32 %v950, %v1131
      %v1133 = vpop.f32.mrb[0].mxu0
      %v1134 = vpop.f32.mrb[0].mxu0
      %v1135 = vadd.f32 %v953, %v1134
      %v1136 = vpop.f32.mrb[0].mxu0
      %1137 = vmatprep.mubr.bf16.mxu0 0
      %1138 = vmatmul.mubr.bf16.gmra.mrb[0].mxu0 %v813
      %v1139 = vpop.f32.mrb[0].mxu0
      %v1140 = vadd.f32 %v958, %v1139
      %v1141 = vpop.f32.mrb[0].mxu0
      %v1142 = vpop.f32.mrb[0].mxu0
      %v1143 = vadd.f32 %v961, %v1142
      %v1144 = vpop.f32.mrb[0].mxu0
      %1145 = vmatprep.mubr.bf16.mxu0 0
      %1146 = vmatmul.mubr.bf16.gmra.mrb[0].mxu0 %v816
      %v1147 = vpop.f32.mrb[0].mxu0
      %v1148 = vadd.f32 %v966, %v1147
      %v1149 = vpop.f32.mrb[0].mxu0
      %v1150 = vpop.f32.mrb[0].mxu0
      %v1151 = vadd.f32 %v969, %v1150
      %v1152 = vpop.f32.mrb[0].mxu0
      %1153 = vmatprep.mubr.bf16.mxu0 0
      %1154 = vmatmul.mubr.bf16.gmra.mrb[0].mxu0 %v819
      %v1155 = vpop.f32.mrb[0].mxu0
      %v1156 = vadd.f32 %v974, %v1155
      %v1157 = vpop.f32.mrb[0].mxu0
      %v1158 = vpop.f32.mrb[0].mxu0
      %v1159 = vadd.f32 %v977, %v1158
      %v1160 = vpop.f32.mrb[0].mxu0
      %1161 = vmatprep.mubr.bf16.mxu0 0
      %1162 = vmatmul.mubr.bf16.gmra.mrb[0].mxu0 %v822
      %v1163 = vpop.f32.mrb[0].mxu0
      %v1164 = vadd.f32 %v982, %v1163
      %v1165 = vpop.f32.mrb[0].mxu0
      %v1166 = vpop.f32.mrb[0].mxu0
      %v1167 = vadd.f32 %v985, %v1166
      %v1168 = vpop.f32.mrb[0].mxu0
      %1169 = vdwg.mxu0
      %s1170 = scalar_lea.vmem %s1, 48
      %v1171 = vld [vmem:[%s1170] sm:$0xf]
      %v1172 = vld [vmem:[%s1170 + $0x4] sm:$0xf]
      %v1173 = vld [vmem:[%s1170 + $0x8] sm:$0xf]
      %v1174 = vld [vmem:[%s1170 + $0xc] sm:$0xf]
      %v1175 = vld [vmem:[%s1170 + $0x10] sm:$0xf]
      %v1176 = vld [vmem:[%s1170 + $0x14] sm:$0xf]
      %v1183 = vunpack.c.l.b16 %v1171
      %v1184 = vunpack.c.l.b16 %v1172
      %v1185 = vunpack.c.l.b16 %v1173
      %v1186 = vunpack.c.l.b16 %v1174
      %v1187 = vunpack.c.l.b16 %v1175
      %v1188 = vunpack.c.l.b16 %v1176
      %v1189 = vpack.c.b16 %v1184, %v1183
      %v1190 = vpack.c.b16 %v1186, %v1185
      %v1191 = vpack.c.b16 %v1188, %v1187
      %1195 = vmatprep.subr.bf16.mxu0 0
      %1196 = vmatpush1.bf16.msra.mxu0 %v1189
      %1197 = vmatprep.subr.bf16.mxu0 0
      %1198 = vmatpush1.bf16.msra.mxu0 %v1190
      %1199 = vmatprep.subr.bf16.mxu0 0
      %1200 = vmatpush1.bf16.msra.mxu0 %v1191
      %1201 = vmatprep.subr.bf16.mxu0 0
      %1202 = vmatpush1.bf16.msra.mxu0 0
      %1203 = vmatprep.subr.bf16.mxu0 0
      %1204 = vmatpush1.bf16.msra.mxu0 0
      %1205 = vmatprep.subr.bf16.mxu0 0
      %1206 = vmatpush1.bf16.msra.mxu0 0
      %1207 = vmatprep.subr.bf16.mxu0 0
      %1208 = vmatpush1.bf16.msra.mxu0 0
      %1209 = vmatprep.subr.bf16.mxu0 0
      %1210 = vmatpush1.bf16.msra.mxu0 0
      %1211 = vmatprep.subr.bf16.mxu0 0
      %1212 = vmatpush1.bf16.msra.mxu0 0
      %1213 = vmatprep.subr.bf16.mxu0 0
      %1214 = vmatpush1.bf16.msra.mxu0 0
      %1215 = vmatprep.subr.bf16.mxu0 0
      %1216 = vmatpush1.bf16.msra.mxu0 0
      %1217 = vmatprep.subr.bf16.mxu0 0
      %1218 = vmatpush1.bf16.msra.mxu0 0
      %1219 = vmatprep.subr.bf16.mxu0 0
      %1220 = vmatpush1.bf16.msra.mxu0 0
      %1221 = vmatprep.subr.bf16.mxu0 0
      %1222 = vmatpush1.bf16.msra.mxu0 0
      %1223 = vmatprep.subr.bf16.mxu0 0
      %1224 = vmatpush1.bf16.msra.mxu0 0
      %1225 = vmatprep.subr.bf16.mxu0 0
      %1226 = vmatpush1.bf16.msra.mxu0 0
      %1227 = vmatprep.mubr.bf16.mxu0 0
      %1228 = vmatmul.mubr.bf16.gmra.mrb[0].mxu0 %v783
      %v1229 = vpop.f32.mrb[0].mxu0
      %v1230 = vadd.f32 0.0, %v1229
      %v1231 = vpop.f32.mrb[0].mxu0
      %v1232 = vpop.f32.mrb[0].mxu0
      %v1233 = vadd.f32 0.0, %v1232
      %v1234 = vpop.f32.mrb[0].mxu0
      %1235 = vmatprep.mubr.bf16.mxu0 0
      %1236 = vmatmul.mubr.bf16.gmra.mrb[0].mxu0 %v786
      %v1237 = vpop.f32.mrb[0].mxu0
      %v1238 = vadd.f32 0.0, %v1237
      %v1239 = vpop.f32.mrb[0].mxu0
      %v1240 = vpop.f32.mrb[0].mxu0
      %v1241 = vadd.f32 0.0, %v1240
      %v1242 = vpop.f32.mrb[0].mxu0
      %1243 = vmatprep.mubr.bf16.mxu0 0
      %1244 = vmatmul.mubr.bf16.gmra.mrb[0].mxu0 %v789
      %v1245 = vpop.f32.mrb[0].mxu0
      %v1246 = vadd.f32 0.0, %v1245
      %v1247 = vpop.f32.mrb[0].mxu0
      %v1248 = vpop.f32.mrb[0].mxu0
      %v1249 = vadd.f32 0.0, %v1248
      %v1250 = vpop.f32.mrb[0].mxu0
      %1251 = vmatprep.mubr.bf16.mxu0 0
      %1252 = vmatmul.mubr.bf16.gmra.mrb[0].mxu0 %v792
      %v1253 = vpop.f32.mrb[0].mxu0
      %v1254 = vadd.f32 0.0, %v1253
      %v1255 = vpop.f32.mrb[0].mxu0
      %v1256 = vpop.f32.mrb[0].mxu0
      %v1257 = vadd.f32 0.0, %v1256
      %v1258 = vpop.f32.mrb[0].mxu0
      %1259 = vmatprep.mubr.bf16.mxu0 0
      %1260 = vmatmul.mubr.bf16.gmra.mrb[0].mxu0 %v795
      %v1261 = vpop.f32.mrb[0].mxu0
      %v1262 = vadd.f32 0.0, %v1261
      %v1263 = vpop.f32.mrb[0].mxu0
      %v1264 = vpop.f32.mrb[0].mxu0
      %v1265 = vadd.f32 0.0, %v1264
      %v1266 = vpop.f32.mrb[0].mxu0
      %1267 = vmatprep.mubr.bf16.mxu0 0
      %1268 = vmatmul.mubr.bf16.gmra.mrb[0].mxu0 %v798
      %v1269 = vpop.f32.mrb[0].mxu0
      %v1270 = vadd.f32 0.0, %v1269
      %v1271 = vpop.f32.mrb[0].mxu0
      %v1272 = vpop.f32.mrb[0].mxu0
      %v1273 = vadd.f32 0.0, %v1272
      %v1274 = vpop.f32.mrb[0].mxu0
      %1275 = vmatprep.mubr.bf16.mxu0 0
      %1276 = vmatmul.mubr.bf16.gmra.mrb[0].mxu0 %v801
      %v1277 = vpop.f32.mrb[0].mxu0
      %v1278 = vadd.f32 0.0, %v1277
      %v1279 = vpop.f32.mrb[0].mxu0
      %v1280 = vpop.f32.mrb[0].mxu0
      %v1281 = vadd.f32 0.0, %v1280
      %v1282 = vpop.f32.mrb[0].mxu0
      %1283 = vmatprep.mubr.bf16.mxu0 0
      %1284 = vmatmul.mubr.bf16.gmra.mrb[0].mxu0 %v804
      %v1285 = vpop.f32.mrb[0].mxu0
      %v1286 = vadd.f32 0.0, %v1285
      %v1287 = vpop.f32.mrb[0].mxu0
      %v1288 = vpop.f32.mrb[0].mxu0
      %v1289 = vadd.f32 0.0, %v1288
      %v1290 = vpop.f32.mrb[0].mxu0
      %1291 = vmatprep.mubr.bf16.mxu0 0
      %1292 = vmatmul.mubr.bf16.gmra.mrb[0].mxu0 %v807
      %v1293 = vpop.f32.mrb[0].mxu0
      %v1294 = vadd.f32 0.0, %v1293
      %v1295 = vpop.f32.mrb[0].mxu0
      %v1296 = vpop.f32.mrb[0].mxu0
      %v1297 = vadd.f32 0.0, %v1296
      %v1298 = vpop.f32.mrb[0].mxu0
      %1299 = vmatprep.mubr.bf16.mxu0 0
      %1300 = vmatmul.mubr.bf16.gmra.mrb[0].mxu0 %v810
      %v1301 = vpop.f32.mrb[0].mxu0
      %v1302 = vadd.f32 0.0, %v1301
      %v1303 = vpop.f32.mrb[0].mxu0
      %v1304 = vpop.f32.mrb[0].mxu0
      %v1305 = vadd.f32 0.0, %v1304
      %v1306 = vpop.f32.mrb[0].mxu0
      %1307 = vmatprep.mubr.bf16.mxu0 0
      %1308 = vmatmul.mubr.bf16.gmra.mrb[0].mxu0 %v813
      %v1309 = vpop.f32.mrb[0].mxu0
      %v1310 = vadd.f32 0.0, %v1309
      %v1311 = vpop.f32.mrb[0].mxu0
      %v1312 = vpop.f32.mrb[0].mxu0
      %v1313 = vadd.f32 0.0, %v1312
      %v1314 = vpop.f32.mrb[0].mxu0
      %1315 = vmatprep.mubr.bf16.mxu0 0
      %1316 = vmatmul.mubr.bf16.gmra.mrb[0].mxu0 %v816
      %v1317 = vpop.f32.mrb[0].mxu0
      %v1318 = vadd.f32 0.0, %v1317
      %v1319 = vpop.f32.mrb[0].mxu0
      %v1320 = vpop.f32.mrb[0].mxu0
      %v1321 = vadd.f32 0.0, %v1320
      %v1322 = vpop.f32.mrb[0].mxu0
      %1323 = vmatprep.mubr.bf16.mxu0 0
      %1324 = vmatmul.mubr.bf16.gmra.mrb[0].mxu0 %v819
      %v1325 = vpop.f32.mrb[0].mxu0
      %v1326 = vadd.f32 0.0, %v1325
      %v1327 = vpop.f32.mrb[0].mxu0
      %v1328 = vpop.f32.mrb[0].mxu0
      %v1329 = vadd.f32 0.0, %v1328
      %v1330 = vpop.f32.mrb[0].mxu0
      %1331 = vmatprep.mubr.bf16.mxu0 0
      %1332 = vmatmul.mubr.bf16.gmra.mrb[0].mxu0 %v822
      %v1333 = vpop.f32.mrb[0].mxu0
      %v1334 = vadd.f32 0.0, %v1333
      %v1335 = vpop.f32.mrb[0].mxu0
      %v1336 = vpop.f32.mrb[0].mxu0
      %v1337 = vadd.f32 0.0, %v1336
      %v1338 = vpop.f32.mrb[0].mxu0
      %1339 = vmatprep.mubr.bf16.mxu0 0
      %1340 = vmatmul.mubr.bf16.gmra.mrb[0].mxu0 %v825
      %v1341 = vpop.f32.mrb[0].mxu0
      %v1342 = vadd.f32 0.0, %v1341
      %v1343 = vpop.f32.mrb[0].mxu0
      %v1344 = vpop.f32.mrb[0].mxu0
      %v1345 = vadd.f32 0.0, %v1344
      %v1346 = vpop.f32.mrb[0].mxu0
      %1347 = vmatprep.mubr.bf16.mxu0 0
      %1348 = vmatmul.mubr.bf16.gmra.mrb[0].mxu0 %v1007
      %v1349 = vpop.f32.mrb[0].mxu0
      %v1350 = vadd.f32 0.0, %v1349
      %v1351 = vpop.f32.mrb[0].mxu0
      %v1352 = vpop.f32.mrb[0].mxu0
      %v1353 = vadd.f32 0.0, %v1352
      %v1354 = vpop.f32.mrb[0].mxu0
      %1355 = vdwg.mxu0
      %v1356 = vadd.f32 %v1044, %v1230
      %v1357 = vadd.f32 %v1047, %v1233
      %v1358 = vadd.f32 %v1052, %v1238
      %v1359 = vadd.f32 %v1055, %v1241
      %v1360 = vadd.f32 %v1060, %v1246
      %v1361 = vadd.f32 %v1063, %v1249
      %v1362 = vadd.f32 %v1068, %v1254
      %v1363 = vadd.f32 %v1071, %v1257
      %v1364 = vadd.f32 %v1076, %v1262
      %v1365 = vadd.f32 %v1079, %v1265
      %v1366 = vadd.f32 %v1084, %v1270
      %v1367 = vadd.f32 %v1087, %v1273
      %v1368 = vadd.f32 %v1092, %v1278
      %v1369 = vadd.f32 %v1095, %v1281
      %v1370 = vadd.f32 %v1100, %v1286
      %v1371 = vadd.f32 %v1103, %v1289
      %v1372 = vadd.f32 %v1108, %v1294
      %v1373 = vadd.f32 %v1111, %v1297
      %v1374 = vadd.f32 %v1116, %v1302
      %v1375 = vadd.f32 %v1119, %v1305
      %v1376 = vadd.f32 %v1124, %v1310
      %v1377 = vadd.f32 %v1127, %v1313
      %v1378 = vadd.f32 %v1132, %v1318
      %v1379 = vadd.f32 %v1135, %v1321
      %v1380 = vadd.f32 %v1140, %v1326
      %v1381 = vadd.f32 %v1143, %v1329
      %v1382 = vadd.f32 %v1148, %v1334
      %v1383 = vadd.f32 %v1151, %v1337
      %v1384 = vadd.f32 %v1156, %v1342
      %v1385 = vadd.f32 %v1159, %v1345
      %v1386 = vadd.f32 %v1164, %v1350
      %v1387 = vadd.f32 %v1167, %v1353
      %v1388 = vsel %vm665, %v1356, 0.0
      %v1389 = vsel %vm665, %v1357, 0.0
      %v1390 = vadd.f32 %v1388, %v1389
      %v1391 = vsel %vm665, %v1358, 0.0
      %v1392 = vadd.f32 %v1390, %v1391
      %v1393 = vsel %vm665, %v1359, 0.0
      %v1394 = vadd.f32 %v1392, %v1393
      %v1395 = vsel %vm665, %v1360, 0.0
      %v1396 = vadd.f32 %v1394, %v1395
      %v1397 = vsel %vm665, %v1361, 0.0
      %v1398 = vadd.f32 %v1396, %v1397
      %v1399 = vsel %vm665, %v1362, 0.0
      %v1400 = vadd.f32 %v1398, %v1399
      %v1401 = vsel %vm665, %v1363, 0.0
      %v1402 = vadd.f32 %v1400, %v1401
      %v1403 = vsel %vm665, %v1364, 0.0
      %v1404 = vadd.f32 %v1402, %v1403
      %v1405 = vsel %vm665, %v1365, 0.0
      %v1406 = vadd.f32 %v1404, %v1405
      %v1407 = vsel %vm665, %v1366, 0.0
      %v1408 = vadd.f32 %v1406, %v1407
      %v1409 = vsel %vm665, %v1367, 0.0
      %v1410 = vadd.f32 %v1408, %v1409
      %v1411 = vsel %vm665, %v1368, 0.0
      %v1412 = vadd.f32 %v1410, %v1411
      %v1413 = vsel %vm665, %v1369, 0.0
      %v1414 = vadd.f32 %v1412, %v1413
      %v1415 = vsel %vm665, %v1370, 0.0
      %v1416 = vadd.f32 %v1414, %v1415
      %v1417 = vsel %vm665, %v1371, 0.0
      %v1418 = vadd.f32 %v1416, %v1417
      %v1419 = vsel %vm665, %v1372, 0.0
      %v1420 = vadd.f32 %v1418, %v1419
      %v1421 = vsel %vm665, %v1373, 0.0
      %v1422 = vadd.f32 %v1420, %v1421
      %v1423 = vsel %vm665, %v1374, 0.0
      %v1424 = vadd.f32 %v1422, %v1423
      %v1425 = vsel %vm665, %v1375, 0.0
      %v1426 = vadd.f32 %v1424, %v1425
      %v1427 = vsel %vm665, %v1376, 0.0
      %v1428 = vadd.f32 %v1426, %v1427
      %v1429 = vsel %vm665, %v1377, 0.0
      %v1430 = vadd.f32 %v1428, %v1429
      %v1431 = vsel %vm665, %v1378, 0.0
      %v1432 = vadd.f32 %v1430, %v1431
      %v1433 = vsel %vm665, %v1379, 0.0
      %v1434 = vadd.f32 %v1432, %v1433
      %v1435 = vsel %vm665, %v1380, 0.0
      %v1436 = vadd.f32 %v1434, %v1435
      %v1437 = vsel %vm665, %v1381, 0.0
      %v1438 = vadd.f32 %v1436, %v1437
      %v1439 = vsel %vm665, %v1382, 0.0
      %v1440 = vadd.f32 %v1438, %v1439
      %v1441 = vsel %vm665, %v1383, 0.0
      %v1442 = vadd.f32 %v1440, %v1441
      %v1443 = vsel %vm665, %v1384, 0.0
      %v1444 = vadd.f32 %v1442, %v1443
      %v1445 = vsel %vm665, %v1385, 0.0
      %v1446 = vadd.f32 %v1444, %v1445
      %v1447 = vsel %vm665, %v1386, 0.0
      %v1448 = vadd.f32 %v1446, %v1447
      %v1449 = vsel %vm665, %v1387, 0.0
      %v1450 = vadd.f32 %v1448, %v1449
      %v1451 = vrot.slane %v1450, 4
      %v1452 = vadd.f32 %v1450, %v1451
      %v1453 = vrot.slane %v1452, 2
      %v1454 = vadd.f32 %v1452, %v1453
      %v1455 = vrot.slane %v1454, 1
      %v1456 = vadd.f32 %v1454, %v1455
      %v1457 = vmul.f32 %v1356, %v1356
      %v1458 = vmul.f32 %v1357, %v1357
      %v1459 = vmul.f32 %v1358, %v1358
      %v1460 = vmul.f32 %v1359, %v1359
      %v1461 = vmul.f32 %v1360, %v1360
      %v1462 = vmul.f32 %v1361, %v1361
      %v1463 = vmul.f32 %v1362, %v1362
      %v1464 = vmul.f32 %v1363, %v1363
      %v1465 = vmul.f32 %v1364, %v1364
      %v1466 = vmul.f32 %v1365, %v1365
      %v1467 = vmul.f32 %v1366, %v1366
      %v1468 = vmul.f32 %v1367, %v1367
      %v1469 = vmul.f32 %v1368, %v1368
      %v1470 = vmul.f32 %v1369, %v1369
      %v1471 = vmul.f32 %v1370, %v1370
      %v1472 = vmul.f32 %v1371, %v1371
      %v1473 = vmul.f32 %v1372, %v1372
      %v1474 = vmul.f32 %v1373, %v1373
      %v1475 = vmul.f32 %v1374, %v1374
      %v1476 = vmul.f32 %v1375, %v1375
      %v1477 = vmul.f32 %v1376, %v1376
      %v1478 = vmul.f32 %v1377, %v1377
      %v1479 = vmul.f32 %v1378, %v1378
      %v1480 = vmul.f32 %v1379, %v1379
      %v1481 = vmul.f32 %v1380, %v1380
      %v1482 = vmul.f32 %v1381, %v1381
      %v1483 = vmul.f32 %v1382, %v1382
      %v1484 = vmul.f32 %v1383, %v1383
      %v1485 = vmul.f32 %v1384, %v1384
      %v1486 = vmul.f32 %v1385, %v1385
      %v1487 = vmul.f32 %v1386, %v1386
      %v1488 = vmul.f32 %v1387, %v1387
      %v1489 = vsel %vm665, %v1457, 0.0
      %v1490 = vsel %vm665, %v1458, 0.0
      %v1491 = vadd.f32 %v1489, %v1490
      %v1492 = vsel %vm665, %v1459, 0.0
      %v1493 = vadd.f32 %v1491, %v1492
      %v1494 = vsel %vm665, %v1460, 0.0
      %v1495 = vadd.f32 %v1493, %v1494
      %v1496 = vsel %vm665, %v1461, 0.0
      %v1497 = vadd.f32 %v1495, %v1496
      %v1498 = vsel %vm665, %v1462, 0.0
      %v1499 = vadd.f32 %v1497, %v1498
      %v1500 = vsel %vm665, %v1463, 0.0
      %v1501 = vadd.f32 %v1499, %v1500
      %v1502 = vsel %vm665, %v1464, 0.0
      %v1503 = vadd.f32 %v1501, %v1502
      %v1504 = vsel %vm665, %v1465, 0.0
      %v1505 = vadd.f32 %v1503, %v1504
      %v1506 = vsel %vm665, %v1466, 0.0
      %v1507 = vadd.f32 %v1505, %v1506
      %v1508 = vsel %vm665, %v1467, 0.0
      %v1509 = vadd.f32 %v1507, %v1508
      %v1510 = vsel %vm665, %v1468, 0.0
      %v1511 = vadd.f32 %v1509, %v1510
      %v1512 = vsel %vm665, %v1469, 0.0
      %v1513 = vadd.f32 %v1511, %v1512
      %v1514 = vsel %vm665, %v1470, 0.0
      %v1515 = vadd.f32 %v1513, %v1514
      %v1516 = vsel %vm665, %v1471, 0.0
      %v1517 = vadd.f32 %v1515, %v1516
      %v1518 = vsel %vm665, %v1472, 0.0
      %v1519 = vadd.f32 %v1517, %v1518
      %v1520 = vsel %vm665, %v1473, 0.0
      %v1521 = vadd.f32 %v1519, %v1520
      %v1522 = vsel %vm665, %v1474, 0.0
      %v1523 = vadd.f32 %v1521, %v1522
      %v1524 = vsel %vm665, %v1475, 0.0
      %v1525 = vadd.f32 %v1523, %v1524
      %v1526 = vsel %vm665, %v1476, 0.0
      %v1527 = vadd.f32 %v1525, %v1526
      %v1528 = vsel %vm665, %v1477, 0.0
      %v1529 = vadd.f32 %v1527, %v1528
      %v1530 = vsel %vm665, %v1478, 0.0
      %v1531 = vadd.f32 %v1529, %v1530
      %v1532 = vsel %vm665, %v1479, 0.0
      %v1533 = vadd.f32 %v1531, %v1532
      %v1534 = vsel %vm665, %v1480, 0.0
      %v1535 = vadd.f32 %v1533, %v1534
      %v1536 = vsel %vm665, %v1481, 0.0
      %v1537 = vadd.f32 %v1535, %v1536
      %v1538 = vsel %vm665, %v1482, 0.0
      %v1539 = vadd.f32 %v1537, %v1538
      %v1540 = vsel %vm665, %v1483, 0.0
      %v1541 = vadd.f32 %v1539, %v1540
      %v1542 = vsel %vm665, %v1484, 0.0
      %v1543 = vadd.f32 %v1541, %v1542
      %v1544 = vsel %vm665, %v1485, 0.0
      %v1545 = vadd.f32 %v1543, %v1544
      %v1546 = vsel %vm665, %v1486, 0.0
      %v1547 = vadd.f32 %v1545, %v1546
      %v1548 = vsel %vm665, %v1487, 0.0
      %v1549 = vadd.f32 %v1547, %v1548
      %v1550 = vsel %vm665, %v1488, 0.0
      %v1551 = vadd.f32 %v1549, %v1550
      %v1552 = vrot.slane %v1551, 4
      %v1553 = vadd.f32 %v1551, %v1552
      %v1554 = vrot.slane %v1553, 2
      %v1555 = vadd.f32 %v1553, %v1554
      %v1556 = vrot.slane %v1555, 1
      %v1557 = vadd.f32 %v1555, %v1556
      %v1558 = vsel %vm279, %v1456, %v1557
      %vm1559 = vcmask 123904
      %1560 = vst.msk [vmem:[%s181] sm:$0x3] %vm1559, %v1558
      %v1561 = vpack.c.bf16 %v1357, %v1356
      %v1562 = vpack.c.bf16 %v1359, %v1358
      %v1563 = vpack.c.bf16 %v1361, %v1360
      %v1564 = vpack.c.bf16 %v1363, %v1362
      %v1565 = vpack.c.bf16 %v1365, %v1364
      %v1566 = vpack.c.bf16 %v1367, %v1366
      %v1567 = vpack.c.bf16 %v1369, %v1368
      %v1568 = vpack.c.bf16 %v1371, %v1370
      %v1569 = vpack.c.bf16 %v1373, %v1372
      %v1570 = vpack.c.bf16 %v1375, %v1374
      %v1571 = vpack.c.bf16 %v1377, %v1376
      %v1572 = vpack.c.bf16 %v1379, %v1378
      %v1573 = vpack.c.bf16 %v1381, %v1380
      %v1574 = vpack.c.bf16 %v1383, %v1382
      %v1575 = vpack.c.bf16 %v1385, %v1384
      %v1576 = vpack.c.bf16 %v1387, %v1386
      %v1593 = vunpack.c.l.b16 %v1561
      %v1594 = vunpack.c.h.b16 %v1561
      %v1595 = vunpack.c.l.b16 %v1562
      %v1596 = vunpack.c.h.b16 %v1562
      %v1597 = vunpack.c.l.b16 %v1563
      %v1598 = vunpack.c.h.b16 %v1563
      %v1599 = vunpack.c.l.b16 %v1564
      %v1600 = vunpack.c.h.b16 %v1564
      %v1601 = vunpack.c.l.b16 %v1565
      %v1602 = vunpack.c.h.b16 %v1565
      %v1603 = vunpack.c.l.b16 %v1566
      %v1604 = vunpack.c.h.b16 %v1566
      %v1605 = vunpack.c.l.b16 %v1567
      %v1606 = vunpack.c.h.b16 %v1567
      %v1607 = vunpack.c.l.b16 %v1568
      %v1608 = vunpack.c.h.b16 %v1568
      %v1609 = vunpack.c.l.b16 %v1569
      %v1610 = vunpack.c.h.b16 %v1569
      %v1611 = vunpack.c.l.b16 %v1570
      %v1612 = vunpack.c.h.b16 %v1570
      %v1613 = vunpack.c.l.b16 %v1571
      %v1614 = vunpack.c.h.b16 %v1571
      %v1615 = vunpack.c.l.b16 %v1572
      %v1616 = vunpack.c.h.b16 %v1572
      %v1617 = vunpack.c.l.b16 %v1573
      %v1618 = vunpack.c.h.b16 %v1573
      %v1619 = vunpack.c.l.b16 %v1574
      %v1620 = vunpack.c.h.b16 %v1574
      %v1621 = vunpack.c.l.b16 %v1575
      %v1622 = vunpack.c.h.b16 %v1575
      %v1623 = vunpack.c.l.b16 %v1576
      %v1624 = vunpack.c.h.b16 %v1576
      %v1625 = vpack.c.b16 %v1593, %v1593
      %v1626 = vpack.c.b16 %v1594, %v1594
      %v1627 = vpack.c.b16 %v1595, %v1595
      %v1628 = vpack.c.b16 %v1596, %v1596
      %v1629 = vpack.c.b16 %v1597, %v1597
      %v1630 = vpack.c.b16 %v1598, %v1598
      %v1631 = vpack.c.b16 %v1599, %v1599
      %v1632 = vpack.c.b16 %v1600, %v1600
      %v1633 = vpack.c.b16 %v1601, %v1601
      %v1634 = vpack.c.b16 %v1602, %v1602
      %v1635 = vpack.c.b16 %v1603, %v1603
      %v1636 = vpack.c.b16 %v1604, %v1604
      %v1637 = vpack.c.b16 %v1605, %v1605
      %v1638 = vpack.c.b16 %v1606, %v1606
      %v1639 = vpack.c.b16 %v1607, %v1607
      %v1640 = vpack.c.b16 %v1608, %v1608
      %v1641 = vpack.c.b16 %v1609, %v1609
      %v1642 = vpack.c.b16 %v1610, %v1610
      %v1643 = vpack.c.b16 %v1611, %v1611
      %v1644 = vpack.c.b16 %v1612, %v1612
      %v1645 = vpack.c.b16 %v1613, %v1613
      %v1646 = vpack.c.b16 %v1614, %v1614
      %v1647 = vpack.c.b16 %v1615, %v1615
      %v1648 = vpack.c.b16 %v1616, %v1616
      %v1649 = vpack.c.b16 %v1617, %v1617
      %v1650 = vpack.c.b16 %v1618, %v1618
      %v1651 = vpack.c.b16 %v1619, %v1619
      %v1652 = vpack.c.b16 %v1620, %v1620
      %v1653 = vpack.c.b16 %v1621, %v1621
      %v1654 = vpack.c.b16 %v1622, %v1622
      %v1655 = vpack.c.b16 %v1623, %v1623
      %v1656 = vpack.c.b16 %v1624, %v1624
      %vm1689 = vcmask 125952
      %1690 = vst.msk [vmem:[%s177] sm:$0xf] %vm1689, %v1625
      %1691 = vst.msk [vmem:[%s177 + $0x4] sm:$0xf] %vm1689, %v1626
      %1692 = vst.msk [vmem:[%s177 + $0x8] sm:$0xf] %vm1689, %v1627
      %1693 = vst.msk [vmem:[%s177 + $0xc] sm:$0xf] %vm1689, %v1628
      %1694 = vst.msk [vmem:[%s177 + $0x10] sm:$0xf] %vm1689, %v1629
      %1695 = vst.msk [vmem:[%s177 + $0x14] sm:$0xf] %vm1689, %v1630
      %1696 = vst.msk [vmem:[%s177 + $0x18] sm:$0xf] %vm1689, %v1631
      %1697 = vst.msk [vmem:[%s177 + $0x1c] sm:$0xf] %vm1689, %v1632
      %1698 = vst.msk [vmem:[%s177 + $0x20] sm:$0xf] %vm1689, %v1633
      %1699 = vst.msk [vmem:[%s177 + $0x24] sm:$0xf] %vm1689, %v1634
      %1700 = vst.msk [vmem:[%s177 + $0x28] sm:$0xf] %vm1689, %v1635
      %1701 = vst.msk [vmem:[%s177 + $0x2c] sm:$0xf] %vm1689, %v1636
      %1702 = vst.msk [vmem:[%s177 + $0x30] sm:$0xf] %vm1689, %v1637
      %1703 = vst.msk [vmem:[%s177 + $0x34] sm:$0xf] %vm1689, %v1638
      %1704 = vst.msk [vmem:[%s177 + $0x38] sm:$0xf] %vm1689, %v1639
      %1705 = vst.msk [vmem:[%s177 + $0x3c] sm:$0xf] %vm1689, %v1640
      %1706 = vst.msk [vmem:[%s177 + $0x40] sm:$0xf] %vm1689, %v1641
      %1707 = vst.msk [vmem:[%s177 + $0x44] sm:$0xf] %vm1689, %v1642
      %1708 = vst.msk [vmem:[%s177 + $0x48] sm:$0xf] %vm1689, %v1643
      %1709 = vst.msk [vmem:[%s177 + $0x4c] sm:$0xf] %vm1689, %v1644
      %1710 = vst.msk [vmem:[%s177 + $0x50] sm:$0xf] %vm1689, %v1645
      %1711 = vst.msk [vmem:[%s177 + $0x54] sm:$0xf] %vm1689, %v1646
      %1712 = vst.msk [vmem:[%s177 + $0x58] sm:$0xf] %vm1689, %v1647
      %1713 = vst.msk [vmem:[%s177 + $0x5c] sm:$0xf] %vm1689, %v1648
      %1714 = vst.msk [vmem:[%s177 + $0x60] sm:$0xf] %vm1689, %v1649
      %1715 = vst.msk [vmem:[%s177 + $0x64] sm:$0xf] %vm1689, %v1650
      %1716 = vst.msk [vmem:[%s177 + $0x68] sm:$0xf] %vm1689, %v1651
      %1717 = vst.msk [vmem:[%s177 + $0x6c] sm:$0xf] %vm1689, %v1652
      %1718 = vst.msk [vmem:[%s177 + $0x70] sm:$0xf] %vm1689, %v1653
      %1719 = vst.msk [vmem:[%s177 + $0x74] sm:$0xf] %vm1689, %v1654
      %1720 = vst.msk [vmem:[%s177 + $0x78] sm:$0xf] %vm1689, %v1655
      %1721 = vst.msk [vmem:[%s177 + $0x7c] sm:$0xf] %vm1689, %v1656
      %p1722 = scmp.lt.s32.totalorder %s15, 1
      %s1723 = scalar_select %p1722, %s15, 1
      %s1724 = smul.addr %s1723, 32
      %s1725 = smul.addr %s1724, 4
      %s1726 = scalar_lea.vmem %s2, %s1725
      %p1727 = scmp.lt.s32.totalorder %s15, 1
      %s1728 = scalar_select %p1727, %s15, 1
      %s1729 = smul.addr %s1728, 2
      %s1730 = scalar_lea.vmem %s3, %s1729
      // Predicated region
      $region29: #{vae_up_forward.6} parent=27 // pred_check
        %p1731 = pneg %p80
      $region30: #{vae_up_forward.6} parent=27 // pred_check_branch
        %1733 = sbr.rel (%p1731) target = $region32
      $region31: #{vae_up_forward.6} parent=27 // pred_region
        _
      $region32: #{vae_up_forward.6} parent=27 // pred_fallthru
        _
      // Predicated region
      $region33: #{vae_up_forward.6} parent=27 // pred_check
        %p1734 = pneg %p106
      $region34: #{vae_up_forward.6} parent=27 // pred_check_branch
        %1736 = sbr.rel (%p1734) target = $region36
      $region35: #{vae_up_forward.6} parent=27 // pred_region
        _
      $region36: #{vae_up_forward.6} parent=27 // pred_fallthru
        _
    $region28: #{vae_up_forward.6} parent=5 // pred_fallthru
      _
    %p1737 = scmp.le.s32.totalorder 2, %s10
    // Predicated region
    $region37: #{vae_up_forward.6} parent=5 // pred_check
      %p1738 = pneg %p1737
    $region38: #{vae_up_forward.6} parent=5 // pred_check_branch
      %1740 = sbr.rel (%p1738) target = $region40
    $region39: #{vae_up_forward.6} parent=5 // pred_region
      %s1741 = ssub.s32 %s10, 2
      // Predicated region
      $region41: #{vae_up_forward.6} parent=39 // pred_check
        %p1742 = pneg %p86
      $region42: #{vae_up_forward.6} parent=39 // pred_check_branch
        %1744 = sbr.rel (%p1742) target = $region44
      $region43: #{vae_up_forward.6} parent=39 // pred_region
        %p1745 = scmp.lt.s32.totalorder %s16, 1
        %s1746 = scalar_select %p1745, %s16, 1
        %s1747 = smul.addr %s1746, 32
        %s1748 = smul.addr %s1747, 4
        %s1749 = scalar_lea.vmem %s2, %s1748
      $region44: #{vae_up_forward.6} parent=39 // pred_fallthru
        _
      // Predicated region
      $region45: #{vae_up_forward.6} parent=39 // pred_check
        %p1750 = pneg %p112
      $region46: #{vae_up_forward.6} parent=39 // pred_check_branch
        %1752 = sbr.rel (%p1750) target = $region48
      $region47: #{vae_up_forward.6} parent=39 // pred_region
        %p1753 = scmp.lt.s32.totalorder %s16, 1
        %s1754 = scalar_select %p1753, %s16, 1
        %s1755 = smul.addr %s1754, 2
        %s1756 = scalar_lea.vmem %s3, %s1755
      $region48: #{vae_up_forward.6} parent=39 // pred_fallthru
        _
    $region40: #{vae_up_forward.6} parent=5 // pred_fallthru
      _
  $region6: #{vae_up_forward.6} parent=0 // loop_footer
    %s14 = sadd.s32 1, %s10
  $region7: #{vae_up_forward.6} parent=0 // loop_footer_branch
    %9 = sbr.rel target = $region3
  $region8: #{vae_up_forward.6} parent=0 // loop_exit
    _

// kernel: vae_up_forward.7
$region0: #{vae_up_forward.7}
  #allocation0 [shape = 'u32[]', space=smem, size = 0x4, offset = 0x4, fixed_abs, tag = 'smem constant byte address 0x4 - core index']
  #allocation1 [shape = 'u32[144,128]{1,0:T(1,128)}', space=vmem, size = 0x12000, scoped, tag = 'internal scratch']
  %s0 = inlined_call_operand.vmem [shape: bf16[2,16,16,16], index: 0, kind: input, shape index: {}]
  %s1 = inlined_call_operand.vmem [shape: f32[2,1,16], index: 1, kind: input, shape index: {}]
  %s2 = inlined_call_operand.vmem [shape: f32[2,1,16], index: 2, kind: input, shape index: {}]
  %s3 = inlined_call_operand.vmem [shape: bf16[3,48,16], index: 3, kind: input, shape index: {}]
  %s4 = inlined_call_operand.vmem [shape: bf16[2,16,16,16], index: 4, kind: output, shape index: {0}]
  %s5 = inlined_call_operand.vmem [shape: f32[2,2,16], index: 5, kind: output, shape index: {1}]
  %6 = xla_tuple %s4, %s5
  %s7 = sld [smem:[#allocation0]]
  $region57: #{vae_up_forward.7} parent=0
    _
  %s9 = ssub.s32 1, %s7
  %s10 = scalar_select 0, %s9, %s7
  loop: start=0, step=1, limit=4
  $region2: #{vae_up_forward.7} parent=0 // loop_pre_header
    _
  $region3: #{vae_up_forward.7} parent=0 // loop_header
    %s12 = sphi 0, %s16
    %p13 = scmp.ge.s32.totalorder %s12, 4
    %s22 = sphi 0, %s24
    %s25 = sphi 0, %s22
    %s26 = sphi 0, %s25
    %s42 = sphi 0, %s26
    %s48 = sphi 0, %s50
    %s51 = sphi 0, %s48
    %s52 = sphi 0, %s51
    %s68 = sphi 0, %s52
    %s74 = sphi 0, %s76
    %s77 = sphi 0, %s74
    %s78 = sphi 0, %s77
    %s94 = sphi 0, %s78
    %s98 = sphi 0, %s98
    %s100 = sphi 0, %s98
    %s101 = sphi 0, %s100
    %s115 = sphi 0, %s101
    %s121 = sphi 0, %s123
    %s124 = sphi 0, %s121
    %s125 = sphi 0, %s124
    %s141 = sphi 0, %s125
    %s147 = sphi 0, %s149
    %s150 = sphi 0, %s147
    %s151 = sphi 0, %s150
    %s167 = sphi 0, %s151
  $region4: #{vae_up_forward.7} parent=0 // loop_header_branch
    %15 = sbr.rel (%p13) target = $region8
  $region5: #{vae_up_forward.7} parent=0 // loop_body
    %s17 = ssub.s32 %s12, 1
    %s18 = ssub.s32 %s12, 2
    %s19 = sadd.s32 %s12, 1
    %s20 = ssub.s32 %s12, %s19
    %p21 = scmp.eq.s32.totalorder %s20, 0
    %s23 = sadd.s32 %s22, 1
    %s24 = scalar_select %p21, %s22, %s23
    %p27 = pneg %p21
    %p28 = scmp.eq.s32.totalorder %s12, 1
    %p29 = por %p27, %p28
    %p30 = scmp.ne.s32.totalorder %s22, %s25
    %p31 = scmp.eq.s32.totalorder %s12, 0
    %p32 = por %p30, %p31
    %p33 = scmp.ne.s32.totalorder %s22, %s25
    %p34 = scmp.eq.s32.totalorder %s17, 1
    %p35 = por %p33, %p34
    %p36 = scmp.ne.s32.totalorder %s25, %s26
    %p37 = scmp.eq.s32.totalorder %s17, 0
    %p38 = por %p36, %p37
    %p39 = scmp.ne.s32.totalorder %s25, %s26
    %p40 = scmp.eq.s32.totalorder %s18, 1
    %p41 = por %p39, %p40
    %p43 = scmp.ne.s32.totalorder %s26, %s42
    %p44 = scmp.eq.s32.totalorder %s18, 0
    %p45 = por %p43, %p44
    %s46 = ssub.s32 %s12, %s19
    %p47 = scmp.eq.s32.totalorder %s46, 0
    %s49 = sadd.s32 %s48, 1
    %s50 = scalar_select %p47, %s48, %s49
    %p53 = pneg %p47
    %p54 = scmp.eq.s32.totalorder %s12, 1
    %p55 = por %p53, %p54
    %p56 = scmp.ne.s32.totalorder %s48, %s51
    %p57 = scmp.eq.s32.totalorder %s12, 0
    %p58 = por %p56, %p57
    %p59 = scmp.ne.s32.totalorder %s48, %s51
    %p60 = scmp.eq.s32.totalorder %s17, 1
    %p61 = por %p59, %p60
    %p62 = scmp.ne.s32.totalorder %s51, %s52
    %p63 = scmp.eq.s32.totalorder %s17, 0
    %p64 = por %p62, %p63
    %p65 = scmp.ne.s32.totalorder %s51, %s52
    %p66 = scmp.eq.s32.totalorder %s18, 1
    %p67 = por %p65, %p66
    %p69 = scmp.ne.s32.totalorder %s52, %s68
    %p70 = scmp.eq.s32.totalorder %s18, 0
    %p71 = por %p69, %p70
    %s72 = ssub.s32 %s12, %s19
    %p73 = scmp.eq.s32.totalorder %s72, 0
    %s75 = sadd.s32 %s74, 1
    %s76 = scalar_select %p73, %s74, %s75
    %p79 = pneg %p73
    %p80 = scmp.eq.s32.totalorder %s12, 1
    %p81 = por %p79, %p80
    %p82 = scmp.ne.s32.totalorder %s74, %s77
    %p83 = scmp.eq.s32.totalorder %s12, 0
    %p84 = por %p82, %p83
    %p85 = scmp.ne.s32.totalorder %s74, %s77
    %p86 = scmp.eq.s32.totalorder %s17, 1
    %p87 = por %p85, %p86
    %p88 = scmp.ne.s32.totalorder %s77, %s78
    %p89 = scmp.eq.s32.totalorder %s17, 0
    %p90 = por %p88, %p89
    %p91 = scmp.ne.s32.totalorder %s77, %s78
    %p92 = scmp.eq.s32.totalorder %s18, 1
    %p93 = por %p91, %p92
    %p95 = scmp.ne.s32.totalorder %s78, %s94
    %p96 = scmp.eq.s32.totalorder %s18, 0
    %p97 = por %p95, %p96
    %s99 = sadd.s32 %s98, 1
    %p102 = scmp.eq.s32.totalorder %s12, 1
    %p103 = scmp.ne.s32.totalorder %s98, %s100
    %p104 = scmp.eq.s32.totalorder %s12, 0
    %p105 = por %p103, %p104
    %p106 = scmp.ne.s32.totalorder %s98, %s100
    %p107 = scmp.eq.s32.totalorder %s17, 1
    %p108 = por %p106, %p107
    %p109 = scmp.ne.s32.totalorder %s100, %s101
    %p110 = scmp.eq.s32.totalorder %s17, 0
    %p111 = por %p109, %p110
    %p112 = scmp.ne.s32.totalorder %s100, %s101
    %p113 = scmp.eq.s32.totalorder %s18, 1
    %p114 = por %p112, %p113
    %p116 = scmp.ne.s32.totalorder %s101, %s115
    %p117 = scmp.eq.s32.totalorder %s18, 0
    %p118 = por %p116, %p117
    %s119 = ssub.s32 %s12, %s19
    %p120 = scmp.eq.s32.totalorder %s119, 0
    %s122 = sadd.s32 %s121, 1
    %s123 = scalar_select %p120, %s121, %s122
    %p126 = pneg %p120
    %p127 = scmp.eq.s32.totalorder %s12, 1
    %p128 = por %p126, %p127
    %p129 = scmp.ne.s32.totalorder %s121, %s124
    %p130 = scmp.eq.s32.totalorder %s12, 0
    %p131 = por %p129, %p130
    %p132 = scmp.ne.s32.totalorder %s121, %s124
    %p133 = scmp.eq.s32.totalorder %s17, 1
    %p134 = por %p132, %p133
    %p135 = scmp.ne.s32.totalorder %s124, %s125
    %p136 = scmp.eq.s32.totalorder %s17, 0
    %p137 = por %p135, %p136
    %p138 = scmp.ne.s32.totalorder %s124, %s125
    %p139 = scmp.eq.s32.totalorder %s18, 1
    %p140 = por %p138, %p139
    %p142 = scmp.ne.s32.totalorder %s125, %s141
    %p143 = scmp.eq.s32.totalorder %s18, 0
    %p144 = por %p142, %p143
    %s145 = ssub.s32 %s12, %s19
    %p146 = scmp.eq.s32.totalorder %s145, 0
    %s148 = sadd.s32 %s147, 1
    %s149 = scalar_select %p146, %s147, %s148
    %p152 = pneg %p146
    %p153 = scmp.eq.s32.totalorder %s12, 1
    %p154 = por %p152, %p153
    %p155 = scmp.ne.s32.totalorder %s147, %s150
    %p156 = scmp.eq.s32.totalorder %s12, 0
    %p157 = por %p155, %p156
    %p158 = scmp.ne.s32.totalorder %s147, %s150
    %p159 = scmp.eq.s32.totalorder %s17, 1
    %p160 = por %p158, %p159
    %p161 = scmp.ne.s32.totalorder %s150, %s151
    %p162 = scmp.eq.s32.totalorder %s17, 0
    %p163 = por %p161, %p162
    %p164 = scmp.ne.s32.totalorder %s150, %s151
    %p165 = scmp.eq.s32.totalorder %s18, 1
    %p166 = por %p164, %p165
    %p168 = scmp.ne.s32.totalorder %s151, %s167
    %p169 = scmp.eq.s32.totalorder %s18, 0
    %p170 = por %p168, %p169
    %p171 = scmp.le.s32.totalorder 1, %s12
    %p172 = scmp.lt.s32.totalorder %s12, 3
    %p173 = pnand %p171, %p172
    %p174 = pneg %p173
    // Predicated region
    $region9: #{vae_up_forward.7} parent=5 // pred_check
      _
    $region10: #{vae_up_forward.7} parent=5 // pred_check_branch
      %176 = sbr.rel (%p173) target = $region12
    $region11: #{vae_up_forward.7} parent=5 // pred_region
      %s177 = ssub.s32 %s12, 1
      // Predicated region
      $region13: #{vae_up_forward.7} parent=11 // pred_check
        %p178 = pneg %p111
      $region14: #{vae_up_forward.7} parent=11 // pred_check_branch
        %180 = sbr.rel (%p178) target = $region16
      $region15: #{vae_up_forward.7} parent=11 // pred_region
        _
      $region16: #{vae_up_forward.7} parent=11 // pred_fallthru
        _
    $region12: #{vae_up_forward.7} parent=5 // pred_fallthru
      _
    %p181 = scmp.lt.s32.totalorder %s12, 2
    // Predicated region
    $region17: #{vae_up_forward.7} parent=5 // pred_check
      %p182 = pneg %p181
    $region18: #{vae_up_forward.7} parent=5 // pred_check_branch
      %184 = sbr.rel (%p182) target = $region20
    $region19: #{vae_up_forward.7} parent=5 // pred_region
      // Predicated region
      $region21: #{vae_up_forward.7} parent=19 // pred_check
        %p185 = pneg %p32
      $region22: #{vae_up_forward.7} parent=19 // pred_check_branch
        %187 = sbr.rel (%p185) target = $region24
      $region23: #{vae_up_forward.7} parent=19 // pred_region
        %p188 = scmp.lt.s32.totalorder %s12, 1
        %s189 = scalar_select %p188, %s12, 1
        %s190 = smul.addr %s189, 32
        %s191 = smul.addr %s190, 4
        %s192 = scalar_lea.vmem %s0, %s191
      $region24: #{vae_up_forward.7} parent=19 // pred_fallthru
        _
      // Predicated region
      $region25: #{vae_up_forward.7} parent=19 // pred_check
        %p193 = pneg %p58
      $region26: #{vae_up_forward.7} parent=19 // pred_check_branch
        %195 = sbr.rel (%p193) target = $region28
      $region27: #{vae_up_forward.7} parent=19 // pred_region
        %p196 = scmp.lt.s32.totalorder %s12, 1
        %s197 = scalar_select %p196, %s12, 1
        %s198 = scalar_lea.vmem %s1, %s197
      $region28: #{vae_up_forward.7} parent=19 // pred_fallthru
        _
      // Predicated region
      $region29: #{vae_up_forward.7} parent=19 // pred_check
        %p199 = pneg %p84
      $region30: #{vae_up_forward.7} parent=19 // pred_check_branch
        %201 = sbr.rel (%p199) target = $region32
      $region31: #{vae_up_forward.7} parent=19 // pred_region
        %p202 = scmp.lt.s32.totalorder %s12, 1
        %s203 = scalar_select %p202, %s12, 1
        %s204 = scalar_lea.vmem %s2, %s203
      $region32: #{vae_up_forward.7} parent=19 // pred_fallthru
        _
    $region20: #{vae_up_forward.7} parent=5 // pred_fallthru
      _
    %p205 = scmp.le.s32.totalorder 1, %s12
    %p206 = scmp.lt.s32.totalorder %s12, 3
    %p207 = pnand %p205, %p206
    %p208 = pneg %p207
    // Predicated region
    $region33: #{vae_up_forward.7} parent=5 // pred_check
      _
    $region34: #{vae_up_forward.7} parent=5 // pred_check_branch
      %210 = sbr.rel (%p207) target = $region36
    $region35: #{vae_up_forward.7} parent=5 // pred_region
      %s211 = ssub.s32 %s12, 1
      %p212 = scmp.lt.s32.totalorder %s17, 1
      %s213 = scalar_select %p212, %s17, 1
      %s214 = smul.addr %s213, 32
      %s215 = smul.addr %s214, 4
      %s216 = scalar_lea.vmem %s0, %s215
      %p217 = pneg %p38
      %p218 = pneg %p35
      %p219 = scmp.lt.s32.totalorder %s17, 1
      %s220 = scalar_select %p219, %s17, 1
      %s221 = scalar_lea.vmem %s1, %s220
      %p222 = pneg %p64
      %p223 = pneg %p61
      %p224 = scmp.lt.s32.totalorder %s17, 1
      %s225 = scalar_select %p224, %s17, 1
      %s226 = scalar_lea.vmem %s2, %s225
      %p227 = pneg %p90
      %p228 = pneg %p87
      %p229 = pneg %p111
      %p230 = pneg %p108
      %p231 = pneg %p137
      %p232 = pneg %p134
      %p233 = scmp.lt.s32.totalorder %s17, 1
      %s234 = scalar_select %p233, %s17, 1
      %s235 = smul.addr %s234, 32
      %s236 = smul.addr %s235, 4
      %s237 = scalar_lea.vmem %s4, %s236
      %p238 = pneg %p163
      %p239 = pneg %p160
      %p240 = scmp.lt.s32.totalorder %s17, 1
      %s241 = scalar_select %p240, %s17, 1
      %s242 = smul.addr %s241, 2
      %s243 = scalar_lea.vmem %s5, %s242
      %p244 = scmp.lt.s32.totalorder %s17, 1
      %s245 = scalar_select %p244, %s17, 1
      %s246 = smul.addr %s245, 32
      %s247 = smul.addr %s246, 4
      %s248 = scalar_lea.vmem %s0, %s247
      %p249 = scmp.lt.s32.totalorder %s17, 1
      %s250 = scalar_select %p249, %s17, 1
      %s251 = scalar_lea.vmem %s1, %s250
      %p252 = scmp.lt.s32.totalorder %s17, 1
      %s253 = scalar_select %p252, %s17, 1
      %s254 = scalar_lea.vmem %s2, %s253
      %p255 = scmp.lt.s32.totalorder %s17, 1
      %s256 = scalar_select %p255, %s17, 1
      %s257 = smul.addr %s256, 32
      %s258 = smul.addr %s257, 4
      %s259 = scalar_lea.vmem %s4, %s258
      %p260 = scmp.lt.s32.totalorder %s17, 1
      %s261 = scalar_select %p260, %s17, 1
      %s262 = smul.addr %s261, 2
      %s263 = scalar_lea.vmem %s5, %s262
      %v265 = vld [vmem:[%s248] sm:$0xf]
      %v266 = vld [vmem:[%s248 + $0x4] sm:$0xf]
      %v267 = vld [vmem:[%s248 + $0x8] sm:$0xf]
      %v268 = vld [vmem:[%s248 + $0xc] sm:$0xf]
      %v269 = vld [vmem:[%s248 + $0x10] sm:$0xf]
      %v270 = vld [vmem:[%s248 + $0x14] sm:$0xf]
      %v271 = vld [vmem:[%s248 + $0x18] sm:$0xf]
      %v272 = vld [vmem:[%s248 + $0x1c] sm:$0xf]
      %v273 = vld [vmem:[%s248 + $0x20] sm:$0xf]
      %v274 = vld [vmem:[%s248 + $0x24] sm:$0xf]
      %v275 = vld [vmem:[%s248 + $0x28] sm:$0xf]
      %v276 = vld [vmem:[%s248 + $0x2c] sm:$0xf]
      %v277 = vld [vmem:[%s248 + $0x30] sm:$0xf]
      %v278 = vld [vmem:[%s248 + $0x34] sm:$0xf]
      %v279 = vld [vmem:[%s248 + $0x38] sm:$0xf]
      %v280 = vld [vmem:[%s248 + $0x3c] sm:$0xf]
      %v281 = vld [vmem:[%s248 + $0x40] sm:$0xf]
      %v282 = vld [vmem:[%s248 + $0x44] sm:$0xf]
      %v283 = vld [vmem:[%s248 + $0x48] sm:$0xf]
      %v284 = vld [vmem:[%s248 + $0x4c] sm:$0xf]
      %v285 = vld [vmem:[%s248 + $0x50] sm:$0xf]
      %v286 = vld [vmem:[%s248 + $0x54] sm:$0xf]
      %v287 = vld [vmem:[%s248 + $0x58] sm:$0xf]
      %v288 = vld [vmem:[%s248 + $0x5c] sm:$0xf]
      %v289 = vld [vmem:[%s248 + $0x60] sm:$0xf]
      %v290 = vld [vmem:[%s248 + $0x64] sm:$0xf]
      %v291 = vld [vmem:[%s248 + $0x68] sm:$0xf]
      %v292 = vld [vmem:[%s248 + $0x6c] sm:$0xf]
      %v293 = vld [vmem:[%s248 + $0x70] sm:$0xf]
      %v294 = vld [vmem:[%s248 + $0x74] sm:$0xf]
      %v295 = vld [vmem:[%s248 + $0x78] sm:$0xf]
      %v296 = vld [vmem:[%s248 + $0x7c] sm:$0xf]
      %v297 = vld [vmem:[%s251] sm:$0x1]
      %v298 = vld [vmem:[%s254] sm:$0x1]
      %v299 = vunpack.c.l.bf16 %v265
      %v300 = vunpack.c.l.bf16 %v266
      %v301 = vunpack.c.l.bf16 %v267
      %v302 = vunpack.c.l.bf16 %v268
      %v303 = vunpack.c.l.bf16 %v269
      %v304 = vunpack.c.l.bf16 %v270
      %v305 = vunpack.c.l.bf16 %v271
      %v306 = vunpack.c.l.bf16 %v272
      %v307 = vunpack.c.l.bf16 %v273
      %v308 = vunpack.c.l.bf16 %v274
      %v309 = vunpack.c.l.bf16 %v275
      %v310 = vunpack.c.l.bf16 %v276
      %v311 = vunpack.c.l.bf16 %v277
      %v312 = vunpack.c.l.bf16 %v278
      %v313 = vunpack.c.l.bf16 %v279
      %v314 = vunpack.c.l.bf16 %v280
      %v315 = vunpack.c.l.bf16 %v281
      %v316 = vunpack.c.l.bf16 %v282
      %v317 = vunpack.c.l.bf16 %v283
      %v318 = vunpack.c.l.bf16 %v284
      %v319 = vunpack.c.l.bf16 %v285
      %v320 = vunpack.c.l.bf16 %v286
      %v321 = vunpack.c.l.bf16 %v287
      %v322 = vunpack.c.l.bf16 %v288
      %v323 = vunpack.c.l.bf16 %v289
      %v324 = vunpack.c.l.bf16 %v290
      %v325 = vunpack.c.l.bf16 %v291
      %v326 = vunpack.c.l.bf16 %v292
      %v327 = vunpack.c.l.bf16 %v293
      %v328 = vunpack.c.l.bf16 %v294
      %v329 = vunpack.c.l.bf16 %v295
      %v330 = vunpack.c.l.bf16 %v296
      %v332 = vlaneseq
      %v333 = vshrl.u32 %v332, 7
      %v334 = vsub.s32 0, %v333
      %v335 = vrot.slane %v297, %v334
      %v337 = vmul.f32 %v299, %v335
      %v338 = vmul.f32 %v300, %v335
      %v339 = vmul.f32 %v301, %v335
      %v340 = vmul.f32 %v302, %v335
      %v341 = vmul.f32 %v303, %v335
      %v342 = vmul.f32 %v304, %v335
      %v343 = vmul.f32 %v305, %v335
      %v344 = vmul.f32 %v306, %v335
      %v345 = vmul.f32 %v307, %v335
      %v346 = vmul.f32 %v308, %v335
      %v347 = vmul.f32 %v309, %v335
      %v348 = vmul.f32 %v310, %v335
      %v349 = vmul.f32 %v311, %v335
      %v350 = vmul.f32 %v312, %v335
      %v351 = vmul.f32 %v313, %v335
      %v352 = vmul.f32 %v314, %v335
      %v353 = vmul.f32 %v315, %v335
      %v354 = vmul.f32 %v316, %v335
      %v355 = vmul.f32 %v317, %v335
      %v356 = vmul.f32 %v318, %v335
      %v357 = vmul.f32 %v319, %v335
      %v358 = vmul.f32 %v320, %v335
      %v359 = vmul.f32 %v321, %v335
      %v360 = vmul.f32 %v322, %v335
      %v361 = vmul.f32 %v323, %v335
      %v362 = vmul.f32 %v324, %v335
      %v363 = vmul.f32 %v325, %v335
      %v364 = vmul.f32 %v326, %v335
      %v365 = vmul.f32 %v327, %v335
      %v366 = vmul.f32 %v328, %v335
      %v367 = vmul.f32 %v329, %v335
      %v368 = vmul.f32 %v330, %v335
      %v370 = vlaneseq
      %v371 = vshrl.u32 %v370, 7
      %v372 = vsub.s32 0, %v371
      %v373 = vrot.slane %v298, %v372
      %v375 = vadd.f32 %v337, %v373
      %v376 = vadd.f32 %v338, %v373
      %v377 = vadd.f32 %v339, %v373
      %v378 = vadd.f32 %v340, %v373
      %v379 = vadd.f32 %v341, %v373
      %v380 = vadd.f32 %v342, %v373
      %v381 = vadd.f32 %v343, %v373
      %v382 = vadd.f32 %v344, %v373
      %v383 = vadd.f32 %v345, %v373
      %v384 = vadd.f32 %v346, %v373
      %v385 = vadd.f32 %v347, %v373
      %v386 = vadd.f32 %v348, %v373
      %v387 = vadd.f32 %v349, %v373
      %v388 = vadd.f32 %v350, %v373
      %v389 = vadd.f32 %v351, %v373
      %v390 = vadd.f32 %v352, %v373
      %v391 = vadd.f32 %v353, %v373
      %v392 = vadd.f32 %v354, %v373
      %v393 = vadd.f32 %v355, %v373
      %v394 = vadd.f32 %v356, %v373
      %v395 = vadd.f32 %v357, %v373
      %v396 = vadd.f32 %v358, %v373
      %v397 = vadd.f32 %v359, %v373
      %v398 = vadd.f32 %v360, %v373
      %v399 = vadd.f32 %v361, %v373
      %v400 = vadd.f32 %v362, %v373
      %v401 = vadd.f32 %v363, %v373
      %v402 = vadd.f32 %v364, %v373
      %v403 = vadd.f32 %v365, %v373
      %v404 = vadd.f32 %v366, %v373
      %v405 = vadd.f32 %v367, %v373
      %v406 = vadd.f32 %v368, %v373
      %v407 = vmax.f32 %v375, 0.0
      %v408 = vmax.f32 %v376, 0.0
      %v409 = vmax.f32 %v377, 0.0
      %v410 = vmax.f32 %v378, 0.0
      %v411 = vmax.f32 %v379, 0.0
      %v412 = vmax.f32 %v380, 0.0
      %v413 = vmax.f32 %v381, 0.0
      %v414 = vmax.f32 %v382, 0.0
      %v415 = vmax.f32 %v383, 0.0
      %v416 = vmax.f32 %v384, 0.0
      %v417 = vmax.f32 %v385, 0.0
      %v418 = vmax.f32 %v386, 0.0
      %v419 = vmax.f32 %v387, 0.0
      %v420 = vmax.f32 %v388, 0.0
      %v421 = vmax.f32 %v389, 0.0
      %v422 = vmax.f32 %v390, 0.0
      %v423 = vmax.f32 %v391, 0.0
      %v424 = vmax.f32 %v392, 0.0
      %v425 = vmax.f32 %v393, 0.0
      %v426 = vmax.f32 %v394, 0.0
      %v427 = vmax.f32 %v395, 0.0
      %v428 = vmax.f32 %v396, 0.0
      %v429 = vmax.f32 %v397, 0.0
      %v430 = vmax.f32 %v398, 0.0
      %v431 = vmax.f32 %v399, 0.0
      %v432 = vmax.f32 %v400, 0.0
      %v433 = vmax.f32 %v401, 0.0
      %v434 = vmax.f32 %v402, 0.0
      %v435 = vmax.f32 %v403, 0.0
      %v436 = vmax.f32 %v404, 0.0
      %v437 = vmax.f32 %v405, 0.0
      %v438 = vmax.f32 %v406, 0.0
      %vm471 = vcmask 1040384
      %v472 = vrot.slane %v407, 7
      %v473 = vrot.slane %v408, 7
      %v474 = vsel %vm471, %v472, %v473
      %v475 = vrot.slane %v409, 7
      %v476 = vrot.slane %v410, 7
      %v477 = vsel %vm471, %v475, %v476
      %v478 = vrot.slane %v411, 7
      %v479 = vrot.slane %v412, 7
      %v480 = vsel %vm471, %v478, %v479
      %v481 = vrot.slane %v413, 7
      %v482 = vrot.slane %v414, 7
      %v483 = vsel %vm471, %v481, %v482
      %v484 = vrot.slane %v415, 7
      %v485 = vrot.slane %v416, 7
      %v486 = vsel %vm471, %v484, %v485
      %v487 = vrot.slane %v417, 7
      %v488 = vrot.slane %v418, 7
      %v489 = vsel %vm471, %v487, %v488
      %v490 = vrot.slane %v419, 7
      %v491 = vrot.slane %v420, 7
      %v492 = vsel %vm471, %v490, %v491
      %v493 = vrot.slane %v421, 7
      %v494 = vrot.slane %v422, 7
      %v495 = vsel %vm471, %v493, %v494
      %v496 = vrot.slane %v423, 7
      %v497 = vrot.slane %v424, 7
      %v498 = vsel %vm471, %v496, %v497
      %v499 = vrot.slane %v425, 7
      %v500 = vrot.slane %v426, 7
      %v501 = vsel %vm471, %v499, %v500
      %v502 = vrot.slane %v427, 7
      %v503 = vrot.slane %v428, 7
      %v504 = vsel %vm471, %v502, %v503
      %v505 = vrot.slane %v429, 7
      %v506 = vrot.slane %v430, 7
      %v507 = vsel %vm471, %v505, %v506
      %v508 = vrot.slane %v431, 7
      %v509 = vrot.slane %v432, 7
      %v510 = vsel %vm471, %v508, %v509
      %v511 = vrot.slane %v433, 7
      %v512 = vrot.slane %v434, 7
      %v513 = vsel %vm471, %v511, %v512
      %v514 = vrot.slane %v435, 7
      %v515 = vrot.slane %v436, 7
      %v516 = vsel %vm471, %v514, %v515
      %v517 = vrot.slane %v437, 7
      %v518 = vrot.slane %v438, 7
      %v519 = vsel %vm471, %v517, %v518
      %v552 = vsel %vm471, 0.0, %v472
      %v553 = vsel %vm471, 0.0, %v475
      %v554 = vsel %vm471, 0.0, %v478
      %v555 = vsel %vm471, 0.0, %v481
      %v556 = vsel %vm471, 0.0, %v484
      %v557 = vsel %vm471, 0.0, %v487
      %v558 = vsel %vm471, 0.0, %v490
      %v559 = vsel %vm471, 0.0, %v493
      %v560 = vsel %vm471, 0.0, %v496
      %v561 = vsel %vm471, 0.0, %v499
      %v562 = vsel %vm471, 0.0, %v502
      %v563 = vsel %vm471, 0.0, %v505
      %v564 = vsel %vm471, 0.0, %v508
      %v565 = vsel %vm471, 0.0, %v511
      %v566 = vsel %vm471, 0.0, %v514
      %v567 = vsel %vm471, 0.0, %v517
      %vm568 = vcmask 1046528
      %v569 = vrot.slane %v407, 1
      %v570 = vrot.slane %v408, 1
      %v571 = vsel %vm568, %v569, %v570
      %v572 = vrot.slane %v409, 1
      %v573 = vrot.slane %v410, 1
      %v574 = vsel %vm568, %v572, %v573
      %v575 = vrot.slane %v411, 1
      %v576 = vrot.slane %v412, 1
      %v577 = vsel %vm568, %v575, %v576
      %v578 = vrot.slane %v413, 1
      %v579 = vrot.slane %v414, 1
      %v580 = vsel %vm568, %v578, %v579
      %v581 = vrot.slane %v415, 1
      %v582 = vrot.slane %v416, 1
      %v583 = vsel %vm568, %v581, %v582
      %v584 = vrot.slane %v417, 1
      %v585 = vrot.slane %v418, 1
      %v586 = vsel %vm568, %v584, %v585
      %v587 = vrot.slane %v419, 1
      %v588 = vrot.slane %v420, 1
      %v589 = vsel %vm568, %v587, %v588
      %v590 = vrot.slane %v421, 1
      %v591 = vrot.slane %v422, 1
      %v592 = vsel %vm568, %v590, %v591
      %v593 = vrot.slane %v423, 1
      %v594 = vrot.slane %v424, 1
      %v595 = vsel %vm568, %v593, %v594
      %v596 = vrot.slane %v425, 1
      %v597 = vrot.slane %v426, 1
      %v598 = vsel %vm568, %v596, %v597
      %v599 = vrot.slane %v427, 1
      %v600 = vrot.slane %v428, 1
      %v601 = vsel %vm568, %v599, %v600
      %v602 = vrot.slane %v429, 1
      %v603 = vrot.slane %v430, 1
      %v604 = vsel %vm568, %v602, %v603
      %v605 = vrot.slane %v431, 1
      %v606 = vrot.slane %v432, 1
      %v607 = vsel %vm568, %v605, %v606
      %v608 = vrot.slane %v433, 1
      %v609 = vrot.slane %v434, 1
      %v610 = vsel %vm568, %v608, %v609
      %v611 = vrot.slane %v435, 1
      %v612 = vrot.slane %v436, 1
      %v613 = vsel %vm568, %v611, %v612
      %v614 = vrot.slane %v437, 1
      %v615 = vrot.slane %v438, 1
      %v616 = vsel %vm568, %v614, %v615
      %v633 = vsel %vm568, %v570, 0.0
      %v634 = vsel %vm568, %v573, 0.0
      %v635 = vsel %vm568, %v576, 0.0
      %v636 = vsel %vm568, %v579, 0.0
      %v637 = vsel %vm568, %v582, 0.0
      %v638 = vsel %vm568, %v585, 0.0
      %v639 = vsel %vm568, %v588, 0.0
      %v640 = vsel %vm568, %v591, 0.0
      %v641 = vsel %vm568, %v594, 0.0
      %v642 = vsel %vm568, %v597, 0.0
      %v643 = vsel %vm568, %v600, 0.0
      %v644 = vsel %vm568, %v603, 0.0
      %v645 = vsel %vm568, %v606, 0.0
      %v646 = vsel %vm568, %v609, 0.0
      %v647 = vsel %vm568, %v612, 0.0
      %v648 = vsel %vm568, %v615, 0.0
      %649 = vrot.lane.b32.xlu0 %v407, 16
      %v650 = vpop.permute.xlu0 %649
      %651 = vrot.lane.b32.xlu0 %v408, 16
      %v652 = vpop.permute.xlu0 %651
      %653 = vrot.lane.b32.xlu0 %v409, 16
      %v654 = vpop.permute.xlu0 %653
      %655 = vrot.lane.b32.xlu0 %v410, 16
      %v656 = vpop.permute.xlu0 %655
      %657 = vrot.lane.b32.xlu0 %v411, 16
      %v658 = vpop.permute.xlu0 %657
      %659 = vrot.lane.b32.xlu0 %v412, 16
      %v660 = vpop.permute.xlu0 %659
      %661 = vrot.lane.b32.xlu0 %v413, 16
      %v662 = vpop.permute.xlu0 %661
      %663 = vrot.lane.b32.xlu0 %v414, 16
      %v664 = vpop.permute.xlu0 %663
      %665 = vrot.lane.b32.xlu0 %v415, 16
      %v666 = vpop.permute.xlu0 %665
      %667 = vrot.lane.b32.xlu0 %v416, 16
      %v668 = vpop.permute.xlu0 %667
      %669 = vrot.lane.b32.xlu0 %v417, 16
      %v670 = vpop.permute.xlu0 %669
      %671 = vrot.lane.b32.xlu0 %v418, 16
      %v672 = vpop.permute.xlu0 %671
      %673 = vrot.lane.b32.xlu0 %v419, 16
      %v674 = vpop.permute.xlu0 %673
      %675 = vrot.lane.b32.xlu0 %v420, 16
      %v676 = vpop.permute.xlu0 %675
      %677 = vrot.lane.b32.xlu0 %v421, 16
      %v678 = vpop.permute.xlu0 %677
      %679 = vrot.lane.b32.xlu0 %v422, 16
      %v680 = vpop.permute.xlu0 %679
      %681 = vrot.lane.b32.xlu0 %v423, 16
      %v682 = vpop.permute.xlu0 %681
      %683 = vrot.lane.b32.xlu0 %v424, 16
      %v684 = vpop.permute.xlu0 %683
      %685 = vrot.lane.b32.xlu0 %v425, 16
      %v686 = vpop.permute.xlu0 %685
      %687 = vrot.lane.b32.xlu0 %v426, 16
      %v688 = vpop.permute.xlu0 %687
      %689 = vrot.lane.b32.xlu0 %v427, 16
      %v690 = vpop.permute.xlu0 %689
      %691 = vrot.lane.b32.xlu0 %v428, 16
      %v692 = vpop.permute.xlu0 %691
      %693 = vrot.lane.b32.xlu0 %v429, 16
      %v694 = vpop.permute.xlu0 %693
      %695 = vrot.lane.b32.xlu0 %v430, 16
      %v696 = vpop.permute.xlu0 %695
      %697 = vrot.lane.b32.xlu0 %v431, 16
      %v698 = vpop.permute.xlu0 %697
      %699 = vrot.lane.b32.xlu0 %v432, 16
      %v700 = vpop.permute.xlu0 %699
      %701 = vrot.lane.b32.xlu0 %v433, 16
      %v702 = vpop.permute.xlu0 %701
      %703 = vrot.lane.b32.xlu0 %v434, 16
      %v704 = vpop.permute.xlu0 %703
      %705 = vrot.lane.b32.xlu0 %v435, 16
      %v706 = vpop.permute.xlu0 %705
      %707 = vrot.lane.b32.xlu0 %v436, 16
      %v708 = vpop.permute.xlu0 %707
      %709 = vrot.lane.b32.xlu0 %v437, 16
      %v710 = vpop.permute.xlu0 %709
      %711 = vrot.lane.b32.xlu0 %v438, 16
      %v712 = vpop.permute.xlu0 %711
      %761 = vrot.lane.b32.xlu0 %v571, 32
      %v762 = vpop.permute.xlu0 %761
      %763 = vrot.lane.b32.xlu0 %v633, 32
      %v764 = vpop.permute.xlu0 %763
      %765 = vrot.lane.b32.xlu0 %v574, 32
      %v766 = vpop.permute.xlu0 %765
      %767 = vrot.lane.b32.xlu0 %v634, 32
      %v768 = vpop.permute.xlu0 %767
      %769 = vrot.lane.b32.xlu0 %v577, 32
      %v770 = vpop.permute.xlu0 %769
      %771 = vrot.lane.b32.xlu0 %v635, 32
      %v772 = vpop.permute.xlu0 %771
      %773 = vrot.lane.b32.xlu0 %v580, 32
      %v774 = vpop.permute.xlu0 %773
      %775 = vrot.lane.b32.xlu0 %v636, 32
      %v776 = vpop.permute.xlu0 %775
      %777 = vrot.lane.b32.xlu0 %v583, 32
      %v778 = vpop.permute.xlu0 %777
      %779 = vrot.lane.b32.xlu0 %v637, 32
      %v780 = vpop.permute.xlu0 %779
      %781 = vrot.lane.b32.xlu0 %v586, 32
      %v782 = vpop.permute.xlu0 %781
      %783 = vrot.lane.b32.xlu0 %v638, 32
      %v784 = vpop.permute.xlu0 %783
      %785 = vrot.lane.b32.xlu0 %v589, 32
      %v786 = vpop.permute.xlu0 %785
      %787 = vrot.lane.b32.xlu0 %v639, 32
      %v788 = vpop.permute.xlu0 %787
      %789 = vrot.lane.b32.xlu0 %v592, 32
      %v790 = vpop.permute.xlu0 %789
      %791 = vrot.lane.b32.xlu0 %v640, 32
      %v792 = vpop.permute.xlu0 %791
      %793 = vrot.lane.b32.xlu0 %v595, 32
      %v794 = vpop.permute.xlu0 %793
      %795 = vrot.lane.b32.xlu0 %v641, 32
      %v796 = vpop.permute.xlu0 %795
      %797 = vrot.lane.b32.xlu0 %v598, 32
      %v798 = vpop.permute.xlu0 %797
      %799 = vrot.lane.b32.xlu0 %v642, 32
      %v800 = vpop.permute.xlu0 %799
      %801 = vrot.lane.b32.xlu0 %v601, 32
      %v802 = vpop.permute.xlu0 %801
      %803 = vrot.lane.b32.xlu0 %v643, 32
      %v804 = vpop.permute.xlu0 %803
      %805 = vrot.lane.b32.xlu0 %v604, 32
      %v806 = vpop.permute.xlu0 %805
      %807 = vrot.lane.b32.xlu0 %v644, 32
      %v808 = vpop.permute.xlu0 %807
      %809 = vrot.lane.b32.xlu0 %v607, 32
      %v810 = vpop.permute.xlu0 %809
      %811 = vrot.lane.b32.xlu0 %v645, 32
      %v812 = vpop.permute.xlu0 %811
      %813 = vrot.lane.b32.xlu0 %v610, 32
      %v814 = vpop.permute.xlu0 %813
      %815 = vrot.lane.b32.xlu0 %v646, 32
      %v816 = vpop.permute.xlu0 %815
      %817 = vrot.lane.b32.xlu0 %v613, 32
      %v818 = vpop.permute.xlu0 %817
      %819 = vrot.lane.b32.xlu0 %v647, 32
      %v820 = vpop.permute.xlu0 %819
      %821 = vrot.lane.b32.xlu0 %v616, 32
      %v822 = vpop.permute.xlu0 %821
      %823 = vrot.lane.b32.xlu0 %v648, 32
      %v824 = vpop.permute.xlu0 %823
      %vm857 = vcmask 130048
      %v858 = vsel %vm857, %v552, %v650
      %v859 = vsel %vm857, %v474, %v652
      %v860 = vsel %vm857, %v553, %v654
      %v861 = vsel %vm857, %v477, %v656
      %v862 = vsel %vm857, %v554, %v658
      %v863 = vsel %vm857, %v480, %v660
      %v864 = vsel %vm857, %v555, %v662
      %v865 = vsel %vm857, %v483, %v664
      %v866 = vsel %vm857, %v556, %v666
      %v867 = vsel %vm857, %v486, %v668
      %v868 = vsel %vm857, %v557, %v670
      %v869 = vsel %vm857, %v489, %v672
      %v870 = vsel %vm857, %v558, %v674
      %v871 = vsel %vm857, %v492, %v676
      %v872 = vsel %vm857, %v559, %v678
      %v873 = vsel %vm857, %v495, %v680
      %v874 = vsel %vm857, %v560, %v682
      %v875 = vsel %vm857, %v498, %v684
      %v876 = vsel %vm857, %v561, %v686
      %v877 = vsel %vm857, %v501, %v688
      %v878 = vsel %vm857, %v562, %v690
      %v879 = vsel %vm857, %v504, %v692
      %v880 = vsel %vm857, %v563, %v694
      %v881 = vsel %vm857, %v507, %v696
      %v882 = vsel %vm857, %v564, %v698
      %v883 = vsel %vm857, %v510, %v700
      %v884 = vsel %vm857, %v565, %v702
      %v885 = vsel %vm857, %v513, %v704
      %v886 = vsel %vm857, %v566, %v706
      %v887 = vsel %vm857, %v516, %v708
      %v888 = vsel %vm857, %v567, %v710
      %v889 = vsel %vm857, %v519, %v712
      %vm890 = vcmask 261120
      %v891 = vsel %vm890, %v858, %v762
      %v892 = vsel %vm890, %v859, %v764
      %v893 = vsel %vm890, %v860, %v766
      %v894 = vsel %vm890, %v861, %v768
      %v895 = vsel %vm890, %v862, %v770
      %v896 = vsel %vm890, %v863, %v772
      %v897 = vsel %vm890, %v864, %v774
      %v898 = vsel %vm890, %v865, %v776
      %v899 = vsel %vm890, %v866, %v778
      %v900 = vsel %vm890, %v867, %v780
      %v901 = vsel %vm890, %v868, %v782
      %v902 = vsel %vm890, %v869, %v784
      %v903 = vsel %vm890, %v870, %v786
      %v904 = vsel %vm890, %v871, %v788
      %v905 = vsel %vm890, %v872, %v790
      %v906 = vsel %vm890, %v873, %v792
      %v907 = vsel %vm890, %v874, %v794
      %v908 = vsel %vm890, %v875, %v796
      %v909 = vsel %vm890, %v876, %v798
      %v910 = vsel %vm890, %v877, %v800
      %v911 = vsel %vm890, %v878, %v802
      %v912 = vsel %vm890, %v879, %v804
      %v913 = vsel %vm890, %v880, %v806
      %v914 = vsel %vm890, %v881, %v808
      %v915 = vsel %vm890, %v882, %v810
      %v916 = vsel %vm890, %v883, %v812
      %v917 = vsel %vm890, %v884, %v814
      %v918 = vsel %vm890, %v885, %v816
      %v919 = vsel %vm890, %v886, %v818
      %v920 = vsel %vm890, %v887, %v820
      %v921 = vsel %vm890, %v888, %v822
      %v922 = vsel %vm890, %v889, %v824
      %v923 = vpack.c.bf16 %v892, %v891
      %v924 = vpack.c.bf16 %v894, %v893
      %v925 = vpack.c.bf16 %v896, %v895
      %v926 = vpack.c.bf16 %v898, %v897
      %v927 = vpack.c.bf16 %v900, %v899
      %v928 = vpack.c.bf16 %v902, %v901
      %v929 = vpack.c.bf16 %v904, %v903
      %v930 = vpack.c.bf16 %v906, %v905
      %v931 = vpack.c.bf16 %v908, %v907
      %v932 = vpack.c.bf16 %v910, %v909
      %v933 = vpack.c.bf16 %v912, %v911
      %v934 = vpack.c.bf16 %v914, %v913
      %v935 = vpack.c.bf16 %v916, %v915
      %v936 = vpack.c.bf16 %v918, %v917
      %v937 = vpack.c.bf16 %v920, %v919
      %v938 = vpack.c.bf16 %v922, %v921
      %v939 = vld [vmem:[%s3] sm:$0xf]
      %v940 = vld [vmem:[%s3 + $0x4] sm:$0xf]
      %v941 = vld [vmem:[%s3 + $0x8] sm:$0xf]
      %v942 = vld [vmem:[%s3 + $0xc] sm:$0xf]
      %v943 = vld [vmem:[%s3 + $0x10] sm:$0xf]
      %v944 = vld [vmem:[%s3 + $0x14] sm:$0xf]
      %s945 = scalar_lea.vmem %s3, 24
      %v946 = vld [vmem:[%s945] sm:$0xf]
      %v947 = vld [vmem:[%s945 + $0x4] sm:$0xf]
      %v948 = vld [vmem:[%s945 + $0x8] sm:$0xf]
      %v949 = vld [vmem:[%s945 + $0xc] sm:$0xf]
      %v950 = vld [vmem:[%s945 + $0x10] sm:$0xf]
      %v951 = vld [vmem:[%s945 + $0x14] sm:$0xf]
      %v958 = vunpack.c.l.b16 %v946
      %v959 = vunpack.c.l.b16 %v947
      %v960 = vunpack.c.l.b16 %v948
      %v961 = vunpack.c.l.b16 %v949
      %v962 = vunpack.c.l.b16 %v950
      %v963 = vunpack.c.l.b16 %v951
      %v964 = vpack.c.b16 %v959, %v958
      %v965 = vpack.c.b16 %v961, %v960
      %v966 = vpack.c.b16 %v963, %v962
      %vm970 = vcmask 392192
      %v972 = vsel %vm970, %v923, 0
      %v975 = vsel %vm970, %v924, 0
      %v978 = vsel %vm970, %v925, 0
      %v981 = vsel %vm970, %v926, 0
      %v984 = vsel %vm970, %v927, 0
      %v987 = vsel %vm970, %v928, 0
      %v990 = vsel %vm970, %v929, 0
      %v993 = vsel %vm970, %v930, 0
      %v996 = vsel %vm970, %v931, 0
      %v999 = vsel %vm970, %v932, 0
      %v1002 = vsel %vm970, %v933, 0
      %v1005 = vsel %vm970, %v934, 0
      %v1008 = vsel %vm970, %v935, 0
      %v1011 = vsel %vm970, %v936, 0
      %v1014 = vsel %vm970, %v937, 0
      %v1017 = vsel %vm970, %v938, 0
      %1019 = vmatprep.subr.bf16.mxu0 0
      %1020 = vmatpush1.bf16.msra.mxu0 %v964
      %1021 = vmatprep.subr.bf16.mxu0 0
      %1022 = vmatpush1.bf16.msra.mxu0 %v965
      %1023 = vmatprep.subr.bf16.mxu0 0
      %1024 = vmatpush1.bf16.msra.mxu0 %v966
      %1025 = vmatprep.subr.bf16.mxu0 0
      %1026 = vmatpush1.bf16.msra.mxu0 0
      %1027 = vmatprep.subr.bf16.mxu0 0
      %1028 = vmatpush1.bf16.msra.mxu0 0
      %1029 = vmatprep.subr.bf16.mxu0 0
      %1030 = vmatpush1.bf16.msra.mxu0 0
      %1031 = vmatprep.subr.bf16.mxu0 0
      %1032 = vmatpush1.bf16.msra.mxu0 0
      %1033 = vmatprep.subr.bf16.mxu0 0
      %1034 = vmatpush1.bf16.msra.mxu0 0
      %1035 = vmatprep.subr.bf16.mxu0 0
      %1036 = vmatpush1.bf16.msra.mxu0 0
      %1037 = vmatprep.subr.bf16.mxu0 0
      %1038 = vmatpush1.bf16.msra.mxu0 0
      %1039 = vmatprep.subr.bf16.mxu0 0
      %1040 = vmatpush1.bf16.msra.mxu0 0
      %1041 = vmatprep.subr.bf16.mxu0 0
      %1042 = vmatpush1.bf16.msra.mxu0 0
      %1043 = vmatprep.subr.bf16.mxu0 0
      %1044 = vmatpush1.bf16.msra.mxu0 0
      %1045 = vmatprep.subr.bf16.mxu0 0
      %1046 = vmatpush1.bf16.msra.mxu0 0
      %1047 = vmatprep.subr.bf16.mxu0 0
      %1048 = vmatpush1.bf16.msra.mxu0 0
      %1049 = vmatprep.subr.bf16.mxu0 0
      %1050 = vmatpush1.bf16.msra.mxu0 0
      %1051 = vmatprep.mubr.bf16.mxu0 0
      %1052 = vmatmul.mubr.bf16.gmra.mrb[0].mxu0 %v972
      %v1053 = vpop.f32.mrb[0].mxu0
      %v1054 = vadd.f32 0.0, %v1053
      %v1055 = vpop.f32.mrb[0].mxu0
      %v1056 = vpop.f32.mrb[0].mxu0
      %v1057 = vadd.f32 0.0, %v1056
      %v1058 = vpop.f32.mrb[0].mxu0
      %1059 = vmatprep.mubr.bf16.mxu0 0
      %1060 = vmatmul.mubr.bf16.gmra.mrb[0].mxu0 %v975
      %v1061 = vpop.f32.mrb[0].mxu0
      %v1062 = vadd.f32 0.0, %v1061
      %v1063 = vpop.f32.mrb[0].mxu0
      %v1064 = vpop.f32.mrb[0].mxu0
      %v1065 = vadd.f32 0.0, %v1064
      %v1066 = vpop.f32.mrb[0].mxu0
      %1067 = vmatprep.mubr.bf16.mxu0 0
      %1068 = vmatmul.mubr.bf16.gmra.mrb[0].mxu0 %v978
      %v1069 = vpop.f32.mrb[0].mxu0
      %v1070 = vadd.f32 0.0, %v1069
      %v1071 = vpop.f32.mrb[0].mxu0
      %v1072 = vpop.f32.mrb[0].mxu0
      %v1073 = vadd.f32 0.0, %v1072
      %v1074 = vpop.f32.mrb[0].mxu0
      %1075 = vmatprep.mubr.bf16.mxu0 0
      %1076 = vmatmul.mubr.bf16.gmra.mrb[0].mxu0 %v981
      %v1077 = vpop.f32.mrb[0].mxu0
      %v1078 = vadd.f32 0.0, %v1077
      %v1079 = vpop.f32.mrb[0].mxu0
      %v1080 = vpop.f32.mrb[0].mxu0
      %v1081 = vadd.f32 0.0, %v1080
      %v1082 = vpop.f32.mrb[0].mxu0
      %1083 = vmatprep.mubr.bf16.mxu0 0
      %1084 = vmatmul.mubr.bf16.gmra.mrb[0].mxu0 %v984
      %v1085 = vpop.f32.mrb[0].mxu0
      %v1086 = vadd.f32 0.0, %v1085
      %v1087 = vpop.f32.mrb[0].mxu0
      %v1088 = vpop.f32.mrb[0].mxu0
      %v1089 = vadd.f32 0.0, %v1088
      %v1090 = vpop.f32.mrb[0].mxu0
      %1091 = vmatprep.mubr.bf16.mxu0 0
      %1092 = vmatmul.mubr.bf16.gmra.mrb[0].mxu0 %v987
      %v1093 = vpop.f32.mrb[0].mxu0
      %v1094 = vadd.f32 0.0, %v1093
      %v1095 = vpop.f32.mrb[0].mxu0
      %v1096 = vpop.f32.mrb[0].mxu0
      %v1097 = vadd.f32 0.0, %v1096
      %v1098 = vpop.f32.mrb[0].mxu0
      %1099 = vmatprep.mubr.bf16.mxu0 0
      %1100 = vmatmul.mubr.bf16.gmra.mrb[0].mxu0 %v990
      %v1101 = vpop.f32.mrb[0].mxu0
      %v1102 = vadd.f32 0.0, %v1101
      %v1103 = vpop.f32.mrb[0].mxu0
      %v1104 = vpop.f32.mrb[0].mxu0
      %v1105 = vadd.f32 0.0, %v1104
      %v1106 = vpop.f32.mrb[0].mxu0
      %1107 = vmatprep.mubr.bf16.mxu0 0
      %1108 = vmatmul.mubr.bf16.gmra.mrb[0].mxu0 %v993
      %v1109 = vpop.f32.mrb[0].mxu0
      %v1110 = vadd.f32 0.0, %v1109
      %v1111 = vpop.f32.mrb[0].mxu0
      %v1112 = vpop.f32.mrb[0].mxu0
      %v1113 = vadd.f32 0.0, %v1112
      %v1114 = vpop.f32.mrb[0].mxu0
      %1115 = vmatprep.mubr.bf16.mxu0 0
      %1116 = vmatmul.mubr.bf16.gmra.mrb[0].mxu0 %v996
      %v1117 = vpop.f32.mrb[0].mxu0
      %v1118 = vadd.f32 0.0, %v1117
      %v1119 = vpop.f32.mrb[0].mxu0
      %v1120 = vpop.f32.mrb[0].mxu0
      %v1121 = vadd.f32 0.0, %v1120
      %v1122 = vpop.f32.mrb[0].mxu0
      %1123 = vmatprep.mubr.bf16.mxu0 0
      %1124 = vmatmul.mubr.bf16.gmra.mrb[0].mxu0 %v999
      %v1125 = vpop.f32.mrb[0].mxu0
      %v1126 = vadd.f32 0.0, %v1125
      %v1127 = vpop.f32.mrb[0].mxu0
      %v1128 = vpop.f32.mrb[0].mxu0
      %v1129 = vadd.f32 0.0, %v1128
      %v1130 = vpop.f32.mrb[0].mxu0
      %1131 = vmatprep.mubr.bf16.mxu0 0
      %1132 = vmatmul.mubr.bf16.gmra.mrb[0].mxu0 %v1002
      %v1133 = vpop.f32.mrb[0].mxu0
      %v1134 = vadd.f32 0.0, %v1133
      %v1135 = vpop.f32.mrb[0].mxu0
      %v1136 = vpop.f32.mrb[0].mxu0
      %v1137 = vadd.f32 0.0, %v1136
      %v1138 = vpop.f32.mrb[0].mxu0
      %1139 = vmatprep.mubr.bf16.mxu0 0
      %1140 = vmatmul.mubr.bf16.gmra.mrb[0].mxu0 %v1005
      %v1141 = vpop.f32.mrb[0].mxu0
      %v1142 = vadd.f32 0.0, %v1141
      %v1143 = vpop.f32.mrb[0].mxu0
      %v1144 = vpop.f32.mrb[0].mxu0
      %v1145 = vadd.f32 0.0, %v1144
      %v1146 = vpop.f32.mrb[0].mxu0
      %1147 = vmatprep.mubr.bf16.mxu0 0
      %1148 = vmatmul.mubr.bf16.gmra.mrb[0].mxu0 %v1008
      %v1149 = vpop.f32.mrb[0].mxu0
      %v1150 = vadd.f32 0.0, %v1149
      %v1151 = vpop.f32.mrb[0].mxu0
      %v1152 = vpop.f32.mrb[0].mxu0
      %v1153 = vadd.f32 0.0, %v1152
      %v1154 = vpop.f32.mrb[0].mxu0
      %1155 = vmatprep.mubr.bf16.mxu0 0
      %1156 = vmatmul.mubr.bf16.gmra.mrb[0].mxu0 %v1011
      %v1157 = vpop.f32.mrb[0].mxu0
      %v1158 = vadd.f32 0.0, %v1157
      %v1159 = vpop.f32.mrb[0].mxu0
      %v1160 = vpop.f32.mrb[0].mxu0
      %v1161 = vadd.f32 0.0, %v1160
      %v1162 = vpop.f32.mrb[0].mxu0
      %1163 = vmatprep.mubr.bf16.mxu0 0
      %1164 = vmatmul.mubr.bf16.gmra.mrb[0].mxu0 %v1014
      %v1165 = vpop.f32.mrb[0].mxu0
      %v1166 = vadd.f32 0.0, %v1165
      %v1167 = vpop.f32.mrb[0].mxu0
      %v1168 = vpop.f32.mrb[0].mxu0
      %v1169 = vadd.f32 0.0, %v1168
      %v1170 = vpop.f32.mrb[0].mxu0
      %1171 = vmatprep.mubr.bf16.mxu0 0
      %1172 = vmatmul.mubr.bf16.gmra.mrb[0].mxu0 %v1017
      %v1173 = vpop.f32.mrb[0].mxu0
      %v1174 = vadd.f32 0.0, %v1173
      %v1175 = vpop.f32.mrb[0].mxu0
      %v1176 = vpop.f32.mrb[0].mxu0
      %v1177 = vadd.f32 0.0, %v1176
      %v1178 = vpop.f32.mrb[0].mxu0
      %1179 = vdwg.mxu0
      %v1186 = vunpack.c.l.b16 %v939
      %v1187 = vunpack.c.l.b16 %v940
      %v1188 = vunpack.c.l.b16 %v941
      %v1189 = vunpack.c.l.b16 %v942
      %v1190 = vunpack.c.l.b16 %v943
      %v1191 = vunpack.c.l.b16 %v944
      %v1192 = vpack.c.b16 %v1187, %v1186
      %v1193 = vpack.c.b16 %v1189, %v1188
      %v1194 = vpack.c.b16 %v1191, %v1190
      %v1199 = vsel %vm970, 0, 0
      %1201 = vmatprep.subr.bf16.mxu0 0
      %1202 = vmatpush1.bf16.msra.mxu0 %v1192
      %1203 = vmatprep.subr.bf16.mxu0 0
      %1204 = vmatpush1.bf16.msra.mxu0 %v1193
      %1205 = vmatprep.subr.bf16.mxu0 0
      %1206 = vmatpush1.bf16.msra.mxu0 %v1194
      %1207 = vmatprep.subr.bf16.mxu0 0
      %1208 = vmatpush1.bf16.msra.mxu0 0
      %1209 = vmatprep.subr.bf16.mxu0 0
      %1210 = vmatpush1.bf16.msra.mxu0 0
      %1211 = vmatprep.subr.bf16.mxu0 0
      %1212 = vmatpush1.bf16.msra.mxu0 0
      %1213 = vmatprep.subr.bf16.mxu0 0
      %1214 = vmatpush1.bf16.msra.mxu0 0
      %1215 = vmatprep.subr.bf16.mxu0 0
      %1216 = vmatpush1.bf16.msra.mxu0 0
      %1217 = vmatprep.subr.bf16.mxu0 0
      %1218 = vmatpush1.bf16.msra.mxu0 0
      %1219 = vmatprep.subr.bf16.mxu0 0
      %1220 = vmatpush1.bf16.msra.mxu0 0
      %1221 = vmatprep.subr.bf16.mxu0 0
      %1222 = vmatpush1.bf16.msra.mxu0 0
      %1223 = vmatprep.subr.bf16.mxu0 0
      %1224 = vmatpush1.bf16.msra.mxu0 0
      %1225 = vmatprep.subr.bf16.mxu0 0
      %1226 = vmatpush1.bf16.msra.mxu0 0
      %1227 = vmatprep.subr.bf16.mxu0 0
      %1228 = vmatpush1.bf16.msra.mxu0 0
      %1229 = vmatprep.subr.bf16.mxu0 0
      %1230 = vmatpush1.bf16.msra.mxu0 0
      %1231 = vmatprep.subr.bf16.mxu0 0
      %1232 = vmatpush1.bf16.msra.mxu0 0
      %1233 = vmatprep.mubr.bf16.mxu0 0
      %1234 = vmatmul.mubr.bf16.gmra.mrb[0].mxu0 %v1199
      %v1235 = vpop.f32.mrb[0].mxu0
      %v1236 = vadd.f32 %v1054, %v1235
      %v1237 = vpop.f32.mrb[0].mxu0
      %v1238 = vpop.f32.mrb[0].mxu0
      %v1239 = vadd.f32 %v1057, %v1238
      %v1240 = vpop.f32.mrb[0].mxu0
      %1241 = vmatprep.mubr.bf16.mxu0 0
      %1242 = vmatmul.mubr.bf16.gmra.mrb[0].mxu0 %v972
      %v1243 = vpop.f32.mrb[0].mxu0
      %v1244 = vadd.f32 %v1062, %v1243
      %v1245 = vpop.f32.mrb[0].mxu0
      %v1246 = vpop.f32.mrb[0].mxu0
      %v1247 = vadd.f32 %v1065, %v1246
      %v1248 = vpop.f32.mrb[0].mxu0
      %1249 = vmatprep.mubr.bf16.mxu0 0
      %1250 = vmatmul.mubr.bf16.gmra.mrb[0].mxu0 %v975
      %v1251 = vpop.f32.mrb[0].mxu0
      %v1252 = vadd.f32 %v1070, %v1251
      %v1253 = vpop.f32.mrb[0].mxu0
      %v1254 = vpop.f32.mrb[0].mxu0
      %v1255 = vadd.f32 %v1073, %v1254
      %v1256 = vpop.f32.mrb[0].mxu0
      %1257 = vmatprep.mubr.bf16.mxu0 0
      %1258 = vmatmul.mubr.bf16.gmra.mrb[0].mxu0 %v978
      %v1259 = vpop.f32.mrb[0].mxu0
      %v1260 = vadd.f32 %v1078, %v1259
      %v1261 = vpop.f32.mrb[0].mxu0
      %v1262 = vpop.f32.mrb[0].mxu0
      %v1263 = vadd.f32 %v1081, %v1262
      %v1264 = vpop.f32.mrb[0].mxu0
      %1265 = vmatprep.mubr.bf16.mxu0 0
      %1266 = vmatmul.mubr.bf16.gmra.mrb[0].mxu0 %v981
      %v1267 = vpop.f32.mrb[0].mxu0
      %v1268 = vadd.f32 %v1086, %v1267
      %v1269 = vpop.f32.mrb[0].mxu0
      %v1270 = vpop.f32.mrb[0].mxu0
      %v1271 = vadd.f32 %v1089, %v1270
      %v1272 = vpop.f32.mrb[0].mxu0
      %1273 = vmatprep.mubr.bf16.mxu0 0
      %1274 = vmatmul.mubr.bf16.gmra.mrb[0].mxu0 %v984
      %v1275 = vpop.f32.mrb[0].mxu0
      %v1276 = vadd.f32 %v1094, %v1275
      %v1277 = vpop.f32.mrb[0].mxu0
      %v1278 = vpop.f32.mrb[0].mxu0
      %v1279 = vadd.f32 %v1097, %v1278
      %v1280 = vpop.f32.mrb[0].mxu0
      %1281 = vmatprep.mubr.bf16.mxu0 0
      %1282 = vmatmul.mubr.bf16.gmra.mrb[0].mxu0 %v987
      %v1283 = vpop.f32.mrb[0].mxu0
      %v1284 = vadd.f32 %v1102, %v1283
      %v1285 = vpop.f32.mrb[0].mxu0
      %v1286 = vpop.f32.mrb[0].mxu0
      %v1287 = vadd.f32 %v1105, %v1286
      %v1288 = vpop.f32.mrb[0].mxu0
      %1289 = vmatprep.mubr.bf16.mxu0 0
      %1290 = vmatmul.mubr.bf16.gmra.mrb[0].mxu0 %v990
      %v1291 = vpop.f32.mrb[0].mxu0
      %v1292 = vadd.f32 %v1110, %v1291
      %v1293 = vpop.f32.mrb[0].mxu0
      %v1294 = vpop.f32.mrb[0].mxu0
      %v1295 = vadd.f32 %v1113, %v1294
      %v1296 = vpop.f32.mrb[0].mxu0
      %1297 = vmatprep.mubr.bf16.mxu0 0
      %1298 = vmatmul.mubr.bf16.gmra.mrb[0].mxu0 %v993
      %v1299 = vpop.f32.mrb[0].mxu0
      %v1300 = vadd.f32 %v1118, %v1299
      %v1301 = vpop.f32.mrb[0].mxu0
      %v1302 = vpop.f32.mrb[0].mxu0
      %v1303 = vadd.f32 %v1121, %v1302
      %v1304 = vpop.f32.mrb[0].mxu0
      %1305 = vmatprep.mubr.bf16.mxu0 0
      %1306 = vmatmul.mubr.bf16.gmra.mrb[0].mxu0 %v996
      %v1307 = vpop.f32.mrb[0].mxu0
      %v1308 = vadd.f32 %v1126, %v1307
      %v1309 = vpop.f32.mrb[0].mxu0
      %v1310 = vpop.f32.mrb[0].mxu0
      %v1311 = vadd.f32 %v1129, %v1310
      %v1312 = vpop.f32.mrb[0].mxu0
      %1313 = vmatprep.mubr.bf16.mxu0 0
      %1314 = vmatmul.mubr.bf16.gmra.mrb[0].mxu0 %v999
      %v1315 = vpop.f32.mrb[0].mxu0
      %v1316 = vadd.f32 %v1134, %v1315
      %v1317 = vpop.f32.mrb[0].mxu0
      %v1318 = vpop.f32.mrb[0].mxu0
      %v1319 = vadd.f32 %v1137, %v1318
      %v1320 = vpop.f32.mrb[0].mxu0
      %1321 = vmatprep.mubr.bf16.mxu0 0
      %1322 = vmatmul.mubr.bf16.gmra.mrb[0].mxu0 %v1002
      %v1323 = vpop.f32.mrb[0].mxu0
      %v1324 = vadd.f32 %v1142, %v1323
      %v1325 = vpop.f32.mrb[0].mxu0
      %v1326 = vpop.f32.mrb[0].mxu0
      %v1327 = vadd.f32 %v1145, %v1326
      %v1328 = vpop.f32.mrb[0].mxu0
      %1329 = vmatprep.mubr.bf16.mxu0 0
      %1330 = vmatmul.mubr.bf16.gmra.mrb[0].mxu0 %v1005
      %v1331 = vpop.f32.mrb[0].mxu0
      %v1332 = vadd.f32 %v1150, %v1331
      %v1333 = vpop.f32.mrb[0].mxu0
      %v1334 = vpop.f32.mrb[0].mxu0
      %v1335 = vadd.f32 %v1153, %v1334
      %v1336 = vpop.f32.mrb[0].mxu0
      %1337 = vmatprep.mubr.bf16.mxu0 0
      %1338 = vmatmul.mubr.bf16.gmra.mrb[0].mxu0 %v1008
      %v1339 = vpop.f32.mrb[0].mxu0
      %v1340 = vadd.f32 %v1158, %v1339
      %v1341 = vpop.f32.mrb[0].mxu0
      %v1342 = vpop.f32.mrb[0].mxu0
      %v1343 = vadd.f32 %v1161, %v1342
      %v1344 = vpop.f32.mrb[0].mxu0
      %1345 = vmatprep.mubr.bf16.mxu0 0
      %1346 = vmatmul.mubr.bf16.gmra.mrb[0].mxu0 %v1011
      %v1347 = vpop.f32.mrb[0].mxu0
      %v1348 = vadd.f32 %v1166, %v1347
      %v1349 = vpop.f32.mrb[0].mxu0
      %v1350 = vpop.f32.mrb[0].mxu0
      %v1351 = vadd.f32 %v1169, %v1350
      %v1352 = vpop.f32.mrb[0].mxu0
      %1353 = vmatprep.mubr.bf16.mxu0 0
      %1354 = vmatmul.mubr.bf16.gmra.mrb[0].mxu0 %v1014
      %v1355 = vpop.f32.mrb[0].mxu0
      %v1356 = vadd.f32 %v1174, %v1355
      %v1357 = vpop.f32.mrb[0].mxu0
      %v1358 = vpop.f32.mrb[0].mxu0
      %v1359 = vadd.f32 %v1177, %v1358
      %v1360 = vpop.f32.mrb[0].mxu0
      %1361 = vdwg.mxu0
      %s1362 = scalar_lea.vmem %s3, 48
      %v1363 = vld [vmem:[%s1362] sm:$0xf]
      %v1364 = vld [vmem:[%s1362 + $0x4] sm:$0xf]
      %v1365 = vld [vmem:[%s1362 + $0x8] sm:$0xf]
      %v1366 = vld [vmem:[%s1362 + $0xc] sm:$0xf]
      %v1367 = vld [vmem:[%s1362 + $0x10] sm:$0xf]
      %v1368 = vld [vmem:[%s1362 + $0x14] sm:$0xf]
      %v1375 = vunpack.c.l.b16 %v1363
      %v1376 = vunpack.c.l.b16 %v1364
      %v1377 = vunpack.c.l.b16 %v1365
      %v1378 = vunpack.c.l.b16 %v1366
      %v1379 = vunpack.c.l.b16 %v1367
      %v1380 = vunpack.c.l.b16 %v1368
      %v1381 = vpack.c.b16 %v1376, %v1375
      %v1382 = vpack.c.b16 %v1378, %v1377
      %v1383 = vpack.c.b16 %v1380, %v1379
      %1387 = vmatprep.subr.bf16.mxu0 0
      %1388 = vmatpush1.bf16.msra.mxu0 %v1381
      %1389 = vmatprep.subr.bf16.mxu0 0
      %1390 = vmatpush1.bf16.msra.mxu0 %v1382
      %1391 = vmatprep.subr.bf16.mxu0 0
      %1392 = vmatpush1.bf16.msra.mxu0 %v1383
      %1393 = vmatprep.subr.bf16.mxu0 0
      %1394 = vmatpush1.bf16.msra.mxu0 0
      %1395 = vmatprep.subr.bf16.mxu0 0
      %1396 = vmatpush1.bf16.msra.mxu0 0
      %1397 = vmatprep.subr.bf16.mxu0 0
      %1398 = vmatpush1.bf16.msra.mxu0 0
      %1399 = vmatprep.subr.bf16.mxu0 0
      %1400 = vmatpush1.bf16.msra.mxu0 0
      %1401 = vmatprep.subr.bf16.mxu0 0
      %1402 = vmatpush1.bf16.msra.mxu0 0
      %1403 = vmatprep.subr.bf16.mxu0 0
      %1404 = vmatpush1.bf16.msra.mxu0 0
      %1405 = vmatprep.subr.bf16.mxu0 0
      %1406 = vmatpush1.bf16.msra.mxu0 0
      %1407 = vmatprep.subr.bf16.mxu0 0
      %1408 = vmatpush1.bf16.msra.mxu0 0
      %1409 = vmatprep.subr.bf16.mxu0 0
      %1410 = vmatpush1.bf16.msra.mxu0 0
      %1411 = vmatprep.subr.bf16.mxu0 0
      %1412 = vmatpush1.bf16.msra.mxu0 0
      %1413 = vmatprep.subr.bf16.mxu0 0
      %1414 = vmatpush1.bf16.msra.mxu0 0
      %1415 = vmatprep.subr.bf16.mxu0 0
      %1416 = vmatpush1.bf16.msra.mxu0 0
      %1417 = vmatprep.subr.bf16.mxu0 0
      %1418 = vmatpush1.bf16.msra.mxu0 0
      %1419 = vmatprep.mubr.bf16.mxu0 0
      %1420 = vmatmul.mubr.bf16.gmra.mrb[0].mxu0 %v975
      %v1421 = vpop.f32.mrb[0].mxu0
      %v1422 = vadd.f32 0.0, %v1421
      %v1423 = vpop.f32.mrb[0].mxu0
      %v1424 = vpop.f32.mrb[0].mxu0
      %v1425 = vadd.f32 0.0, %v1424
      %v1426 = vpop.f32.mrb[0].mxu0
      %1427 = vmatprep.mubr.bf16.mxu0 0
      %1428 = vmatmul.mubr.bf16.gmra.mrb[0].mxu0 %v978
      %v1429 = vpop.f32.mrb[0].mxu0
      %v1430 = vadd.f32 0.0, %v1429
      %v1431 = vpop.f32.mrb[0].mxu0
      %v1432 = vpop.f32.mrb[0].mxu0
      %v1433 = vadd.f32 0.0, %v1432
      %v1434 = vpop.f32.mrb[0].mxu0
      %1435 = vmatprep.mubr.bf16.mxu0 0
      %1436 = vmatmul.mubr.bf16.gmra.mrb[0].mxu0 %v981
      %v1437 = vpop.f32.mrb[0].mxu0
      %v1438 = vadd.f32 0.0, %v1437
      %v1439 = vpop.f32.mrb[0].mxu0
      %v1440 = vpop.f32.mrb[0].mxu0
      %v1441 = vadd.f32 0.0, %v1440
      %v1442 = vpop.f32.mrb[0].mxu0
      %1443 = vmatprep.mubr.bf16.mxu0 0
      %1444 = vmatmul.mubr.bf16.gmra.mrb[0].mxu0 %v984
      %v1445 = vpop.f32.mrb[0].mxu0
      %v1446 = vadd.f32 0.0, %v1445
      %v1447 = vpop.f32.mrb[0].mxu0
      %v1448 = vpop.f32.mrb[0].mxu0
      %v1449 = vadd.f32 0.0, %v1448
      %v1450 = vpop.f32.mrb[0].mxu0
      %1451 = vmatprep.mubr.bf16.mxu0 0
      %1452 = vmatmul.mubr.bf16.gmra.mrb[0].mxu0 %v987
      %v1453 = vpop.f32.mrb[0].mxu0
      %v1454 = vadd.f32 0.0, %v1453
      %v1455 = vpop.f32.mrb[0].mxu0
      %v1456 = vpop.f32.mrb[0].mxu0
      %v1457 = vadd.f32 0.0, %v1456
      %v1458 = vpop.f32.mrb[0].mxu0
      %1459 = vmatprep.mubr.bf16.mxu0 0
      %1460 = vmatmul.mubr.bf16.gmra.mrb[0].mxu0 %v990
      %v1461 = vpop.f32.mrb[0].mxu0
      %v1462 = vadd.f32 0.0, %v1461
      %v1463 = vpop.f32.mrb[0].mxu0
      %v1464 = vpop.f32.mrb[0].mxu0
      %v1465 = vadd.f32 0.0, %v1464
      %v1466 = vpop.f32.mrb[0].mxu0
      %1467 = vmatprep.mubr.bf16.mxu0 0
      %1468 = vmatmul.mubr.bf16.gmra.mrb[0].mxu0 %v993
      %v1469 = vpop.f32.mrb[0].mxu0
      %v1470 = vadd.f32 0.0, %v1469
      %v1471 = vpop.f32.mrb[0].mxu0
      %v1472 = vpop.f32.mrb[0].mxu0
      %v1473 = vadd.f32 0.0, %v1472
      %v1474 = vpop.f32.mrb[0].mxu0
      %1475 = vmatprep.mubr.bf16.mxu0 0
      %1476 = vmatmul.mubr.bf16.gmra.mrb[0].mxu0 %v996
      %v1477 = vpop.f32.mrb[0].mxu0
      %v1478 = vadd.f32 0.0, %v1477
      %v1479 = vpop.f32.mrb[0].mxu0
      %v1480 = vpop.f32.mrb[0].mxu0
      %v1481 = vadd.f32 0.0, %v1480
      %v1482 = vpop.f32.mrb[0].mxu0
      %1483 = vmatprep.mubr.bf16.mxu0 0
      %1484 = vmatmul.mubr.bf16.gmra.mrb[0].mxu0 %v999
      %v1485 = vpop.f32.mrb[0].mxu0
      %v1486 = vadd.f32 0.0, %v1485
      %v1487 = vpop.f32.mrb[0].mxu0
      %v1488 = vpop.f32.mrb[0].mxu0
      %v1489 = vadd.f32 0.0, %v1488
      %v1490 = vpop.f32.mrb[0].mxu0
      %1491 = vmatprep.mubr.bf16.mxu0 0
      %1492 = vmatmul.mubr.bf16.gmra.mrb[0].mxu0 %v1002
      %v1493 = vpop.f32.mrb[0].mxu0
      %v1494 = vadd.f32 0.0, %v1493
      %v1495 = vpop.f32.mrb[0].mxu0
      %v1496 = vpop.f32.mrb[0].mxu0
      %v1497 = vadd.f32 0.0, %v1496
      %v1498 = vpop.f32.mrb[0].mxu0
      %1499 = vmatprep.mubr.bf16.mxu0 0
      %1500 = vmatmul.mubr.bf16.gmra.mrb[0].mxu0 %v1005
      %v1501 = vpop.f32.mrb[0].mxu0
      %v1502 = vadd.f32 0.0, %v1501
      %v1503 = vpop.f32.mrb[0].mxu0
      %v1504 = vpop.f32.mrb[0].mxu0
      %v1505 = vadd.f32 0.0, %v1504
      %v1506 = vpop.f32.mrb[0].mxu0
      %1507 = vmatprep.mubr.bf16.mxu0 0
      %1508 = vmatmul.mubr.bf16.gmra.mrb[0].mxu0 %v1008
      %v1509 = vpop.f32.mrb[0].mxu0
      %v1510 = vadd.f32 0.0, %v1509
      %v1511 = vpop.f32.mrb[0].mxu0
      %v1512 = vpop.f32.mrb[0].mxu0
      %v1513 = vadd.f32 0.0, %v1512
      %v1514 = vpop.f32.mrb[0].mxu0
      %1515 = vmatprep.mubr.bf16.mxu0 0
      %1516 = vmatmul.mubr.bf16.gmra.mrb[0].mxu0 %v1011
      %v1517 = vpop.f32.mrb[0].mxu0
      %v1518 = vadd.f32 0.0, %v1517
      %v1519 = vpop.f32.mrb[0].mxu0
      %v1520 = vpop.f32.mrb[0].mxu0
      %v1521 = vadd.f32 0.0, %v1520
      %v1522 = vpop.f32.mrb[0].mxu0
      %1523 = vmatprep.mubr.bf16.mxu0 0
      %1524 = vmatmul.mubr.bf16.gmra.mrb[0].mxu0 %v1014
      %v1525 = vpop.f32.mrb[0].mxu0
      %v1526 = vadd.f32 0.0, %v1525
      %v1527 = vpop.f32.mrb[0].mxu0
      %v1528 = vpop.f32.mrb[0].mxu0
      %v1529 = vadd.f32 0.0, %v1528
      %v1530 = vpop.f32.mrb[0].mxu0
      %1531 = vmatprep.mubr.bf16.mxu0 0
      %1532 = vmatmul.mubr.bf16.gmra.mrb[0].mxu0 %v1017
      %v1533 = vpop.f32.mrb[0].mxu0
      %v1534 = vadd.f32 0.0, %v1533
      %v1535 = vpop.f32.mrb[0].mxu0
      %v1536 = vpop.f32.mrb[0].mxu0
      %v1537 = vadd.f32 0.0, %v1536
      %v1538 = vpop.f32.mrb[0].mxu0
      %1539 = vmatprep.mubr.bf16.mxu0 0
      %1540 = vmatmul.mubr.bf16.gmra.mrb[0].mxu0 %v1199
      %v1541 = vpop.f32.mrb[0].mxu0
      %v1542 = vadd.f32 0.0, %v1541
      %v1543 = vpop.f32.mrb[0].mxu0
      %v1544 = vpop.f32.mrb[0].mxu0
      %v1545 = vadd.f32 0.0, %v1544
      %v1546 = vpop.f32.mrb[0].mxu0
      %1547 = vdwg.mxu0
      %v1548 = vadd.f32 %v1236, %v1422
      %v1549 = vadd.f32 %v1239, %v1425
      %v1550 = vadd.f32 %v1244, %v1430
      %v1551 = vadd.f32 %v1247, %v1433
      %v1552 = vadd.f32 %v1252, %v1438
      %v1553 = vadd.f32 %v1255, %v1441
      %v1554 = vadd.f32 %v1260, %v1446
      %v1555 = vadd.f32 %v1263, %v1449
      %v1556 = vadd.f32 %v1268, %v1454
      %v1557 = vadd.f32 %v1271, %v1457
      %v1558 = vadd.f32 %v1276, %v1462
      %v1559 = vadd.f32 %v1279, %v1465
      %v1560 = vadd.f32 %v1284, %v1470
      %v1561 = vadd.f32 %v1287, %v1473
      %v1562 = vadd.f32 %v1292, %v1478
      %v1563 = vadd.f32 %v1295, %v1481
      %v1564 = vadd.f32 %v1300, %v1486
      %v1565 = vadd.f32 %v1303, %v1489
      %v1566 = vadd.f32 %v1308, %v1494
      %v1567 = vadd.f32 %v1311, %v1497
      %v1568 = vadd.f32 %v1316, %v1502
      %v1569 = vadd.f32 %v1319, %v1505
      %v1570 = vadd.f32 %v1324, %v1510
      %v1571 = vadd.f32 %v1327, %v1513
      %v1572 = vadd.f32 %v1332, %v1518
      %v1573 = vadd.f32 %v1335, %v1521
      %v1574 = vadd.f32 %v1340, %v1526
      %v1575 = vadd.f32 %v1343, %v1529
      %v1576 = vadd.f32 %v1348, %v1534
      %v1577 = vadd.f32 %v1351, %v1537
      %v1578 = vadd.f32 %v1356, %v1542
      %v1579 = vadd.f32 %v1359, %v1545
      %v1580 = vsel %vm857, %v1548, 0.0
      %v1581 = vsel %vm857, %v1549, 0.0
      %v1582 = vadd.f32 %v1580, %v1581
      %v1583 = vsel %vm857, %v1550, 0.0
      %v1584 = vadd.f32 %v1582, %v1583
      %v1585 = vsel %vm857, %v1551, 0.0
      %v1586 = vadd.f32 %v1584, %v1585
      %v1587 = vsel %vm857, %v1552, 0.0
      %v1588 = vadd.f32 %v1586, %v1587
      %v1589 = vsel %vm857, %v1553, 0.0
      %v1590 = vadd.f32 %v1588, %v1589
      %v1591 = vsel %vm857, %v1554, 0.0
      %v1592 = vadd.f32 %v1590, %v1591
      %v1593 = vsel %vm857, %v1555, 0.0
      %v1594 = vadd.f32 %v1592, %v1593
      %v1595 = vsel %vm857, %v1556, 0.0
      %v1596 = vadd.f32 %v1594, %v1595
      %v1597 = vsel %vm857, %v1557, 0.0
      %v1598 = vadd.f32 %v1596, %v1597
      %v1599 = vsel %vm857, %v1558, 0.0
      %v1600 = vadd.f32 %v1598, %v1599
      %v1601 = vsel %vm857, %v1559, 0.0
      %v1602 = vadd.f32 %v1600, %v1601
      %v1603 = vsel %vm857, %v1560, 0.0
      %v1604 = vadd.f32 %v1602, %v1603
      %v1605 = vsel %vm857, %v1561, 0.0
      %v1606 = vadd.f32 %v1604, %v1605
      %v1607 = vsel %vm857, %v1562, 0.0
      %v1608 = vadd.f32 %v1606, %v1607
      %v1609 = vsel %vm857, %v1563, 0.0
      %v1610 = vadd.f32 %v1608, %v1609
      %v1611 = vsel %vm857, %v1564, 0.0
      %v1612 = vadd.f32 %v1610, %v1611
      %v1613 = vsel %vm857, %v1565, 0.0
      %v1614 = vadd.f32 %v1612, %v1613
      %v1615 = vsel %vm857, %v1566, 0.0
      %v1616 = vadd.f32 %v1614, %v1615
      %v1617 = vsel %vm857, %v1567, 0.0
      %v1618 = vadd.f32 %v1616, %v1617
      %v1619 = vsel %vm857, %v1568, 0.0
      %v1620 = vadd.f32 %v1618, %v1619
      %v1621 = vsel %vm857, %v1569, 0.0
      %v1622 = vadd.f32 %v1620, %v1621
      %v1623 = vsel %vm857, %v1570, 0.0
      %v1624 = vadd.f32 %v1622, %v1623
      %v1625 = vsel %vm857, %v1571, 0.0
      %v1626 = vadd.f32 %v1624, %v1625
      %v1627 = vsel %vm857, %v1572, 0.0
      %v1628 = vadd.f32 %v1626, %v1627
      %v1629 = vsel %vm857, %v1573, 0.0
      %v1630 = vadd.f32 %v1628, %v1629
      %v1631 = vsel %vm857, %v1574, 0.0
      %v1632 = vadd.f32 %v1630, %v1631
      %v1633 = vsel %vm857, %v1575, 0.0
      %v1634 = vadd.f32 %v1632, %v1633
      %v1635 = vsel %vm857, %v1576, 0.0
      %v1636 = vadd.f32 %v1634, %v1635
      %v1637 = vsel %vm857, %v1577, 0.0
      %v1638 = vadd.f32 %v1636, %v1637
      %v1639 = vsel %vm857, %v1578, 0.0
      %v1640 = vadd.f32 %v1638, %v1639
      %v1641 = vsel %vm857, %v1579, 0.0
      %v1642 = vadd.f32 %v1640, %v1641
      %v1643 = vrot.slane %v1642, 4
      %v1644 = vadd.f32 %v1642, %v1643
      %v1645 = vrot.slane %v1644, 2
      %v1646 = vadd.f32 %v1644, %v1645
      %v1647 = vrot.slane %v1646, 1
      %v1648 = vadd.f32 %v1646, %v1647
      %v1649 = vmul.f32 %v1548, %v1548
      %v1650 = vmul.f32 %v1549, %v1549
      %v1651 = vmul.f32 %v1550, %v1550
      %v1652 = vmul.f32 %v1551, %v1551
      %v1653 = vmul.f32 %v1552, %v1552
      %v1654 = vmul.f32 %v1553, %v1553
      %v1655 = vmul.f32 %v1554, %v1554
      %v1656 = vmul.f32 %v1555, %v1555
      %v1657 = vmul.f32 %v1556, %v1556
      %v1658 = vmul.f32 %v1557, %v1557
      %v1659 = vmul.f32 %v1558, %v1558
      %v1660 = vmul.f32 %v1559, %v1559
      %v1661 = vmul.f32 %v1560, %v1560
      %v1662 = vmul.f32 %v1561, %v1561
      %v1663 = vmul.f32 %v1562, %v1562
      %v1664 = vmul.f32 %v1563, %v1563
      %v1665 = vmul.f32 %v1564, %v1564
      %v1666 = vmul.f32 %v1565, %v1565
      %v1667 = vmul.f32 %v1566, %v1566
      %v1668 = vmul.f32 %v1567, %v1567
      %v1669 = vmul.f32 %v1568, %v1568
      %v1670 = vmul.f32 %v1569, %v1569
      %v1671 = vmul.f32 %v1570, %v1570
      %v1672 = vmul.f32 %v1571, %v1571
      %v1673 = vmul.f32 %v1572, %v1572
      %v1674 = vmul.f32 %v1573, %v1573
      %v1675 = vmul.f32 %v1574, %v1574
      %v1676 = vmul.f32 %v1575, %v1575
      %v1677 = vmul.f32 %v1576, %v1576
      %v1678 = vmul.f32 %v1577, %v1577
      %v1679 = vmul.f32 %v1578, %v1578
      %v1680 = vmul.f32 %v1579, %v1579
      %v1681 = vsel %vm857, %v1649, 0.0
      %v1682 = vsel %vm857, %v1650, 0.0
      %v1683 = vadd.f32 %v1681, %v1682
      %v1684 = vsel %vm857, %v1651, 0.0
      %v1685 = vadd.f32 %v1683, %v1684
      %v1686 = vsel %vm857, %v1652, 0.0
      %v1687 = vadd.f32 %v1685, %v1686
      %v1688 = vsel %vm857, %v1653, 0.0
      %v1689 = vadd.f32 %v1687, %v1688
      %v1690 = vsel %vm857, %v1654, 0.0
      %v1691 = vadd.f32 %v1689, %v1690
      %v1692 = vsel %vm857, %v1655, 0.0
      %v1693 = vadd.f32 %v1691, %v1692
      %v1694 = vsel %vm857, %v1656, 0.0
      %v1695 = vadd.f32 %v1693, %v1694
      %v1696 = vsel %vm857, %v1657, 0.0
      %v1697 = vadd.f32 %v1695, %v1696
      %v1698 = vsel %vm857, %v1658, 0.0
      %v1699 = vadd.f32 %v1697, %v1698
      %v1700 = vsel %vm857, %v1659, 0.0
      %v1701 = vadd.f32 %v1699, %v1700
      %v1702 = vsel %vm857, %v1660, 0.0
      %v1703 = vadd.f32 %v1701, %v1702
      %v1704 = vsel %vm857, %v1661, 0.0
      %v1705 = vadd.f32 %v1703, %v1704
      %v1706 = vsel %vm857, %v1662, 0.0
      %v1707 = vadd.f32 %v1705, %v1706
      %v1708 = vsel %vm857, %v1663, 0.0
      %v1709 = vadd.f32 %v1707, %v1708
      %v1710 = vsel %vm857, %v1664, 0.0
      %v1711 = vadd.f32 %v1709, %v1710
      %v1712 = vsel %vm857, %v1665, 0.0
      %v1713 = vadd.f32 %v1711, %v1712
      %v1714 = vsel %vm857, %v1666, 0.0
      %v1715 = vadd.f32 %v1713, %v1714
      %v1716 = vsel %vm857, %v1667, 0.0
      %v1717 = vadd.f32 %v1715, %v1716
      %v1718 = vsel %vm857, %v1668, 0.0
      %v1719 = vadd.f32 %v1717, %v1718
      %v1720 = vsel %vm857, %v1669, 0.0
      %v1721 = vadd.f32 %v1719, %v1720
      %v1722 = vsel %vm857, %v1670, 0.0
      %v1723 = vadd.f32 %v1721, %v1722
      %v1724 = vsel %vm857, %v1671, 0.0
      %v1725 = vadd.f32 %v1723, %v1724
      %v1726 = vsel %vm857, %v1672, 0.0
      %v1727 = vadd.f32 %v1725, %v1726
      %v1728 = vsel %vm857, %v1673, 0.0
      %v1729 = vadd.f32 %v1727, %v1728
      %v1730 = vsel %vm857, %v1674, 0.0
      %v1731 = vadd.f32 %v1729, %v1730
      %v1732 = vsel %vm857, %v1675, 0.0
      %v1733 = vadd.f32 %v1731, %v1732
      %v1734 = vsel %vm857, %v1676, 0.0
      %v1735 = vadd.f32 %v1733, %v1734
      %v1736 = vsel %vm857, %v1677, 0.0
      %v1737 = vadd.f32 %v1735, %v1736
      %v1738 = vsel %vm857, %v1678, 0.0
      %v1739 = vadd.f32 %v1737, %v1738
      %v1740 = vsel %vm857, %v1679, 0.0
      %v1741 = vadd.f32 %v1739, %v1740
      %v1742 = vsel %vm857, %v1680, 0.0
      %v1743 = vadd.f32 %v1741, %v1742
      %v1744 = vrot.slane %v1743, 4
      %v1745 = vadd.f32 %v1743, %v1744
      %v1746 = vrot.slane %v1745, 2
      %v1747 = vadd.f32 %v1745, %v1746
      %v1748 = vrot.slane %v1747, 1
      %v1749 = vadd.f32 %v1747, %v1748
      %v1750 = vsel %vm471, %v1648, %v1749
      %vm1751 = vcmask 123904
      %1752 = vst.msk [vmem:[%s263] sm:$0x3] %vm1751, %v1750
      %v1753 = vpack.c.bf16 %v1549, %v1548
      %v1754 = vpack.c.bf16 %v1551, %v1550
      %v1755 = vpack.c.bf16 %v1553, %v1552
      %v1756 = vpack.c.bf16 %v1555, %v1554
      %v1757 = vpack.c.bf16 %v1557, %v1556
      %v1758 = vpack.c.bf16 %v1559, %v1558
      %v1759 = vpack.c.bf16 %v1561, %v1560
      %v1760 = vpack.c.bf16 %v1563, %v1562
      %v1761 = vpack.c.bf16 %v1565, %v1564
      %v1762 = vpack.c.bf16 %v1567, %v1566
      %v1763 = vpack.c.bf16 %v1569, %v1568
      %v1764 = vpack.c.bf16 %v1571, %v1570
      %v1765 = vpack.c.bf16 %v1573, %v1572
      %v1766 = vpack.c.bf16 %v1575, %v1574
      %v1767 = vpack.c.bf16 %v1577, %v1576
      %v1768 = vpack.c.bf16 %v1579, %v1578
      %v1785 = vunpack.c.l.b16 %v1753
      %v1786 = vunpack.c.h.b16 %v1753
      %v1787 = vunpack.c.l.b16 %v1754
      %v1788 = vunpack.c.h.b16 %v1754
      %v1789 = vunpack.c.l.b16 %v1755
      %v1790 = vunpack.c.h.b16 %v1755
      %v1791 = vunpack.c.l.b16 %v1756
      %v1792 = vunpack.c.h.b16 %v1756
      %v1793 = vunpack.c.l.b16 %v1757
      %v1794 = vunpack.c.h.b16 %v1757
      %v1795 = vunpack.c.l.b16 %v1758
      %v1796 = vunpack.c.h.b16 %v1758
      %v1797 = vunpack.c.l.b16 %v1759
      %v1798 = vunpack.c.h.b16 %v1759
      %v1799 = vunpack.c.l.b16 %v1760
      %v1800 = vunpack.c.h.b16 %v1760
      %v1801 = vunpack.c.l.b16 %v1761
      %v1802 = vunpack.c.h.b16 %v1761
      %v1803 = vunpack.c.l.b16 %v1762
      %v1804 = vunpack.c.h.b16 %v1762
      %v1805 = vunpack.c.l.b16 %v1763
      %v1806 = vunpack.c.h.b16 %v1763
      %v1807 = vunpack.c.l.b16 %v1764
      %v1808 = vunpack.c.h.b16 %v1764
      %v1809 = vunpack.c.l.b16 %v1765
      %v1810 = vunpack.c.h.b16 %v1765
      %v1811 = vunpack.c.l.b16 %v1766
      %v1812 = vunpack.c.h.b16 %v1766
      %v1813 = vunpack.c.l.b16 %v1767
      %v1814 = vunpack.c.h.b16 %v1767
      %v1815 = vunpack.c.l.b16 %v1768
      %v1816 = vunpack.c.h.b16 %v1768
      %v1817 = vpack.c.b16 %v1785, %v1785
      %v1818 = vpack.c.b16 %v1786, %v1786
      %v1819 = vpack.c.b16 %v1787, %v1787
      %v1820 = vpack.c.b16 %v1788, %v1788
      %v1821 = vpack.c.b16 %v1789, %v1789
      %v1822 = vpack.c.b16 %v1790, %v1790
      %v1823 = vpack.c.b16 %v1791, %v1791
      %v1824 = vpack.c.b16 %v1792, %v1792
      %v1825 = vpack.c.b16 %v1793, %v1793
      %v1826 = vpack.c.b16 %v1794, %v1794
      %v1827 = vpack.c.b16 %v1795, %v1795
      %v1828 = vpack.c.b16 %v1796, %v1796
      %v1829 = vpack.c.b16 %v1797, %v1797
      %v1830 = vpack.c.b16 %v1798, %v1798
      %v1831 = vpack.c.b16 %v1799, %v1799
      %v1832 = vpack.c.b16 %v1800, %v1800
      %v1833 = vpack.c.b16 %v1801, %v1801
      %v1834 = vpack.c.b16 %v1802, %v1802
      %v1835 = vpack.c.b16 %v1803, %v1803
      %v1836 = vpack.c.b16 %v1804, %v1804
      %v1837 = vpack.c.b16 %v1805, %v1805
      %v1838 = vpack.c.b16 %v1806, %v1806
      %v1839 = vpack.c.b16 %v1807, %v1807
      %v1840 = vpack.c.b16 %v1808, %v1808
      %v1841 = vpack.c.b16 %v1809, %v1809
      %v1842 = vpack.c.b16 %v1810, %v1810
      %v1843 = vpack.c.b16 %v1811, %v1811
      %v1844 = vpack.c.b16 %v1812, %v1812
      %v1845 = vpack.c.b16 %v1813, %v1813
      %v1846 = vpack.c.b16 %v1814, %v1814
      %v1847 = vpack.c.b16 %v1815, %v1815
      %v1848 = vpack.c.b16 %v1816, %v1816
      %vm1881 = vcmask 125952
      %1882 = vst.msk [vmem:[%s259] sm:$0xf] %vm1881, %v1817
      %1883 = vst.msk [vmem:[%s259 + $0x4] sm:$0xf] %vm1881, %v1818
      %1884 = vst.msk [vmem:[%s259 + $0x8] sm:$0xf] %vm1881, %v1819
      %1885 = vst.msk [vmem:[%s259 + $0xc] sm:$0xf] %vm1881, %v1820
      %1886 = vst.msk [vmem:[%s259 + $0x10] sm:$0xf] %vm1881, %v1821
      %1887 = vst.msk [vmem:[%s259 + $0x14] sm:$0xf] %vm1881, %v1822
      %1888 = vst.msk [vmem:[%s259 + $0x18] sm:$0xf] %vm1881, %v1823
      %1889 = vst.msk [vmem:[%s259 + $0x1c] sm:$0xf] %vm1881, %v1824
      %1890 = vst.msk [vmem:[%s259 + $0x20] sm:$0xf] %vm1881, %v1825
      %1891 = vst.msk [vmem:[%s259 + $0x24] sm:$0xf] %vm1881, %v1826
      %1892 = vst.msk [vmem:[%s259 + $0x28] sm:$0xf] %vm1881, %v1827
      %1893 = vst.msk [vmem:[%s259 + $0x2c] sm:$0xf] %vm1881, %v1828
      %1894 = vst.msk [vmem:[%s259 + $0x30] sm:$0xf] %vm1881, %v1829
      %1895 = vst.msk [vmem:[%s259 + $0x34] sm:$0xf] %vm1881, %v1830
      %1896 = vst.msk [vmem:[%s259 + $0x38] sm:$0xf] %vm1881, %v1831
      %1897 = vst.msk [vmem:[%s259 + $0x3c] sm:$0xf] %vm1881, %v1832
      %1898 = vst.msk [vmem:[%s259 + $0x40] sm:$0xf] %vm1881, %v1833
      %1899 = vst.msk [vmem:[%s259 + $0x44] sm:$0xf] %vm1881, %v1834
      %1900 = vst.msk [vmem:[%s259 + $0x48] sm:$0xf] %vm1881, %v1835
      %1901 = vst.msk [vmem:[%s259 + $0x4c] sm:$0xf] %vm1881, %v1836
      %1902 = vst.msk [vmem:[%s259 + $0x50] sm:$0xf] %vm1881, %v1837
      %1903 = vst.msk [vmem:[%s259 + $0x54] sm:$0xf] %vm1881, %v1838
      %1904 = vst.msk [vmem:[%s259 + $0x58] sm:$0xf] %vm1881, %v1839
      %1905 = vst.msk [vmem:[%s259 + $0x5c] sm:$0xf] %vm1881, %v1840
      %1906 = vst.msk [vmem:[%s259 + $0x60] sm:$0xf] %vm1881, %v1841
      %1907 = vst.msk [vmem:[%s259 + $0x64] sm:$0xf] %vm1881, %v1842
      %1908 = vst.msk [vmem:[%s259 + $0x68] sm:$0xf] %vm1881, %v1843
      %1909 = vst.msk [vmem:[%s259 + $0x6c] sm:$0xf] %vm1881, %v1844
      %1910 = vst.msk [vmem:[%s259 + $0x70] sm:$0xf] %vm1881, %v1845
      %1911 = vst.msk [vmem:[%s259 + $0x74] sm:$0xf] %vm1881, %v1846
      %1912 = vst.msk [vmem:[%s259 + $0x78] sm:$0xf] %vm1881, %v1847
      %1913 = vst.msk [vmem:[%s259 + $0x7c] sm:$0xf] %vm1881, %v1848
      %p1914 = scmp.lt.s32.totalorder %s17, 1
      %s1915 = scalar_select %p1914, %s17, 1
      %s1916 = smul.addr %s1915, 32
      %s1917 = smul.addr %s1916, 4
      %s1918 = scalar_lea.vmem %s4, %s1917
      %p1919 = scmp.lt.s32.totalorder %s17, 1
      %s1920 = scalar_select %p1919, %s17, 1
      %s1921 = smul.addr %s1920, 2
      %s1922 = scalar_lea.vmem %s5, %s1921
      // Predicated region
      $region37: #{vae_up_forward.7} parent=35 // pred_check
        %p1923 = pneg %p134
      $region38: #{vae_up_forward.7} parent=35 // pred_check_branch
        %1925 = sbr.rel (%p1923) target = $region40
      $region39: #{vae_up_forward.7} parent=35 // pred_region
        _
      $region40: #{vae_up_forward.7} parent=35 // pred_fallthru
        _
      // Predicated region
      $region41: #{vae_up_forward.7} parent=35 // pred_check
        %p1926 = pneg %p160
      $region42: #{vae_up_forward.7} parent=35 // pred_check_branch
        %1928 = sbr.rel (%p1926) target = $region44
      $region43: #{vae_up_forward.7} parent=35 // pred_region
        _
      $region44: #{vae_up_forward.7} parent=35 // pred_fallthru
        _
    $region36: #{vae_up_forward.7} parent=5 // pred_fallthru
      _
    %p1929 = scmp.le.s32.totalorder 2, %s12
    // Predicated region
    $region45: #{vae_up_forward.7} parent=5 // pred_check
      %p1930 = pneg %p1929
    $region46: #{vae_up_forward.7} parent=5 // pred_check_branch
      %1932 = sbr.rel (%p1930) target = $region48
    $region47: #{vae_up_forward.7} parent=5 // pred_region
      %s1933 = ssub.s32 %s12, 2
      // Predicated region
      $region49: #{vae_up_forward.7} parent=47 // pred_check
        %p1934 = pneg %p140
      $region50: #{vae_up_forward.7} parent=47 // pred_check_branch
        %1936 = sbr.rel (%p1934) target = $region52
      $region51: #{vae_up_forward.7} parent=47 // pred_region
        %p1937 = scmp.lt.s32.totalorder %s18, 1
        %s1938 = scalar_select %p1937, %s18, 1
        %s1939 = smul.addr %s1938, 32
        %s1940 = smul.addr %s1939, 4
        %s1941 = scalar_lea.vmem %s4, %s1940
      $region52: #{vae_up_forward.7} parent=47 // pred_fallthru
        _
      // Predicated region
      $region53: #{vae_up_forward.7} parent=47 // pred_check
        %p1942 = pneg %p166
      $region54: #{vae_up_forward.7} parent=47 // pred_check_branch
        %1944 = sbr.rel (%p1942) target = $region56
      $region55: #{vae_up_forward.7} parent=47 // pred_region
        %p1945 = scmp.lt.s32.totalorder %s18, 1
        %s1946 = scalar_select %p1945, %s18, 1
        %s1947 = smul.addr %s1946, 2
        %s1948 = scalar_lea.vmem %s5, %s1947
      $region56: #{vae_up_forward.7} parent=47 // pred_fallthru
        _
    $region48: #{vae_up_forward.7} parent=5 // pred_fallthru
      _
  $region6: #{vae_up_forward.7} parent=0 // loop_footer
    %s16 = sadd.s32 1, %s12
  $region7: #{vae_up_forward.7} parent=0 // loop_footer_branch
    %11 = sbr.rel target = $region3
  $region8: #{vae_up_forward.7} parent=0 // loop_exit
    _

</llo_original>
